<compile_context>
chip_gen: v7x
topology: tpu7x:2x2x1
jax: 0.10.0
libtpu: 0.0.40
codegen_flags: <defaults>
</compile_context>

<pallas_src>
import functools
import math

import jax
import jax.numpy as jnp
import numpy as np
from jax.experimental import pallas as pl
from jax.experimental.pallas import tpu as pltpu


def _mha_kernel(x_ref, wqkv_ref, bqkv_ref, wp_ref, bp_ref, out_ref, *, num_heads):
    # x_ref:    (BB, N, E)   batch block of inputs
    # wqkv_ref: (E, 3E)      fused [Wq^T | Wk^T | Wv^T]
    # bqkv_ref: (1, 3E)      fused [bq | bk | bv]
    # wp_ref:   (E, E)       projection weight, transposed to (in, out)
    # bp_ref:   (1, E)       projection bias
    # out_ref:  (BB, N, E)
    BB, N, E = x_ref.shape
    H = num_heads
    D = E // H

    # --- fused Q/K/V projection: ONE large MXU matmul over the whole batch block ---
    x2 = x_ref[...].reshape(BB * N, E)
    qkv = jnp.dot(x2, wqkv_ref[...], preferred_element_type=jnp.float32) + bqkv_ref[...]
    qkv = qkv.reshape(BB, N, 3 * E)                         # (BB, N, 3E) f32

    scale = 1.0 / math.sqrt(E)                              # module divides by emb_size ** 0.5
    heads = []
    for h in range(H):                                      # static unroll; H is small
        q = qkv[:, :, h * D:(h + 1) * D]                    # (BB, N, D)
        k = qkv[:, :, E + h * D:E + (h + 1) * D]            # (BB, N, D)
        v = qkv[:, :, 2 * E + h * D:2 * E + (h + 1) * D]    # (BB, N, D)

        energy = jnp.einsum('bqd,bkd->bqk', q, k,
                            preferred_element_type=jnp.float32) * scale
        # numerically stable softmax over keys
        m = jnp.max(energy, axis=-1, keepdims=True)
        p = jnp.exp(energy - m)
        att = p / jnp.sum(p, axis=-1, keepdims=True)
        # att_drop: Dropout is identity in inference mode.
        heads.append(jnp.einsum('bqk,bkd->bqd', att, v,
                                preferred_element_type=jnp.float32))

    merged = jnp.concatenate(heads, axis=-1)                # 'b h n d -> b n (h d)'
    merged2 = merged.reshape(BB * N, E).astype(wp_ref.dtype)

    # --- output projection: one matmul over the whole batch block ---
    out = jnp.dot(merged2, wp_ref[...], preferred_element_type=jnp.float32) + bp_ref[...]
    out_ref[...] = out.reshape(BB, N, E).astype(out_ref.dtype)


def multi_head_attention_forward(x, params, num_heads, *, block_b=8, use_bf16=False,
                                 mask=None):
    """x: (B, N, E) float32 -> (B, N, E) float32 (inference-mode forward)."""
    # TODO(synk): optional attention mask (mask_fill path) not implemented; module is
    # exercised with mask=None.
    assert mask is None
    wq, bq, wk, bk, wv, bv, wp, bp = params
    B, N, E = x.shape
    assert E % num_heads == 0, "emb_size must be divisible by num_heads"

    cdt = jnp.bfloat16 if use_bf16 else jnp.float32
    # Parameter prep (glue): fuse the three Linear layers into one (E, 3E) weight.
    wqkv = jnp.concatenate([wq.T, wk.T, wv.T], axis=1).astype(cdt)          # (E, 3E)
    bqkv = jnp.concatenate([bq, bk, bv]).reshape(1, 3 * E).astype(jnp.float32)
    wpt = wp.T.astype(cdt)                                                   # (E, E)
    bp2 = bp.reshape(1, E).astype(jnp.float32)

    # Batch blocking: BB samples per grid step; pad B so the grid divides evenly.
    BB = max(1, min(block_b, B))
    B_pad = pl.cdiv(B, BB) * BB
    xk = x.astype(cdt)
    if B_pad != B:
        xk = jnp.pad(xk, ((0, B_pad - B), (0, 0), (0, 0)))

    kernel = functools.partial(_mha_kernel, num_heads=num_heads)

    out = pl.pallas_call(
        kernel,
        out_shape=jax.ShapeDtypeStruct((B_pad, N, E), jnp.float32),
        grid=(B_pad // BB,),
        in_specs=[
            pl.BlockSpec((BB, N, E), lambda i: (i, 0, 0)),        # x batch block
            pl.BlockSpec((E, 3 * E), lambda i: (0, 0)),           # fused QKV weight (resident)
            pl.BlockSpec((1, 3 * E), lambda i: (0, 0)),           # fused QKV bias
            pl.BlockSpec((E, E), lambda i: (0, 0)),               # projection weight
            pl.BlockSpec((1, E), lambda i: (0, 0)),               # projection bias
        ],
        out_specs=pl.BlockSpec((BB, N, E), lambda i: (i, 0, 0)),
        compiler_params=pltpu.CompilerParams(
            dimension_semantics=("parallel",),
            vmem_limit_bytes=48 * 1024 * 1024),
    )(xk, wqkv, bqkv, wpt, bp2)
    return out[:B]


def init_params(key, emb):
    """Deterministic synthetic nn.Linear-style parameters (uniform +-1/sqrt(fan_in))."""
    ks = jax.random.split(key, 8)

    def u(k, shape, fan_in):
        bound = 1.0 / math.sqrt(fan_in)
        return jax.random.uniform(k, shape, jnp.float32, -bound, bound)

    wq = u(ks[0], (emb, emb), emb); bq = u(ks[1], (emb,), emb)
    wk = u(ks[2], (emb, emb), emb); bk = u(ks[3], (emb,), emb)
    wv = u(ks[4], (emb, emb), emb); bv = u(ks[5], (emb,), emb)
    wp = u(ks[6], (emb, emb), emb); bp = u(ks[7], (emb,), emb)
    return (wq, bq, wk, bk, wv, bv, wp, bp)


def reference(x, params, num_heads):
    """Pure-JAX (XLA) reference of the same inference-mode forward pass."""
    wq, bq, wk, bk, wv, bv, wp, bp = params
    B, N, E = x.shape
    D = E // num_heads

    def lin(a, w, b):
        return jnp.einsum('bne,fe->bnf', a, w) + b

    def split(a):
        return jnp.transpose(a.reshape(B, N, num_heads, D), (0, 2, 1, 3))

    q, k, v = split(lin(x, wq, bq)), split(lin(x, wk, bk)), split(lin(x, wv, bv))
    energy = jnp.einsum('bhqd,bhkd->bhqk', q, k)
    att = jax.nn.softmax(energy / math.sqrt(E), axis=-1)
    out = jnp.einsum('bhqk,bhkd->bhqd', att, v)
    out = jnp.transpose(out, (0, 2, 1, 3)).reshape(B, N, E)
    return jnp.einsum('bne,fe->bnf', out, wp) + bp


if __name__ == "__main__":
    key = jax.random.PRNGKey(0)
    kx, kp = jax.random.split(key)

    # Small but representative shapes: batch=4, seq=16, emb=64, heads=8 (head_dim=8).
    B, N, EMB, HEADS = 4, 16, 64, 8
    x = jax.random.normal(kx, (B, N, EMB), jnp.float32)
    params = init_params(kp, EMB)

    # block_b=2 -> grid=(2,), so batch blocks can shard across TensorCores on v7x.
    out = multi_head_attention_forward(x, params, HEADS, block_b=2)
    out = jax.block_until_ready(out)

    assert out.shape == (B, N, EMB), out.shape
    ref = reference(x, params, HEADS)
    np.testing.assert_allclose(np.asarray(out), np.asarray(ref), rtol=2e-3, atol=2e-3)
    print("KERNEL_OK")
</pallas_src>

<mosaic_0001>
module attributes {stable_mosaic.version = 11 : i64} {
  func.func @_mha_kernel(%arg0: i32, %arg1: memref<2x16x64xf32, #tpu.memory_space<vmem>>, %arg2: memref<64x192xf32, #tpu.memory_space<vmem>>, %arg3: memref<1x192xf32, #tpu.memory_space<vmem>>, %arg4: memref<64x64xf32, #tpu.memory_space<vmem>>, %arg5: memref<1x64xf32, #tpu.memory_space<vmem>>, %arg6: memref<2x16x64xf32, #tpu.memory_space<vmem>>) attributes {dimension_semantics = [#tpu.dimension_semantics<parallel>], iteration_bounds = array<i64: 2>, scalar_prefetch = 0 : i64, scratch_operands = 0 : i64, tpu.core_type = #tpu.core_type<tc>, window_params = [{transform_indices = @transform_0, window_bounds = array<i64: 2, 16, 64>}, {pipeline_mode = #tpu.pipeline_mode<synchronous>, transform_indices = @transform_1, window_bounds = array<i64: 64, 192>}, {pipeline_mode = #tpu.pipeline_mode<synchronous>, transform_indices = @transform_2, window_bounds = array<i64: 1, 192>}, {pipeline_mode = #tpu.pipeline_mode<synchronous>, transform_indices = @transform_3, window_bounds = array<i64: 64, 64>}, {pipeline_mode = #tpu.pipeline_mode<synchronous>, transform_indices = @transform_4, window_bounds = array<i64: 1, 64>}, {transform_indices = @transform_5, window_bounds = array<i64: 2, 16, 64>}]} {
    %c0 = arith.constant 0 : index
    %c0_0 = arith.constant 0 : index
    %c0_1 = arith.constant 0 : index
    %0 = vector.load %arg1[%c0, %c0_0, %c0_1] : memref<2x16x64xf32, #tpu.memory_space<vmem>>, vector<2x16x64xf32>
    %1 = vector.shape_cast %0 : vector<2x16x64xf32> to vector<32x64xf32>
    %c0_2 = arith.constant 0 : index
    %c0_3 = arith.constant 0 : index
    %2 = vector.load %arg2[%c0_2, %c0_3] : memref<64x192xf32, #tpu.memory_space<vmem>>, vector<64x192xf32>
    %cst = arith.constant dense<0.000000e+00> : vector<32x192xf32>
    %3 = tpu.matmul %1, %2, %cst {dimension_numbers = #tpu.dot_dimension_numbers<[1], [0], [0], [1], [0, 0, 1, 1], [], []>} : vector<32x64xf32>, vector<64x192xf32>, vector<32x192xf32> -> vector<32x192xf32>
    %c0_4 = arith.constant 0 : index
    %c0_5 = arith.constant 0 : index
    %4 = vector.load %arg3[%c0_4, %c0_5] : memref<1x192xf32, #tpu.memory_space<vmem>>, vector<1x192xf32>
    %5 = vector.broadcast %4 : vector<1x192xf32> to vector<32x192xf32>
    %6 = arith.addf %3, %5 : vector<32x192xf32>
    %7 = vector.shape_cast %6 : vector<32x192xf32> to vector<2x16x192xf32>
    %8 = vector.extract_strided_slice %7 {offsets = [0, 0, 0], sizes = [2, 16, 8], strides = [1, 1, 1]} : vector<2x16x192xf32> to vector<2x16x8xf32>
    %9 = vector.extract_strided_slice %7 {offsets = [0, 0, 64], sizes = [2, 16, 8], strides = [1, 1, 1]} : vector<2x16x192xf32> to vector<2x16x8xf32>
    %10 = vector.extract_strided_slice %7 {offsets = [0, 0, 128], sizes = [2, 16, 8], strides = [1, 1, 1]} : vector<2x16x192xf32> to vector<2x16x8xf32>
    "tpu.trace_start"() <{level = 10 : i32, message = "bqd,bkd->bqk"}> : () -> ()
    %cst_6 = arith.constant dense<0.000000e+00> : vector<2x16x16xf32>
    %11 = tpu.matmul %8, %9, %cst_6 {dimension_numbers = #tpu.dot_dimension_numbers<[2], [2], [1], [1], [0, 0, 0, 1, 1, 1], [0], [0]>} : vector<2x16x8xf32>, vector<2x16x8xf32>, vector<2x16x16xf32> -> vector<2x16x16xf32>
    "tpu.trace_stop"() : () -> ()
    %cst_7 = arith.constant 1.250000e-01 : f32
    %12 = vector.broadcast %cst_7 : f32 to vector<2x16x16xf32>
    %13 = arith.mulf %11, %12 : vector<2x16x16xf32>
    %cst_8 = arith.constant dense<0xFF800000> : vector<2x16xf32>
    %14 = vector.multi_reduction <maximumf>, %13, %cst_8 [2] : vector<2x16x16xf32> to vector<2x16xf32>
    %15 = vector.shape_cast %14 : vector<2x16xf32> to vector<2x16x1xf32>
    %16 = vector.broadcast %15 : vector<2x16x1xf32> to vector<2x16x16xf32>
    %17 = arith.subf %13, %16 : vector<2x16x16xf32>
    %18 = math.exp %17 : vector<2x16x16xf32>
    %cst_9 = arith.constant dense<0.000000e+00> : vector<2x16xf32>
    %19 = vector.multi_reduction <add>, %18, %cst_9 [2] : vector<2x16x16xf32> to vector<2x16xf32>
    %20 = vector.shape_cast %19 : vector<2x16xf32> to vector<2x16x1xf32>
    %21 = vector.broadcast %20 : vector<2x16x1xf32> to vector<2x16x16xf32>
    %22 = arith.divf %18, %21 : vector<2x16x16xf32>
    "tpu.trace_start"() <{level = 10 : i32, message = "bqk,bkd->bqd"}> : () -> ()
    %cst_10 = arith.constant dense<0.000000e+00> : vector<2x16x8xf32>
    %23 = tpu.matmul %22, %10, %cst_10 {dimension_numbers = #tpu.dot_dimension_numbers<[2], [1], [1], [2], [0, 0, 0, 1, 1, 2], [0], [0]>} : vector<2x16x16xf32>, vector<2x16x8xf32>, vector<2x16x8xf32> -> vector<2x16x8xf32>
    "tpu.trace_stop"() : () -> ()
    %24 = vector.extract_strided_slice %7 {offsets = [0, 0, 8], sizes = [2, 16, 8], strides = [1, 1, 1]} : vector<2x16x192xf32> to vector<2x16x8xf32>
    %25 = vector.extract_strided_slice %7 {offsets = [0, 0, 72], sizes = [2, 16, 8], strides = [1, 1, 1]} : vector<2x16x192xf32> to vector<2x16x8xf32>
    %26 = vector.extract_strided_slice %7 {offsets = [0, 0, 136], sizes = [2, 16, 8], strides = [1, 1, 1]} : vector<2x16x192xf32> to vector<2x16x8xf32>
    "tpu.trace_start"() <{level = 10 : i32, message = "bqd,bkd->bqk"}> : () -> ()
    %cst_11 = arith.constant dense<0.000000e+00> : vector<2x16x16xf32>
    %27 = tpu.matmul %24, %25, %cst_11 {dimension_numbers = #tpu.dot_dimension_numbers<[2], [2], [1], [1], [0, 0, 0, 1, 1, 1], [0], [0]>} : vector<2x16x8xf32>, vector<2x16x8xf32>, vector<2x16x16xf32> -> vector<2x16x16xf32>
    "tpu.trace_stop"() : () -> ()
    %cst_12 = arith.constant 1.250000e-01 : f32
    %28 = vector.broadcast %cst_12 : f32 to vector<2x16x16xf32>
    %29 = arith.mulf %27, %28 : vector<2x16x16xf32>
    %cst_13 = arith.constant dense<0xFF800000> : vector<2x16xf32>
    %30 = vector.multi_reduction <maximumf>, %29, %cst_13 [2] : vector<2x16x16xf32> to vector<2x16xf32>
    %31 = vector.shape_cast %30 : vector<2x16xf32> to vector<2x16x1xf32>
    %32 = vector.broadcast %31 : vector<2x16x1xf32> to vector<2x16x16xf32>
    %33 = arith.subf %29, %32 : vector<2x16x16xf32>
    %34 = math.exp %33 : vector<2x16x16xf32>
    %cst_14 = arith.constant dense<0.000000e+00> : vector<2x16xf32>
    %35 = vector.multi_reduction <add>, %34, %cst_14 [2] : vector<2x16x16xf32> to vector<2x16xf32>
    %36 = vector.shape_cast %35 : vector<2x16xf32> to vector<2x16x1xf32>
    %37 = vector.broadcast %36 : vector<2x16x1xf32> to vector<2x16x16xf32>
    %38 = arith.divf %34, %37 : vector<2x16x16xf32>
    "tpu.trace_start"() <{level = 10 : i32, message = "bqk,bkd->bqd"}> : () -> ()
    %cst_15 = arith.constant dense<0.000000e+00> : vector<2x16x8xf32>
    %39 = tpu.matmul %38, %26, %cst_15 {dimension_numbers = #tpu.dot_dimension_numbers<[2], [1], [1], [2], [0, 0, 0, 1, 1, 2], [0], [0]>} : vector<2x16x16xf32>, vector<2x16x8xf32>, vector<2x16x8xf32> -> vector<2x16x8xf32>
    "tpu.trace_stop"() : () -> ()
    %40 = vector.extract_strided_slice %7 {offsets = [0, 0, 16], sizes = [2, 16, 8], strides = [1, 1, 1]} : vector<2x16x192xf32> to vector<2x16x8xf32>
    %41 = vector.extract_strided_slice %7 {offsets = [0, 0, 80], sizes = [2, 16, 8], strides = [1, 1, 1]} : vector<2x16x192xf32> to vector<2x16x8xf32>
    %42 = vector.extract_strided_slice %7 {offsets = [0, 0, 144], sizes = [2, 16, 8], strides = [1, 1, 1]} : vector<2x16x192xf32> to vector<2x16x8xf32>
    "tpu.trace_start"() <{level = 10 : i32, message = "bqd,bkd->bqk"}> : () -> ()
    %cst_16 = arith.constant dense<0.000000e+00> : vector<2x16x16xf32>
    %43 = tpu.matmul %40, %41, %cst_16 {dimension_numbers = #tpu.dot_dimension_numbers<[2], [2], [1], [1], [0, 0, 0, 1, 1, 1], [0], [0]>} : vector<2x16x8xf32>, vector<2x16x8xf32>, vector<2x16x16xf32> -> vector<2x16x16xf32>
    "tpu.trace_stop"() : () -> ()
    %cst_17 = arith.constant 1.250000e-01 : f32
    %44 = vector.broadcast %cst_17 : f32 to vector<2x16x16xf32>
    %45 = arith.mulf %43, %44 : vector<2x16x16xf32>
    %cst_18 = arith.constant dense<0xFF800000> : vector<2x16xf32>
    %46 = vector.multi_reduction <maximumf>, %45, %cst_18 [2] : vector<2x16x16xf32> to vector<2x16xf32>
    %47 = vector.shape_cast %46 : vector<2x16xf32> to vector<2x16x1xf32>
    %48 = vector.broadcast %47 : vector<2x16x1xf32> to vector<2x16x16xf32>
    %49 = arith.subf %45, %48 : vector<2x16x16xf32>
    %50 = math.exp %49 : vector<2x16x16xf32>
    %cst_19 = arith.constant dense<0.000000e+00> : vector<2x16xf32>
    %51 = vector.multi_reduction <add>, %50, %cst_19 [2] : vector<2x16x16xf32> to vector<2x16xf32>
    %52 = vector.shape_cast %51 : vector<2x16xf32> to vector<2x16x1xf32>
    %53 = vector.broadcast %52 : vector<2x16x1xf32> to vector<2x16x16xf32>
    %54 = arith.divf %50, %53 : vector<2x16x16xf32>
    "tpu.trace_start"() <{level = 10 : i32, message = "bqk,bkd->bqd"}> : () -> ()
    %cst_20 = arith.constant dense<0.000000e+00> : vector<2x16x8xf32>
    %55 = tpu.matmul %54, %42, %cst_20 {dimension_numbers = #tpu.dot_dimension_numbers<[2], [1], [1], [2], [0, 0, 0, 1, 1, 2], [0], [0]>} : vector<2x16x16xf32>, vector<2x16x8xf32>, vector<2x16x8xf32> -> vector<2x16x8xf32>
    "tpu.trace_stop"() : () -> ()
    %56 = vector.extract_strided_slice %7 {offsets = [0, 0, 24], sizes = [2, 16, 8], strides = [1, 1, 1]} : vector<2x16x192xf32> to vector<2x16x8xf32>
    %57 = vector.extract_strided_slice %7 {offsets = [0, 0, 88], sizes = [2, 16, 8], strides = [1, 1, 1]} : vector<2x16x192xf32> to vector<2x16x8xf32>
    %58 = vector.extract_strided_slice %7 {offsets = [0, 0, 152], sizes = [2, 16, 8], strides = [1, 1, 1]} : vector<2x16x192xf32> to vector<2x16x8xf32>
    "tpu.trace_start"() <{level = 10 : i32, message = "bqd,bkd->bqk"}> : () -> ()
    %cst_21 = arith.constant dense<0.000000e+00> : vector<2x16x16xf32>
    %59 = tpu.matmul %56, %57, %cst_21 {dimension_numbers = #tpu.dot_dimension_numbers<[2], [2], [1], [1], [0, 0, 0, 1, 1, 1], [0], [0]>} : vector<2x16x8xf32>, vector<2x16x8xf32>, vector<2x16x16xf32> -> vector<2x16x16xf32>
    "tpu.trace_stop"() : () -> ()
    %cst_22 = arith.constant 1.250000e-01 : f32
    %60 = vector.broadcast %cst_22 : f32 to vector<2x16x16xf32>
    %61 = arith.mulf %59, %60 : vector<2x16x16xf32>
    %cst_23 = arith.constant dense<0xFF800000> : vector<2x16xf32>
    %62 = vector.multi_reduction <maximumf>, %61, %cst_23 [2] : vector<2x16x16xf32> to vector<2x16xf32>
    %63 = vector.shape_cast %62 : vector<2x16xf32> to vector<2x16x1xf32>
    %64 = vector.broadcast %63 : vector<2x16x1xf32> to vector<2x16x16xf32>
    %65 = arith.subf %61, %64 : vector<2x16x16xf32>
    %66 = math.exp %65 : vector<2x16x16xf32>
    %cst_24 = arith.constant dense<0.000000e+00> : vector<2x16xf32>
    %67 = vector.multi_reduction <add>, %66, %cst_24 [2] : vector<2x16x16xf32> to vector<2x16xf32>
    %68 = vector.shape_cast %67 : vector<2x16xf32> to vector<2x16x1xf32>
    %69 = vector.broadcast %68 : vector<2x16x1xf32> to vector<2x16x16xf32>
    %70 = arith.divf %66, %69 : vector<2x16x16xf32>
    "tpu.trace_start"() <{level = 10 : i32, message = "bqk,bkd->bqd"}> : () -> ()
    %cst_25 = arith.constant dense<0.000000e+00> : vector<2x16x8xf32>
    %71 = tpu.matmul %70, %58, %cst_25 {dimension_numbers = #tpu.dot_dimension_numbers<[2], [1], [1], [2], [0, 0, 0, 1, 1, 2], [0], [0]>} : vector<2x16x16xf32>, vector<2x16x8xf32>, vector<2x16x8xf32> -> vector<2x16x8xf32>
    "tpu.trace_stop"() : () -> ()
    %72 = vector.extract_strided_slice %7 {offsets = [0, 0, 32], sizes = [2, 16, 8], strides = [1, 1, 1]} : vector<2x16x192xf32> to vector<2x16x8xf32>
    %73 = vector.extract_strided_slice %7 {offsets = [0, 0, 96], sizes = [2, 16, 8], strides = [1, 1, 1]} : vector<2x16x192xf32> to vector<2x16x8xf32>
    %74 = vector.extract_strided_slice %7 {offsets = [0, 0, 160], sizes = [2, 16, 8], strides = [1, 1, 1]} : vector<2x16x192xf32> to vector<2x16x8xf32>
    "tpu.trace_start"() <{level = 10 : i32, message = "bqd,bkd->bqk"}> : () -> ()
    %cst_26 = arith.constant dense<0.000000e+00> : vector<2x16x16xf32>
    %75 = tpu.matmul %72, %73, %cst_26 {dimension_numbers = #tpu.dot_dimension_numbers<[2], [2], [1], [1], [0, 0, 0, 1, 1, 1], [0], [0]>} : vector<2x16x8xf32>, vector<2x16x8xf32>, vector<2x16x16xf32> -> vector<2x16x16xf32>
    "tpu.trace_stop"() : () -> ()
    %cst_27 = arith.constant 1.250000e-01 : f32
    %76 = vector.broadcast %cst_27 : f32 to vector<2x16x16xf32>
    %77 = arith.mulf %75, %76 : vector<2x16x16xf32>
    %cst_28 = arith.constant dense<0xFF800000> : vector<2x16xf32>
    %78 = vector.multi_reduction <maximumf>, %77, %cst_28 [2] : vector<2x16x16xf32> to vector<2x16xf32>
    %79 = vector.shape_cast %78 : vector<2x16xf32> to vector<2x16x1xf32>
    %80 = vector.broadcast %79 : vector<2x16x1xf32> to vector<2x16x16xf32>
    %81 = arith.subf %77, %80 : vector<2x16x16xf32>
    %82 = math.exp %81 : vector<2x16x16xf32>
    %cst_29 = arith.constant dense<0.000000e+00> : vector<2x16xf32>
    %83 = vector.multi_reduction <add>, %82, %cst_29 [2] : vector<2x16x16xf32> to vector<2x16xf32>
    %84 = vector.shape_cast %83 : vector<2x16xf32> to vector<2x16x1xf32>
    %85 = vector.broadcast %84 : vector<2x16x1xf32> to vector<2x16x16xf32>
    %86 = arith.divf %82, %85 : vector<2x16x16xf32>
    "tpu.trace_start"() <{level = 10 : i32, message = "bqk,bkd->bqd"}> : () -> ()
    %cst_30 = arith.constant dense<0.000000e+00> : vector<2x16x8xf32>
    %87 = tpu.matmul %86, %74, %cst_30 {dimension_numbers = #tpu.dot_dimension_numbers<[2], [1], [1], [2], [0, 0, 0, 1, 1, 2], [0], [0]>} : vector<2x16x16xf32>, vector<2x16x8xf32>, vector<2x16x8xf32> -> vector<2x16x8xf32>
    "tpu.trace_stop"() : () -> ()
    %88 = vector.extract_strided_slice %7 {offsets = [0, 0, 40], sizes = [2, 16, 8], strides = [1, 1, 1]} : vector<2x16x192xf32> to vector<2x16x8xf32>
    %89 = vector.extract_strided_slice %7 {offsets = [0, 0, 104], sizes = [2, 16, 8], strides = [1, 1, 1]} : vector<2x16x192xf32> to vector<2x16x8xf32>
    %90 = vector.extract_strided_slice %7 {offsets = [0, 0, 168], sizes = [2, 16, 8], strides = [1, 1, 1]} : vector<2x16x192xf32> to vector<2x16x8xf32>
    "tpu.trace_start"() <{level = 10 : i32, message = "bqd,bkd->bqk"}> : () -> ()
    %cst_31 = arith.constant dense<0.000000e+00> : vector<2x16x16xf32>
    %91 = tpu.matmul %88, %89, %cst_31 {dimension_numbers = #tpu.dot_dimension_numbers<[2], [2], [1], [1], [0, 0, 0, 1, 1, 1], [0], [0]>} : vector<2x16x8xf32>, vector<2x16x8xf32>, vector<2x16x16xf32> -> vector<2x16x16xf32>
    "tpu.trace_stop"() : () -> ()
    %cst_32 = arith.constant 1.250000e-01 : f32
    %92 = vector.broadcast %cst_32 : f32 to vector<2x16x16xf32>
    %93 = arith.mulf %91, %92 : vector<2x16x16xf32>
    %cst_33 = arith.constant dense<0xFF800000> : vector<2x16xf32>
    %94 = vector.multi_reduction <maximumf>, %93, %cst_33 [2] : vector<2x16x16xf32> to vector<2x16xf32>
    %95 = vector.shape_cast %94 : vector<2x16xf32> to vector<2x16x1xf32>
    %96 = vector.broadcast %95 : vector<2x16x1xf32> to vector<2x16x16xf32>
    %97 = arith.subf %93, %96 : vector<2x16x16xf32>
    %98 = math.exp %97 : vector<2x16x16xf32>
    %cst_34 = arith.constant dense<0.000000e+00> : vector<2x16xf32>
    %99 = vector.multi_reduction <add>, %98, %cst_34 [2] : vector<2x16x16xf32> to vector<2x16xf32>
    %100 = vector.shape_cast %99 : vector<2x16xf32> to vector<2x16x1xf32>
    %101 = vector.broadcast %100 : vector<2x16x1xf32> to vector<2x16x16xf32>
    %102 = arith.divf %98, %101 : vector<2x16x16xf32>
    "tpu.trace_start"() <{level = 10 : i32, message = "bqk,bkd->bqd"}> : () -> ()
    %cst_35 = arith.constant dense<0.000000e+00> : vector<2x16x8xf32>
    %103 = tpu.matmul %102, %90, %cst_35 {dimension_numbers = #tpu.dot_dimension_numbers<[2], [1], [1], [2], [0, 0, 0, 1, 1, 2], [0], [0]>} : vector<2x16x16xf32>, vector<2x16x8xf32>, vector<2x16x8xf32> -> vector<2x16x8xf32>
    "tpu.trace_stop"() : () -> ()
    %104 = vector.extract_strided_slice %7 {offsets = [0, 0, 48], sizes = [2, 16, 8], strides = [1, 1, 1]} : vector<2x16x192xf32> to vector<2x16x8xf32>
    %105 = vector.extract_strided_slice %7 {offsets = [0, 0, 112], sizes = [2, 16, 8], strides = [1, 1, 1]} : vector<2x16x192xf32> to vector<2x16x8xf32>
    %106 = vector.extract_strided_slice %7 {offsets = [0, 0, 176], sizes = [2, 16, 8], strides = [1, 1, 1]} : vector<2x16x192xf32> to vector<2x16x8xf32>
    "tpu.trace_start"() <{level = 10 : i32, message = "bqd,bkd->bqk"}> : () -> ()
    %cst_36 = arith.constant dense<0.000000e+00> : vector<2x16x16xf32>
    %107 = tpu.matmul %104, %105, %cst_36 {dimension_numbers = #tpu.dot_dimension_numbers<[2], [2], [1], [1], [0, 0, 0, 1, 1, 1], [0], [0]>} : vector<2x16x8xf32>, vector<2x16x8xf32>, vector<2x16x16xf32> -> vector<2x16x16xf32>
    "tpu.trace_stop"() : () -> ()
    %cst_37 = arith.constant 1.250000e-01 : f32
    %108 = vector.broadcast %cst_37 : f32 to vector<2x16x16xf32>
    %109 = arith.mulf %107, %108 : vector<2x16x16xf32>
    %cst_38 = arith.constant dense<0xFF800000> : vector<2x16xf32>
    %110 = vector.multi_reduction <maximumf>, %109, %cst_38 [2] : vector<2x16x16xf32> to vector<2x16xf32>
    %111 = vector.shape_cast %110 : vector<2x16xf32> to vector<2x16x1xf32>
    %112 = vector.broadcast %111 : vector<2x16x1xf32> to vector<2x16x16xf32>
    %113 = arith.subf %109, %112 : vector<2x16x16xf32>
    %114 = math.exp %113 : vector<2x16x16xf32>
    %cst_39 = arith.constant dense<0.000000e+00> : vector<2x16xf32>
    %115 = vector.multi_reduction <add>, %114, %cst_39 [2] : vector<2x16x16xf32> to vector<2x16xf32>
    %116 = vector.shape_cast %115 : vector<2x16xf32> to vector<2x16x1xf32>
    %117 = vector.broadcast %116 : vector<2x16x1xf32> to vector<2x16x16xf32>
    %118 = arith.divf %114, %117 : vector<2x16x16xf32>
    "tpu.trace_start"() <{level = 10 : i32, message = "bqk,bkd->bqd"}> : () -> ()
    %cst_40 = arith.constant dense<0.000000e+00> : vector<2x16x8xf32>
    %119 = tpu.matmul %118, %106, %cst_40 {dimension_numbers = #tpu.dot_dimension_numbers<[2], [1], [1], [2], [0, 0, 0, 1, 1, 2], [0], [0]>} : vector<2x16x16xf32>, vector<2x16x8xf32>, vector<2x16x8xf32> -> vector<2x16x8xf32>
    "tpu.trace_stop"() : () -> ()
    %120 = vector.extract_strided_slice %7 {offsets = [0, 0, 56], sizes = [2, 16, 8], strides = [1, 1, 1]} : vector<2x16x192xf32> to vector<2x16x8xf32>
    %121 = vector.extract_strided_slice %7 {offsets = [0, 0, 120], sizes = [2, 16, 8], strides = [1, 1, 1]} : vector<2x16x192xf32> to vector<2x16x8xf32>
    %122 = vector.extract_strided_slice %7 {offsets = [0, 0, 184], sizes = [2, 16, 8], strides = [1, 1, 1]} : vector<2x16x192xf32> to vector<2x16x8xf32>
    "tpu.trace_start"() <{level = 10 : i32, message = "bqd,bkd->bqk"}> : () -> ()
    %cst_41 = arith.constant dense<0.000000e+00> : vector<2x16x16xf32>
    %123 = tpu.matmul %120, %121, %cst_41 {dimension_numbers = #tpu.dot_dimension_numbers<[2], [2], [1], [1], [0, 0, 0, 1, 1, 1], [0], [0]>} : vector<2x16x8xf32>, vector<2x16x8xf32>, vector<2x16x16xf32> -> vector<2x16x16xf32>
    "tpu.trace_stop"() : () -> ()
    %cst_42 = arith.constant 1.250000e-01 : f32
    %124 = vector.broadcast %cst_42 : f32 to vector<2x16x16xf32>
    %125 = arith.mulf %123, %124 : vector<2x16x16xf32>
    %cst_43 = arith.constant dense<0xFF800000> : vector<2x16xf32>
    %126 = vector.multi_reduction <maximumf>, %125, %cst_43 [2] : vector<2x16x16xf32> to vector<2x16xf32>
    %127 = vector.shape_cast %126 : vector<2x16xf32> to vector<2x16x1xf32>
    %128 = vector.broadcast %127 : vector<2x16x1xf32> to vector<2x16x16xf32>
    %129 = arith.subf %125, %128 : vector<2x16x16xf32>
    %130 = math.exp %129 : vector<2x16x16xf32>
    %cst_44 = arith.constant dense<0.000000e+00> : vector<2x16xf32>
    %131 = vector.multi_reduction <add>, %130, %cst_44 [2] : vector<2x16x16xf32> to vector<2x16xf32>
    %132 = vector.shape_cast %131 : vector<2x16xf32> to vector<2x16x1xf32>
    %133 = vector.broadcast %132 : vector<2x16x1xf32> to vector<2x16x16xf32>
    %134 = arith.divf %130, %133 : vector<2x16x16xf32>
    "tpu.trace_start"() <{level = 10 : i32, message = "bqk,bkd->bqd"}> : () -> ()
    %cst_45 = arith.constant dense<0.000000e+00> : vector<2x16x8xf32>
    %135 = tpu.matmul %134, %122, %cst_45 {dimension_numbers = #tpu.dot_dimension_numbers<[2], [1], [1], [2], [0, 0, 0, 1, 1, 2], [0], [0]>} : vector<2x16x16xf32>, vector<2x16x8xf32>, vector<2x16x8xf32> -> vector<2x16x8xf32>
    "tpu.trace_stop"() : () -> ()
    %136 = tpu.concatenate %23, %39, %55, %71, %87, %103, %119, %135 in 2 : vector<2x16x8xf32>, vector<2x16x8xf32>, vector<2x16x8xf32>, vector<2x16x8xf32>, vector<2x16x8xf32>, vector<2x16x8xf32>, vector<2x16x8xf32>, vector<2x16x8xf32> -> vector<2x16x64xf32>
    %137 = vector.shape_cast %136 : vector<2x16x64xf32> to vector<32x64xf32>
    %c0_46 = arith.constant 0 : index
    %c0_47 = arith.constant 0 : index
    %138 = vector.load %arg4[%c0_46, %c0_47] : memref<64x64xf32, #tpu.memory_space<vmem>>, vector<64x64xf32>
    %cst_48 = arith.constant dense<0.000000e+00> : vector<32x64xf32>
    %139 = tpu.matmul %137, %138, %cst_48 {dimension_numbers = #tpu.dot_dimension_numbers<[1], [0], [0], [1], [0, 0, 1, 1], [], []>} : vector<32x64xf32>, vector<64x64xf32>, vector<32x64xf32> -> vector<32x64xf32>
    %c0_49 = arith.constant 0 : index
    %c0_50 = arith.constant 0 : index
    %140 = vector.load %arg5[%c0_49, %c0_50] : memref<1x64xf32, #tpu.memory_space<vmem>>, vector<1x64xf32>
    %141 = vector.broadcast %140 : vector<1x64xf32> to vector<32x64xf32>
    %142 = arith.addf %139, %141 : vector<32x64xf32>
    %143 = vector.shape_cast %142 : vector<32x64xf32> to vector<2x16x64xf32>
    %c0_51 = arith.constant 0 : index
    %c0_52 = arith.constant 0 : index
    %c0_53 = arith.constant 0 : index
    %144 = vector.load %arg6[%c0_51, %c0_52, %c0_53] : memref<2x16x64xf32, #tpu.memory_space<vmem>>, vector<2x16x64xf32>
    tpu.vector_store %arg6[%c0_51, %c0_52, %c0_53], %143 {strides = array<i32>} : memref<2x16x64xf32, #tpu.memory_space<vmem>>, vector<2x16x64xf32>,
    return
  }
  func.func @transform_0(%arg0: i32) -> (i32, i32, i32) {
    %c0_i32 = arith.constant 0 : i32
    %c0_i32_0 = arith.constant 0 : i32
    %c0_i32_1 = arith.constant 0 : i32
    return %arg0, %c0_i32, %c0_i32_0 : i32, i32, i32
  }
  func.func @transform_1(%arg0: i32) -> (i32, i32) {
    %c0_i32 = arith.constant 0 : i32
    %c0_i32_0 = arith.constant 0 : i32
    %c0_i32_1 = arith.constant 0 : i32
    return %c0_i32, %c0_i32_0 : i32, i32
  }
  func.func @transform_2(%arg0: i32) -> (i32, i32) {
    %c0_i32 = arith.constant 0 : i32
    %c0_i32_0 = arith.constant 0 : i32
    %c0_i32_1 = arith.constant 0 : i32
    return %c0_i32, %c0_i32_0 : i32, i32
  }
  func.func @transform_3(%arg0: i32) -> (i32, i32) {
    %c0_i32 = arith.constant 0 : i32
    %c0_i32_0 = arith.constant 0 : i32
    %c0_i32_1 = arith.constant 0 : i32
    return %c0_i32, %c0_i32_0 : i32, i32
  }
  func.func @transform_4(%arg0: i32) -> (i32, i32) {
    %c0_i32 = arith.constant 0 : i32
    %c0_i32_0 = arith.constant 0 : i32
    %c0_i32_1 = arith.constant 0 : i32
    return %c0_i32, %c0_i32_0 : i32, i32
  }
  func.func @transform_5(%arg0: i32) -> (i32, i32, i32) {
    %c0_i32 = arith.constant 0 : i32
    %c0_i32_0 = arith.constant 0 : i32
    %c0_i32_1 = arith.constant 0 : i32
    return %arg0, %c0_i32, %c0_i32_0 : i32, i32, i32
  }
}

</mosaic_0001>

<llo_original>
// kernel: tpu_custom_call.1
$region0: #{tpu_custom_call.1}
  #allocation0 [shape = 'u32[]', space=smem, size = 0x4, offset = 0x4, fixed_abs, tag = 'smem constant byte address 0x4 - core index']
  #allocation1 [shape = 'u32[144,128]{1,0:T(1,128)}', space=vmem, size = 0x12000, scoped, tag = 'internal scratch']
  %s0 = inlined_call_operand.hbm [shape: f32[4,16,64], index: 0, kind: input, shape index: {}]
  %s1 = inlined_call_operand.hbm [shape: f32[64,192], index: 1, kind: input, shape index: {}]
  %s2 = inlined_call_operand.vmem [shape: f32[1,192], index: 2, kind: input, shape index: {}]
  %s3 = inlined_call_operand.hbm [shape: f32[64,64], index: 3, kind: input, shape index: {}]
  %s4 = inlined_call_operand.vmem [shape: f32[1,64], index: 4, kind: input, shape index: {}]
  %s5 = inlined_call_operand.hbm [shape: f32[4,16,64], index: 5, kind: output, shape index: {}]
  %s6 = sld [smem:[#allocation0]]
  $region65: #{tpu_custom_call.1} parent=0
    _
  %s8 = ssub.s32 1, %s6
  %s9 = scalar_select 0, %s8, %s6
  $region1: #{tpu_custom_call.1} parent=0
    #allocation2 [shape = 'u8[32768]{0}', space=vmem, size = 0x8000, scoped, tag = 'input window, operand 0']
    #allocation3 [shape = 's32[2]{0}', space=sflag, size = 0x8, scoped, tag = 'scoped memory for tpu_custom_call.1']
    #allocation4 [shape = 's32[2]{0}', space=sflag, size = 0x8, scoped, tag = 'scoped memory for tpu_custom_call.1']
    #allocation5 [shape = 'u8[65536]{0}', space=vmem, size = 0x10000, scoped, tag = 'input window, operand 1, single buffered']
    #allocation6 [shape = 's32[1]{0}', space=sflag, size = 0x4, scoped, tag = 'scoped memory for tpu_custom_call.1']
    #allocation7 [shape = 'u8[32768]{0}', space=vmem, size = 0x8000, scoped, tag = 'input window, operand 3, single buffered']
    #allocation8 [shape = 'u8[32768]{0}', space=vmem, size = 0x8000, scoped, tag = 'output window, operand 0']
    %10 = vsyncpa [#allocation3], 0
    %s11 = scalar_lea.sflag [#allocation3], 1
    %12 = vsyncpa %s11, 0
    %13 = vsyncpa [#allocation6], 0
    %14 = vsyncpa [#allocation4], 0
    %s15 = scalar_lea.sflag [#allocation4], 1
    %16 = vsyncpa %s15, 0
    loop: start=0, step=1, limit=4
    $region2: #{tpu_custom_call.1} parent=1 // loop_pre_header
      _
    $region3: #{tpu_custom_call.1} parent=1 // loop_header
      %s18 = sphi 0, %s22
      %p19 = scmp.ge.s32.totalorder %s18, 4
      %s28 = sphi 0, %s30
      %s31 = sphi 0, %s28
      %s32 = sphi 0, %s31
      %s48 = sphi 0, %s32
      %s52 = sphi 0, %s52
      %s54 = sphi 0, %s52
      %s55 = sphi 0, %s54
      %s69 = sphi 0, %s55
      %s73 = sphi 0, %s73
      %s75 = sphi 0, %s73
      %s76 = sphi 0, %s75
      %s90 = sphi 0, %s76
      %s94 = sphi 0, %s94
      %s96 = sphi 0, %s94
      %s97 = sphi 0, %s96
      %s111 = sphi 0, %s97
      %s115 = sphi 0, %s115
      %s117 = sphi 0, %s115
      %s118 = sphi 0, %s117
      %s132 = sphi 0, %s118
      %s138 = sphi 0, %s140
      %s141 = sphi 0, %s138
      %s142 = sphi 0, %s141
      %s158 = sphi 0, %s142
    $region4: #{tpu_custom_call.1} parent=1 // loop_header_branch
      %21 = sbr.rel (%p19) target = $region8
    $region5: #{tpu_custom_call.1} parent=1 // loop_body
      %s23 = ssub.s32 %s18, 1
      %s24 = ssub.s32 %s18, 2
      %s25 = sadd.s32 %s18, 1
      %s26 = ssub.s32 %s18, %s25
      %p27 = scmp.eq.s32.totalorder %s26, 0
      %s29 = sadd.s32 %s28, 1
      %s30 = scalar_select %p27, %s28, %s29
      %p33 = pneg %p27
      %p34 = scmp.eq.s32.totalorder %s18, 1
      %p35 = por %p33, %p34
      %p36 = scmp.ne.s32.totalorder %s28, %s31
      %p37 = scmp.eq.s32.totalorder %s18, 0
      %p38 = por %p36, %p37
      %p39 = scmp.ne.s32.totalorder %s28, %s31
      %p40 = scmp.eq.s32.totalorder %s23, 1
      %p41 = por %p39, %p40
      %p42 = scmp.ne.s32.totalorder %s31, %s32
      %p43 = scmp.eq.s32.totalorder %s23, 0
      %p44 = por %p42, %p43
      %p45 = scmp.ne.s32.totalorder %s31, %s32
      %p46 = scmp.eq.s32.totalorder %s24, 1
      %p47 = por %p45, %p46
      %p49 = scmp.ne.s32.totalorder %s32, %s48
      %p50 = scmp.eq.s32.totalorder %s24, 0
      %p51 = por %p49, %p50
      %s53 = sadd.s32 %s52, 1
      %p56 = scmp.eq.s32.totalorder %s18, 1
      %p57 = scmp.ne.s32.totalorder %s52, %s54
      %p58 = scmp.eq.s32.totalorder %s18, 0
      %p59 = por %p57, %p58
      %p60 = scmp.ne.s32.totalorder %s52, %s54
      %p61 = scmp.eq.s32.totalorder %s23, 1
      %p62 = por %p60, %p61
      %p63 = scmp.ne.s32.totalorder %s54, %s55
      %p64 = scmp.eq.s32.totalorder %s23, 0
      %p65 = por %p63, %p64
      %p66 = scmp.ne.s32.totalorder %s54, %s55
      %p67 = scmp.eq.s32.totalorder %s24, 1
      %p68 = por %p66, %p67
      %p70 = scmp.ne.s32.totalorder %s55, %s69
      %p71 = scmp.eq.s32.totalorder %s24, 0
      %p72 = por %p70, %p71
      %s74 = sadd.s32 %s73, 1
      %p77 = scmp.eq.s32.totalorder %s18, 1
      %p78 = scmp.ne.s32.totalorder %s73, %s75
      %p79 = scmp.eq.s32.totalorder %s18, 0
      %p80 = por %p78, %p79
      %p81 = scmp.ne.s32.totalorder %s73, %s75
      %p82 = scmp.eq.s32.totalorder %s23, 1
      %p83 = por %p81, %p82
      %p84 = scmp.ne.s32.totalorder %s75, %s76
      %p85 = scmp.eq.s32.totalorder %s23, 0
      %p86 = por %p84, %p85
      %p87 = scmp.ne.s32.totalorder %s75, %s76
      %p88 = scmp.eq.s32.totalorder %s24, 1
      %p89 = por %p87, %p88
      %p91 = scmp.ne.s32.totalorder %s76, %s90
      %p92 = scmp.eq.s32.totalorder %s24, 0
      %p93 = por %p91, %p92
      %s95 = sadd.s32 %s94, 1
      %p98 = scmp.eq.s32.totalorder %s18, 1
      %p99 = scmp.ne.s32.totalorder %s94, %s96
      %p100 = scmp.eq.s32.totalorder %s18, 0
      %p101 = por %p99, %p100
      %p102 = scmp.ne.s32.totalorder %s94, %s96
      %p103 = scmp.eq.s32.totalorder %s23, 1
      %p104 = por %p102, %p103
      %p105 = scmp.ne.s32.totalorder %s96, %s97
      %p106 = scmp.eq.s32.totalorder %s23, 0
      %p107 = por %p105, %p106
      %p108 = scmp.ne.s32.totalorder %s96, %s97
      %p109 = scmp.eq.s32.totalorder %s24, 1
      %p110 = por %p108, %p109
      %p112 = scmp.ne.s32.totalorder %s97, %s111
      %p113 = scmp.eq.s32.totalorder %s24, 0
      %p114 = por %p112, %p113
      %s116 = sadd.s32 %s115, 1
      %p119 = scmp.eq.s32.totalorder %s18, 1
      %p120 = scmp.ne.s32.totalorder %s115, %s117
      %p121 = scmp.eq.s32.totalorder %s18, 0
      %p122 = por %p120, %p121
      %p123 = scmp.ne.s32.totalorder %s115, %s117
      %p124 = scmp.eq.s32.totalorder %s23, 1
      %p125 = por %p123, %p124
      %p126 = scmp.ne.s32.totalorder %s117, %s118
      %p127 = scmp.eq.s32.totalorder %s23, 0
      %p128 = por %p126, %p127
      %p129 = scmp.ne.s32.totalorder %s117, %s118
      %p130 = scmp.eq.s32.totalorder %s24, 1
      %p131 = por %p129, %p130
      %p133 = scmp.ne.s32.totalorder %s118, %s132
      %p134 = scmp.eq.s32.totalorder %s24, 0
      %p135 = por %p133, %p134
      %s136 = ssub.s32 %s18, %s25
      %p137 = scmp.eq.s32.totalorder %s136, 0
      %s139 = sadd.s32 %s138, 1
      %s140 = scalar_select %p137, %s138, %s139
      %p143 = pneg %p137
      %p144 = scmp.eq.s32.totalorder %s18, 1
      %p145 = por %p143, %p144
      %p146 = scmp.ne.s32.totalorder %s138, %s141
      %p147 = scmp.eq.s32.totalorder %s18, 0
      %p148 = por %p146, %p147
      %p149 = scmp.ne.s32.totalorder %s138, %s141
      %p150 = scmp.eq.s32.totalorder %s23, 1
      %p151 = por %p149, %p150
      %p152 = scmp.ne.s32.totalorder %s141, %s142
      %p153 = scmp.eq.s32.totalorder %s23, 0
      %p154 = por %p152, %p153
      %p155 = scmp.ne.s32.totalorder %s141, %s142
      %p156 = scmp.eq.s32.totalorder %s24, 1
      %p157 = por %p155, %p156
      %p159 = scmp.ne.s32.totalorder %s142, %s158
      %p160 = scmp.eq.s32.totalorder %s24, 0
      %p161 = por %p159, %p160
      %p162 = scmp.le.s32.totalorder 1, %s18
      %p163 = scmp.lt.s32.totalorder %s18, 3
      %p164 = pnand %p162, %p163
      %p165 = pneg %p164
      // Predicated region
      $region9: #{tpu_custom_call.1} parent=5 // pred_check
        _
      $region10: #{tpu_custom_call.1} parent=5 // pred_check_branch
        %167 = sbr.rel (%p164) target = $region12
      $region11: #{tpu_custom_call.1} parent=5 // pred_region
        %s168 = ssub.s32 %s18, 1
        // Predicated region
        $region13: #{tpu_custom_call.1} parent=11 // pred_check
          %p169 = pneg %p65
        $region14: #{tpu_custom_call.1} parent=11 // pred_check_branch
          %171 = sbr.rel (%p169) target = $region16
        $region15: #{tpu_custom_call.1} parent=11 // pred_region
          %s173 = ssub.s32 2048, 2048
          %174 = vsyncadd [#allocation6], %s173
          %s175 = sshll.u32 [#allocation5], 4
          %s176 = int_to_ptr.vmem [resolvable:$true] %s175
          %181 = dma.hbm_to_vmem [thread:$0]  %s1, 2048, %s176, [#allocation6], 256, 256, 16
        $region16: #{tpu_custom_call.1} parent=11 // pred_fallthru
          _
        // Predicated region
        $region17: #{tpu_custom_call.1} parent=11 // pred_check
          %p182 = pneg %p86
        $region18: #{tpu_custom_call.1} parent=11 // pred_check_branch
          %184 = sbr.rel (%p182) target = $region20
        $region19: #{tpu_custom_call.1} parent=11 // pred_region
          _
        $region20: #{tpu_custom_call.1} parent=11 // pred_fallthru
          _
        // Predicated region
        $region21: #{tpu_custom_call.1} parent=11 // pred_check
          %p185 = pneg %p107
        $region22: #{tpu_custom_call.1} parent=11 // pred_check_branch
          %187 = sbr.rel (%p185) target = $region24
        $region23: #{tpu_custom_call.1} parent=11 // pred_region
          %s189 = ssub.s32 1024, 1024
          %190 = vsyncadd [#allocation6], %s189
          %s191 = sshll.u32 [#allocation7], 4
          %s192 = int_to_ptr.vmem [resolvable:$true] %s191
          %197 = dma.hbm_to_vmem [thread:$0]  %s3, 1024, %s192, [#allocation6], 128, 128, 8
        $region24: #{tpu_custom_call.1} parent=11 // pred_fallthru
          _
        // Predicated region
        $region25: #{tpu_custom_call.1} parent=11 // pred_check
          %p198 = pneg %p128
        $region26: #{tpu_custom_call.1} parent=11 // pred_check_branch
          %200 = sbr.rel (%p198) target = $region28
        $region27: #{tpu_custom_call.1} parent=11 // pred_region
          _
        $region28: #{tpu_custom_call.1} parent=11 // pred_fallthru
          _
      $region12: #{tpu_custom_call.1} parent=5 // pred_fallthru
        _
      %p201 = scmp.lt.s32.totalorder %s18, 2
      // Predicated region
      $region29: #{tpu_custom_call.1} parent=5 // pred_check
        %p202 = pneg %p201
      $region30: #{tpu_custom_call.1} parent=5 // pred_check_branch
        %204 = sbr.rel (%p202) target = $region32
      $region31: #{tpu_custom_call.1} parent=5 // pred_region
        // Predicated region
        $region33: #{tpu_custom_call.1} parent=31 // pred_check
          %p205 = pneg %p38
        $region34: #{tpu_custom_call.1} parent=31 // pred_check_branch
          %207 = sbr.rel (%p205) target = $region36
        $region35: #{tpu_custom_call.1} parent=31 // pred_region
          %s208 = sand.u32 %s28, 1
          %s209 = scalar_lea.sflag [#allocation3], %s208
          %s210 = sand.u32 %s28, 1
          %s211 = smul.addr %s210, 32
          %s212 = scalar_lea.vmem [#allocation2], %s211
          %s213 = smul.u32 2, %s18
          %s215 = ssub.s32 512, 512
          %216 = vsyncadd %s209, %s215
          %s217 = smul.addr %s213, 2
          %s218 = smul.addr %s217, 128
          %s219 = scalar_lea.hbm %s0, %s218
          %s220 = sshll.u32 %s212, 4
          %s221 = int_to_ptr.vmem [resolvable:$true] %s220
          %226 = dma.hbm_to_vmem [thread:$0]  %s219, 512, %s221, %s209, 128, 128, 8
        $region36: #{tpu_custom_call.1} parent=31 // pred_fallthru
          _
      $region32: #{tpu_custom_call.1} parent=5 // pred_fallthru
        _
      %p227 = scmp.le.s32.totalorder 1, %s18
      %p228 = scmp.lt.s32.totalorder %s18, 3
      %p229 = pnand %p227, %p228
      %p230 = pneg %p229
      // Predicated region
      $region37: #{tpu_custom_call.1} parent=5 // pred_check
        _
      $region38: #{tpu_custom_call.1} parent=5 // pred_check_branch
        %232 = sbr.rel (%p229) target = $region40
      $region39: #{tpu_custom_call.1} parent=5 // pred_region
        %s233 = ssub.s32 %s18, 1
        %s234 = sand.u32 %s31, 1
        %s235 = scalar_lea.sflag [#allocation3], %s234
        %s236 = sand.u32 %s31, 1
        %s237 = smul.addr %s236, 32
        %s238 = scalar_lea.vmem [#allocation2], %s237
        // Predicated region
        $region41: #{tpu_custom_call.1} parent=39 // pred_check
          %p239 = pneg %p44
        $region42: #{tpu_custom_call.1} parent=39 // pred_check_branch
          %241 = sbr.rel (%p239) target = $region44
        $region43: #{tpu_custom_call.1} parent=39 // pred_region
          %242 = dma.done %s235, 512
        $region44: #{tpu_custom_call.1} parent=39 // pred_fallthru
          _
        // Predicated region
        $region45: #{tpu_custom_call.1} parent=39 // pred_check
          %p243 = pneg %p65
        $region46: #{tpu_custom_call.1} parent=39 // pred_check_branch
          %245 = sbr.rel (%p243) target = $region48
        $region47: #{tpu_custom_call.1} parent=39 // pred_region
          %246 = dma.done [#allocation6], 2048
        $region48: #{tpu_custom_call.1} parent=39 // pred_fallthru
          _
        // Predicated region
        $region49: #{tpu_custom_call.1} parent=39 // pred_check
          %p247 = pneg %p107
        $region50: #{tpu_custom_call.1} parent=39 // pred_check_branch
          %249 = sbr.rel (%p247) target = $region52
        $region51: #{tpu_custom_call.1} parent=39 // pred_region
          %250 = dma.done [#allocation6], 1024
        $region52: #{tpu_custom_call.1} parent=39 // pred_fallthru
          _
        %s251 = sand.u32 %s31, 1
        %s252 = scalar_lea.sflag [#allocation3], %s251
        %s253 = sand.u32 %s31, 1
        %s254 = smul.addr %s253, 32
        %s255 = scalar_lea.vmem [#allocation2], %s254
        %p256 = pneg %p44
        %p257 = pneg %p41
        %p258 = pneg %p65
        %p259 = pneg %p62
        %p260 = pneg %p86
        %p261 = pneg %p83
        %p262 = pneg %p107
        %p263 = pneg %p104
        %p264 = pneg %p128
        %p265 = pneg %p125
        %p266 = pneg %p154
        %p267 = pneg %p151
        %s268 = sand.u32 %s141, 1
        %s269 = scalar_lea.sflag [#allocation4], %s268
        %s270 = sand.u32 %s141, 1
        %s271 = smul.addr %s270, 32
        %s272 = scalar_lea.vmem [#allocation8], %s271
        %s273 = smul.u32 2, %s23
        %s274 = smul.u32 2, %s23
        %v275 = vld [vmem:[%s238] sm:$0xff]
        %v276 = vld [vmem:[%s238 + $0x8] sm:$0xff]
        %v277 = vld [vmem:[%s238 + $0x10] sm:$0xff]
        %v278 = vld [vmem:[%s238 + $0x18] sm:$0xff]
        %v279 = vld [vmem:[#allocation5] sm:$0xff]
        %v280 = vld [vmem:[#allocation5 + $0x8] sm:$0xff]
        %v281 = vld [vmem:[#allocation5 + $0x10] sm:$0xff]
        %v282 = vld [vmem:[#allocation5 + $0x18] sm:$0xff]
        %v283 = vld [vmem:[#allocation5 + $0x20] sm:$0xff]
        %v284 = vld [vmem:[#allocation5 + $0x28] sm:$0xff]
        %v285 = vld [vmem:[#allocation5 + $0x30] sm:$0xff]
        %v286 = vld [vmem:[#allocation5 + $0x38] sm:$0xff]
        %v287 = vld [vmem:[#allocation5 + $0x40] sm:$0xff]
        %v288 = vld [vmem:[#allocation5 + $0x48] sm:$0xff]
        %v289 = vld [vmem:[#allocation5 + $0x50] sm:$0xff]
        %v290 = vld [vmem:[#allocation5 + $0x58] sm:$0xff]
        %v291 = vld [vmem:[#allocation5 + $0x60] sm:$0xff]
        %v292 = vld [vmem:[#allocation5 + $0x68] sm:$0xff]
        %v293 = vld [vmem:[#allocation5 + $0x70] sm:$0xff]
        %v294 = vld [vmem:[#allocation5 + $0x78] sm:$0xff]
        %v295 = vld [vmem:[%s2] sm:$0x3]
        %v297 = vlaneseq
        %v298 = vshrl.u32 %v297, 7
        %v299 = vsub.s32 0, %v298
        %v300 = vrot.slane %v295, %v299
        %v301 = vlaneseq
        %v302 = vshrl.u32 %v301, 7
        %v303 = vsub.s32 1, %v302
        %v304 = vrot.slane %v295, %v303
        %vm307 = vcmask 523264
        %v309 = vsel %vm307, %v275, 0
        %v312 = vsel %vm307, %v276, 0
        %v315 = vsel %vm307, %v277, 0
        %v318 = vsel %vm307, %v278, 0
        %320 = vmatprep.subr.mxu0 %v280
        %321 = vmatpush1.msra.mxu0 %v279
        %322 = vmatprep.subr.mxu0 %v282
        %323 = vmatpush1.msra.mxu0 %v281
        %324 = vmatprep.subr.mxu0 %v284
        %325 = vmatpush1.msra.mxu0 %v283
        %326 = vmatprep.subr.mxu0 %v286
        %327 = vmatpush1.msra.mxu0 %v285
        %328 = vmatprep.subr.mxu0 %v288
        %329 = vmatpush1.msra.mxu0 %v287
        %330 = vmatprep.subr.mxu0 %v290
        %331 = vmatpush1.msra.mxu0 %v289
        %332 = vmatprep.subr.mxu0 %v292
        %333 = vmatpush1.msra.mxu0 %v291
        %334 = vmatprep.subr.mxu0 %v294
        %335 = vmatpush1.msra.mxu0 %v293
        %336 = vmatprep.subr.mxu0 0.0
        %337 = vmatpush1.msra.mxu0 0.0
        %338 = vmatprep.subr.mxu0 0.0
        %339 = vmatpush1.msra.mxu0 0.0
        %340 = vmatprep.subr.mxu0 0.0
        %341 = vmatpush1.msra.mxu0 0.0
        %342 = vmatprep.subr.mxu0 0.0
        %343 = vmatpush1.msra.mxu0 0.0
        %344 = vmatprep.subr.mxu0 0.0
        %345 = vmatpush1.msra.mxu0 0.0
        %346 = vmatprep.subr.mxu0 0.0
        %347 = vmatpush1.msra.mxu0 0.0
        %348 = vmatprep.subr.mxu0 0.0
        %349 = vmatpush1.msra.mxu0 0.0
        %350 = vmatprep.subr.mxu0 0.0
        %351 = vmatpush1.msra.mxu0 0.0
        %352 = vmatprep.subr.mxu0 0.0
        %353 = vmatpush1.msra.mxu0 0.0
        %354 = vmatprep.subr.mxu0 0.0
        %355 = vmatpush1.msra.mxu0 0.0
        %356 = vmatprep.subr.mxu0 0.0
        %357 = vmatpush1.msra.mxu0 0.0
        %358 = vmatprep.subr.mxu0 0.0
        %359 = vmatpush1.msra.mxu0 0.0
        %360 = vmatprep.subr.mxu0 0.0
        %361 = vmatpush1.msra.mxu0 0.0
        %362 = vmatprep.subr.mxu0 0.0
        %363 = vmatpush1.msra.mxu0 0.0
        %364 = vmatprep.subr.mxu0 0.0
        %365 = vmatpush1.msra.mxu0 0.0
        %366 = vmatprep.subr.mxu0 0.0
        %367 = vmatpush1.msra.mxu0 0.0
        %368 = vmatprep.subr.mxu0 0.0
        %369 = vmatpush1.msra.mxu0 0.0
        %370 = vmatprep.subr.mxu0 0.0
        %371 = vmatpush1.msra.mxu0 0.0
        %372 = vmatprep.subr.mxu0 0.0
        %373 = vmatpush1.msra.mxu0 0.0
        %374 = vmatprep.subr.mxu0 0.0
        %375 = vmatpush1.msra.mxu0 0.0
        %376 = vmatprep.subr.mxu0 0.0
        %377 = vmatpush1.msra.mxu0 0.0
        %378 = vmatprep.subr.mxu0 0.0
        %379 = vmatpush1.msra.mxu0 0.0
        %380 = vmatprep.subr.mxu0 0.0
        %381 = vmatpush1.msra.mxu0 0.0
        %382 = vmatprep.subr.mxu0 0.0
        %383 = vmatpush1.msra.mxu0 0.0
        %384 = vmatprep.mubr.f32.mxu0 0.0
        %385 = vmatmul.mubr.f32.gmra.mrb[0].mxu0 %v309
        %v386 = vpop.f32.mrb[0].mxu0
        %v387 = vadd.f32 %v300, %v386
        %v388 = vpop.f32.mrb[0].mxu0
        %v389 = vadd.f32 %v304, %v388
        %390 = vmatprep.mubr.f32.mxu0 0.0
        %391 = vmatmul.mubr.f32.gmra.mrb[0].mxu0 %v312
        %v392 = vpop.f32.mrb[0].mxu0
        %v393 = vadd.f32 %v300, %v392
        %v394 = vpop.f32.mrb[0].mxu0
        %v395 = vadd.f32 %v304, %v394
        %396 = vmatprep.mubr.f32.mxu0 0.0
        %397 = vmatmul.mubr.f32.gmra.mrb[0].mxu0 %v315
        %v398 = vpop.f32.mrb[0].mxu0
        %v399 = vadd.f32 %v300, %v398
        %v400 = vpop.f32.mrb[0].mxu0
        %v401 = vadd.f32 %v304, %v400
        %402 = vmatprep.mubr.f32.mxu0 0.0
        %403 = vmatmul.mubr.f32.gmra.mrb[0].mxu0 %v318
        %v404 = vpop.f32.mrb[0].mxu0
        %v405 = vadd.f32 %v300, %v404
        %v406 = vpop.f32.mrb[0].mxu0
        %v407 = vadd.f32 %v304, %v406
        %408 = vdwg.mxu0
        %411 = vrot.lane.b32.xlu0 %v387, 64
        %v412 = vpop.permute.xlu0 %411
        %413 = vrot.lane.b32.xlu0 %v393, 64
        %v414 = vpop.permute.xlu0 %413
        %vm415 = vcmask 64512
        %v416 = vsel %vm415, %v387, 0
        %v418 = vsel %vm415, %v393, 0
        %v420 = vsel %vm415, %v412, 0
        %v422 = vsel %vm415, %v414, 0
        %424 = vmatprep.subr.mxu0 0.0
        %425 = vmatpush1.xpose.msra.mxu0 %v420
        %426 = vmatprep.subr.mxu0 0.0
        %427 = vmatpush1.xpose.msra.mxu0 %v422
        %428 = vmatprep.subr.mxu0 0.0
        %429 = vmatpush1.xpose.msra.mxu0 0.0
        %430 = vmatprep.subr.mxu0 0.0
        %431 = vmatpush1.xpose.msra.mxu0 0.0
        %432 = vmatprep.subr.mxu0 0.0
        %433 = vmatpush1.xpose.msra.mxu0 0.0
        %434 = vmatprep.subr.mxu0 0.0
        %435 = vmatpush1.xpose.msra.mxu0 0.0
        %436 = vmatprep.subr.mxu0 0.0
        %437 = vmatpush1.xpose.msra.mxu0 0.0
        %438 = vmatprep.subr.mxu0 0.0
        %439 = vmatpush1.xpose.msra.mxu0 0.0
        %440 = vmatprep.subr.mxu0 0.0
        %441 = vmatpush1.xpose.msra.mxu0 0.0
        %442 = vmatprep.subr.mxu0 0.0
        %443 = vmatpush1.xpose.msra.mxu0 0.0
        %444 = vmatprep.subr.mxu0 0.0
        %445 = vmatpush1.xpose.msra.mxu0 0.0
        %446 = vmatprep.subr.mxu0 0.0
        %447 = vmatpush1.xpose.msra.mxu0 0.0
        %448 = vmatprep.subr.mxu0 0.0
        %449 = vmatpush1.xpose.msra.mxu0 0.0
        %450 = vmatprep.subr.mxu0 0.0
        %451 = vmatpush1.xpose.msra.mxu0 0.0
        %452 = vmatprep.subr.mxu0 0.0
        %453 = vmatpush1.xpose.msra.mxu0 0.0
        %454 = vmatprep.subr.mxu0 0.0
        %455 = vmatpush1.xpose.msra.mxu0 0.0
        %456 = vmatprep.subr.mxu0 0.0
        %457 = vmatpush1.xpose.msra.mxu0 0.0
        %458 = vmatprep.subr.mxu0 0.0
        %459 = vmatpush1.xpose.msra.mxu0 0.0
        %460 = vmatprep.subr.mxu0 0.0
        %461 = vmatpush1.xpose.msra.mxu0 0.0
        %462 = vmatprep.subr.mxu0 0.0
        %463 = vmatpush1.xpose.msra.mxu0 0.0
        %464 = vmatprep.subr.mxu0 0.0
        %465 = vmatpush1.xpose.msra.mxu0 0.0
        %466 = vmatprep.subr.mxu0 0.0
        %467 = vmatpush1.xpose.msra.mxu0 0.0
        %468 = vmatprep.subr.mxu0 0.0
        %469 = vmatpush1.xpose.msra.mxu0 0.0
        %470 = vmatprep.subr.mxu0 0.0
        %471 = vmatpush1.xpose.msra.mxu0 0.0
        %472 = vmatprep.subr.mxu0 0.0
        %473 = vmatpush1.xpose.msra.mxu0 0.0
        %474 = vmatprep.subr.mxu0 0.0
        %475 = vmatpush1.xpose.msra.mxu0 0.0
        %476 = vmatprep.subr.mxu0 0.0
        %477 = vmatpush1.xpose.msra.mxu0 0.0
        %478 = vmatprep.subr.mxu0 0.0
        %479 = vmatpush1.xpose.msra.mxu0 0.0
        %480 = vmatprep.subr.mxu0 0.0
        %481 = vmatpush1.xpose.msra.mxu0 0.0
        %482 = vmatprep.subr.mxu0 0.0
        %483 = vmatpush1.xpose.msra.mxu0 0.0
        %484 = vmatprep.subr.mxu0 0.0
        %485 = vmatpush1.xpose.msra.mxu0 0.0
        %486 = vmatprep.subr.mxu0 0.0
        %487 = vmatpush1.xpose.msra.mxu0 0.0
        %488 = vmatprep.mubr.f32.mxu0 0.0
        %489 = vmatmul.mubr.f32.gmra.mrb[0].mxu0 %v416
        %v490 = vpop.f32.mrb[0].mxu0
        %v491 = vadd.f32 0.0, %v490
        %v492 = vpop.f32.mrb[0].mxu0
        %493 = vmatprep.mubr.f32.mxu0 0.0
        %494 = vmatmul.mubr.f32.gmra.mrb[0].mxu0 %v418
        %v495 = vpop.f32.mrb[0].mxu0
        %v496 = vadd.f32 0.0, %v495
        %v497 = vpop.f32.mrb[0].mxu0
        %498 = vdwg.mxu0
        %501 = vrot.lane.b32.xlu0 %v399, 64
        %v502 = vpop.permute.xlu0 %501
        %503 = vrot.lane.b32.xlu0 %v405, 64
        %v504 = vpop.permute.xlu0 %503
        %v505 = vsel %vm415, %v399, 0
        %v507 = vsel %vm415, %v405, 0
        %v509 = vsel %vm415, %v502, 0
        %v511 = vsel %vm415, %v504, 0
        %513 = vmatprep.subr.mxu0 0.0
        %514 = vmatpush1.xpose.msra.mxu0 %v509
        %515 = vmatprep.subr.mxu0 0.0
        %516 = vmatpush1.xpose.msra.mxu0 %v511
        %517 = vmatprep.subr.mxu0 0.0
        %518 = vmatpush1.xpose.msra.mxu0 0.0
        %519 = vmatprep.subr.mxu0 0.0
        %520 = vmatpush1.xpose.msra.mxu0 0.0
        %521 = vmatprep.subr.mxu0 0.0
        %522 = vmatpush1.xpose.msra.mxu0 0.0
        %523 = vmatprep.subr.mxu0 0.0
        %524 = vmatpush1.xpose.msra.mxu0 0.0
        %525 = vmatprep.subr.mxu0 0.0
        %526 = vmatpush1.xpose.msra.mxu0 0.0
        %527 = vmatprep.subr.mxu0 0.0
        %528 = vmatpush1.xpose.msra.mxu0 0.0
        %529 = vmatprep.subr.mxu0 0.0
        %530 = vmatpush1.xpose.msra.mxu0 0.0
        %531 = vmatprep.subr.mxu0 0.0
        %532 = vmatpush1.xpose.msra.mxu0 0.0
        %533 = vmatprep.subr.mxu0 0.0
        %534 = vmatpush1.xpose.msra.mxu0 0.0
        %535 = vmatprep.subr.mxu0 0.0
        %536 = vmatpush1.xpose.msra.mxu0 0.0
        %537 = vmatprep.subr.mxu0 0.0
        %538 = vmatpush1.xpose.msra.mxu0 0.0
        %539 = vmatprep.subr.mxu0 0.0
        %540 = vmatpush1.xpose.msra.mxu0 0.0
        %541 = vmatprep.subr.mxu0 0.0
        %542 = vmatpush1.xpose.msra.mxu0 0.0
        %543 = vmatprep.subr.mxu0 0.0
        %544 = vmatpush1.xpose.msra.mxu0 0.0
        %545 = vmatprep.subr.mxu0 0.0
        %546 = vmatpush1.xpose.msra.mxu0 0.0
        %547 = vmatprep.subr.mxu0 0.0
        %548 = vmatpush1.xpose.msra.mxu0 0.0
        %549 = vmatprep.subr.mxu0 0.0
        %550 = vmatpush1.xpose.msra.mxu0 0.0
        %551 = vmatprep.subr.mxu0 0.0
        %552 = vmatpush1.xpose.msra.mxu0 0.0
        %553 = vmatprep.subr.mxu0 0.0
        %554 = vmatpush1.xpose.msra.mxu0 0.0
        %555 = vmatprep.subr.mxu0 0.0
        %556 = vmatpush1.xpose.msra.mxu0 0.0
        %557 = vmatprep.subr.mxu0 0.0
        %558 = vmatpush1.xpose.msra.mxu0 0.0
        %559 = vmatprep.subr.mxu0 0.0
        %560 = vmatpush1.xpose.msra.mxu0 0.0
        %561 = vmatprep.subr.mxu0 0.0
        %562 = vmatpush1.xpose.msra.mxu0 0.0
        %563 = vmatprep.subr.mxu0 0.0
        %564 = vmatpush1.xpose.msra.mxu0 0.0
        %565 = vmatprep.subr.mxu0 0.0
        %566 = vmatpush1.xpose.msra.mxu0 0.0
        %567 = vmatprep.subr.mxu0 0.0
        %568 = vmatpush1.xpose.msra.mxu0 0.0
        %569 = vmatprep.subr.mxu0 0.0
        %570 = vmatpush1.xpose.msra.mxu0 0.0
        %571 = vmatprep.subr.mxu0 0.0
        %572 = vmatpush1.xpose.msra.mxu0 0.0
        %573 = vmatprep.subr.mxu0 0.0
        %574 = vmatpush1.xpose.msra.mxu0 0.0
        %575 = vmatprep.subr.mxu0 0.0
        %576 = vmatpush1.xpose.msra.mxu0 0.0
        %577 = vmatprep.mubr.f32.mxu0 0.0
        %578 = vmatmul.mubr.f32.gmra.mrb[0].mxu0 %v505
        %v579 = vpop.f32.mrb[0].mxu0
        %v580 = vadd.f32 0.0, %v579
        %v581 = vpop.f32.mrb[0].mxu0
        %582 = vmatprep.mubr.f32.mxu0 0.0
        %583 = vmatmul.mubr.f32.gmra.mrb[0].mxu0 %v507
        %v584 = vpop.f32.mrb[0].mxu0
        %v585 = vadd.f32 0.0, %v584
        %v586 = vpop.f32.mrb[0].mxu0
        %587 = vdwg.mxu0
        %v588 = vmul.f32 %v491, 0.125
        %v589 = vmul.f32 %v496, 0.125
        %v590 = vmul.f32 %v580, 0.125
        %v591 = vmul.f32 %v585, 0.125
        %vm592 = vcmask 130048
        %v593 = vsel %vm592, %v588, -inf
        %594 = vmax.xlane.f32.xlu0 %v593
        %v595 = vpop.xlane.xlu0 %594
        %v596 = vsel %vm592, %v589, -inf
        %597 = vmax.xlane.f32.xlu0 %v596
        %v598 = vpop.xlane.xlu0 %597
        %v599 = vsel %vm592, %v590, -inf
        %600 = vmax.xlane.f32.xlu0 %v599
        %v601 = vpop.xlane.xlu0 %600
        %v602 = vsel %vm592, %v591, -inf
        %603 = vmax.xlane.f32.xlu0 %v602
        %v604 = vpop.xlane.xlu0 %603
        %v605 = vsub.f32 %v588, %v595
        %v606 = vsub.f32 %v589, %v598
        %v607 = vsub.f32 %v590, %v601
        %v608 = vsub.f32 %v591, %v604
        %v609 = vmul.f32 %v605, 1.442695
        %v610 = vpow.pop %v609
        %v611 = vmul.f32 %v606, 1.442695
        %v612 = vpow.pop %v611
        %v613 = vmul.f32 %v607, 1.442695
        %v614 = vpow.pop %v613
        %v615 = vmul.f32 %v608, 1.442695
        %v616 = vpow.pop %v615
        %v617 = vsel %vm592, %v610, 0.0
        %618 = vadd.xlane.f32.xlu0 %v617
        %v619 = vpop.xlane.xlu0 %618
        %v620 = vsel %vm592, %v612, 0.0
        %621 = vadd.xlane.f32.xlu0 %v620
        %v622 = vpop.xlane.xlu0 %621
        %v623 = vsel %vm592, %v614, 0.0
        %624 = vadd.xlane.f32.xlu0 %v623
        %v625 = vpop.xlane.xlu0 %624
        %v626 = vsel %vm592, %v616, 0.0
        %627 = vadd.xlane.f32.xlu0 %v626
        %v628 = vpop.xlane.xlu0 %627
        %v629 = vrcp.pop %v619
        %v630 = vmul.f32 %v610, %v629
        %v631 = vrcp.pop %v622
        %v632 = vmul.f32 %v612, %v631
        %v633 = vrcp.pop %v625
        %v634 = vmul.f32 %v614, %v633
        %v635 = vrcp.pop %v628
        %v636 = vmul.f32 %v616, %v635
        %v638 = vsel %vm592, %v630, 0
        %v641 = vsel %vm592, %v632, 0
        %643 = vmatprep.subr.mxu0 0.0
        %644 = vmatpush1.msra.mxu0 %v389
        %645 = vmatprep.subr.mxu0 0.0
        %646 = vmatpush1.msra.mxu0 %v395
        %647 = vmatprep.subr.mxu0 0.0
        %648 = vmatpush1.msra.mxu0 0.0
        %649 = vmatprep.subr.mxu0 0.0
        %650 = vmatpush1.msra.mxu0 0.0
        %651 = vmatprep.subr.mxu0 0.0
        %652 = vmatpush1.msra.mxu0 0.0
        %653 = vmatprep.subr.mxu0 0.0
        %654 = vmatpush1.msra.mxu0 0.0
        %655 = vmatprep.subr.mxu0 0.0
        %656 = vmatpush1.msra.mxu0 0.0
        %657 = vmatprep.subr.mxu0 0.0
        %658 = vmatpush1.msra.mxu0 0.0
        %659 = vmatprep.subr.mxu0 0.0
        %660 = vmatpush1.msra.mxu0 0.0
        %661 = vmatprep.subr.mxu0 0.0
        %662 = vmatpush1.msra.mxu0 0.0
        %663 = vmatprep.subr.mxu0 0.0
        %664 = vmatpush1.msra.mxu0 0.0
        %665 = vmatprep.subr.mxu0 0.0
        %666 = vmatpush1.msra.mxu0 0.0
        %667 = vmatprep.subr.mxu0 0.0
        %668 = vmatpush1.msra.mxu0 0.0
        %669 = vmatprep.subr.mxu0 0.0
        %670 = vmatpush1.msra.mxu0 0.0
        %671 = vmatprep.subr.mxu0 0.0
        %672 = vmatpush1.msra.mxu0 0.0
        %673 = vmatprep.subr.mxu0 0.0
        %674 = vmatpush1.msra.mxu0 0.0
        %675 = vmatprep.subr.mxu0 0.0
        %676 = vmatpush1.msra.mxu0 0.0
        %677 = vmatprep.subr.mxu0 0.0
        %678 = vmatpush1.msra.mxu0 0.0
        %679 = vmatprep.subr.mxu0 0.0
        %680 = vmatpush1.msra.mxu0 0.0
        %681 = vmatprep.subr.mxu0 0.0
        %682 = vmatpush1.msra.mxu0 0.0
        %683 = vmatprep.subr.mxu0 0.0
        %684 = vmatpush1.msra.mxu0 0.0
        %685 = vmatprep.subr.mxu0 0.0
        %686 = vmatpush1.msra.mxu0 0.0
        %687 = vmatprep.subr.mxu0 0.0
        %688 = vmatpush1.msra.mxu0 0.0
        %689 = vmatprep.subr.mxu0 0.0
        %690 = vmatpush1.msra.mxu0 0.0
        %691 = vmatprep.subr.mxu0 0.0
        %692 = vmatpush1.msra.mxu0 0.0
        %693 = vmatprep.subr.mxu0 0.0
        %694 = vmatpush1.msra.mxu0 0.0
        %695 = vmatprep.subr.mxu0 0.0
        %696 = vmatpush1.msra.mxu0 0.0
        %697 = vmatprep.subr.mxu0 0.0
        %698 = vmatpush1.msra.mxu0 0.0
        %699 = vmatprep.subr.mxu0 0.0
        %700 = vmatpush1.msra.mxu0 0.0
        %701 = vmatprep.subr.mxu0 0.0
        %702 = vmatpush1.msra.mxu0 0.0
        %703 = vmatprep.subr.mxu0 0.0
        %704 = vmatpush1.msra.mxu0 0.0
        %705 = vmatprep.subr.mxu0 0.0
        %706 = vmatpush1.msra.mxu0 0.0
        %707 = vmatprep.mubr.f32.mxu0 0.0
        %708 = vmatmul.mubr.f32.gmra.mrb[0].mxu0 %v638
        %v709 = vpop.f32.mrb[0].mxu0
        %v710 = vadd.f32 0.0, %v709
        %v711 = vpop.f32.mrb[0].mxu0
        %712 = vmatprep.mubr.f32.mxu0 0.0
        %713 = vmatmul.mubr.f32.gmra.mrb[0].mxu0 %v641
        %v714 = vpop.f32.mrb[0].mxu0
        %v715 = vadd.f32 0.0, %v714
        %v716 = vpop.f32.mrb[0].mxu0
        %717 = vdwg.mxu0
        %v719 = vsel %vm592, %v634, 0
        %v722 = vsel %vm592, %v636, 0
        %724 = vmatprep.subr.mxu0 0.0
        %725 = vmatpush1.msra.mxu0 %v401
        %726 = vmatprep.subr.mxu0 0.0
        %727 = vmatpush1.msra.mxu0 %v407
        %728 = vmatprep.subr.mxu0 0.0
        %729 = vmatpush1.msra.mxu0 0.0
        %730 = vmatprep.subr.mxu0 0.0
        %731 = vmatpush1.msra.mxu0 0.0
        %732 = vmatprep.subr.mxu0 0.0
        %733 = vmatpush1.msra.mxu0 0.0
        %734 = vmatprep.subr.mxu0 0.0
        %735 = vmatpush1.msra.mxu0 0.0
        %736 = vmatprep.subr.mxu0 0.0
        %737 = vmatpush1.msra.mxu0 0.0
        %738 = vmatprep.subr.mxu0 0.0
        %739 = vmatpush1.msra.mxu0 0.0
        %740 = vmatprep.subr.mxu0 0.0
        %741 = vmatpush1.msra.mxu0 0.0
        %742 = vmatprep.subr.mxu0 0.0
        %743 = vmatpush1.msra.mxu0 0.0
        %744 = vmatprep.subr.mxu0 0.0
        %745 = vmatpush1.msra.mxu0 0.0
        %746 = vmatprep.subr.mxu0 0.0
        %747 = vmatpush1.msra.mxu0 0.0
        %748 = vmatprep.subr.mxu0 0.0
        %749 = vmatpush1.msra.mxu0 0.0
        %750 = vmatprep.subr.mxu0 0.0
        %751 = vmatpush1.msra.mxu0 0.0
        %752 = vmatprep.subr.mxu0 0.0
        %753 = vmatpush1.msra.mxu0 0.0
        %754 = vmatprep.subr.mxu0 0.0
        %755 = vmatpush1.msra.mxu0 0.0
        %756 = vmatprep.subr.mxu0 0.0
        %757 = vmatpush1.msra.mxu0 0.0
        %758 = vmatprep.subr.mxu0 0.0
        %759 = vmatpush1.msra.mxu0 0.0
        %760 = vmatprep.subr.mxu0 0.0
        %761 = vmatpush1.msra.mxu0 0.0
        %762 = vmatprep.subr.mxu0 0.0
        %763 = vmatpush1.msra.mxu0 0.0
        %764 = vmatprep.subr.mxu0 0.0
        %765 = vmatpush1.msra.mxu0 0.0
        %766 = vmatprep.subr.mxu0 0.0
        %767 = vmatpush1.msra.mxu0 0.0
        %768 = vmatprep.subr.mxu0 0.0
        %769 = vmatpush1.msra.mxu0 0.0
        %770 = vmatprep.subr.mxu0 0.0
        %771 = vmatpush1.msra.mxu0 0.0
        %772 = vmatprep.subr.mxu0 0.0
        %773 = vmatpush1.msra.mxu0 0.0
        %774 = vmatprep.subr.mxu0 0.0
        %775 = vmatpush1.msra.mxu0 0.0
        %776 = vmatprep.subr.mxu0 0.0
        %777 = vmatpush1.msra.mxu0 0.0
        %778 = vmatprep.subr.mxu0 0.0
        %779 = vmatpush1.msra.mxu0 0.0
        %780 = vmatprep.subr.mxu0 0.0
        %781 = vmatpush1.msra.mxu0 0.0
        %782 = vmatprep.subr.mxu0 0.0
        %783 = vmatpush1.msra.mxu0 0.0
        %784 = vmatprep.subr.mxu0 0.0
        %785 = vmatpush1.msra.mxu0 0.0
        %786 = vmatprep.subr.mxu0 0.0
        %787 = vmatpush1.msra.mxu0 0.0
        %788 = vmatprep.mubr.f32.mxu0 0.0
        %789 = vmatmul.mubr.f32.gmra.mrb[0].mxu0 %v719
        %v790 = vpop.f32.mrb[0].mxu0
        %v791 = vadd.f32 0.0, %v790
        %v792 = vpop.f32.mrb[0].mxu0
        %793 = vmatprep.mubr.f32.mxu0 0.0
        %794 = vmatmul.mubr.f32.gmra.mrb[0].mxu0 %v722
        %v795 = vpop.f32.mrb[0].mxu0
        %v796 = vadd.f32 0.0, %v795
        %v797 = vpop.f32.mrb[0].mxu0
        %798 = vdwg.mxu0
        %799 = vrot.lane.b32.xlu0 %v387, 120
        %v800 = vpop.permute.xlu0 %799
        %801 = vrot.lane.b32.xlu0 %v393, 120
        %v802 = vpop.permute.xlu0 %801
        %803 = vrot.lane.b32.xlu0 %v387, 56
        %v804 = vpop.permute.xlu0 %803
        %805 = vrot.lane.b32.xlu0 %v393, 56
        %v806 = vpop.permute.xlu0 %805
        %v807 = vsel %vm415, %v800, 0
        %v809 = vsel %vm415, %v802, 0
        %v811 = vsel %vm415, %v804, 0
        %v813 = vsel %vm415, %v806, 0
        %815 = vmatprep.subr.mxu0 0.0
        %816 = vmatpush1.xpose.msra.mxu0 %v811
        %817 = vmatprep.subr.mxu0 0.0
        %818 = vmatpush1.xpose.msra.mxu0 %v813
        %819 = vmatprep.subr.mxu0 0.0
        %820 = vmatpush1.xpose.msra.mxu0 0.0
        %821 = vmatprep.subr.mxu0 0.0
        %822 = vmatpush1.xpose.msra.mxu0 0.0
        %823 = vmatprep.subr.mxu0 0.0
        %824 = vmatpush1.xpose.msra.mxu0 0.0
        %825 = vmatprep.subr.mxu0 0.0
        %826 = vmatpush1.xpose.msra.mxu0 0.0
        %827 = vmatprep.subr.mxu0 0.0
        %828 = vmatpush1.xpose.msra.mxu0 0.0
        %829 = vmatprep.subr.mxu0 0.0
        %830 = vmatpush1.xpose.msra.mxu0 0.0
        %831 = vmatprep.subr.mxu0 0.0
        %832 = vmatpush1.xpose.msra.mxu0 0.0
        %833 = vmatprep.subr.mxu0 0.0
        %834 = vmatpush1.xpose.msra.mxu0 0.0
        %835 = vmatprep.subr.mxu0 0.0
        %836 = vmatpush1.xpose.msra.mxu0 0.0
        %837 = vmatprep.subr.mxu0 0.0
        %838 = vmatpush1.xpose.msra.mxu0 0.0
        %839 = vmatprep.subr.mxu0 0.0
        %840 = vmatpush1.xpose.msra.mxu0 0.0
        %841 = vmatprep.subr.mxu0 0.0
        %842 = vmatpush1.xpose.msra.mxu0 0.0
        %843 = vmatprep.subr.mxu0 0.0
        %844 = vmatpush1.xpose.msra.mxu0 0.0
        %845 = vmatprep.subr.mxu0 0.0
        %846 = vmatpush1.xpose.msra.mxu0 0.0
        %847 = vmatprep.subr.mxu0 0.0
        %848 = vmatpush1.xpose.msra.mxu0 0.0
        %849 = vmatprep.subr.mxu0 0.0
        %850 = vmatpush1.xpose.msra.mxu0 0.0
        %851 = vmatprep.subr.mxu0 0.0
        %852 = vmatpush1.xpose.msra.mxu0 0.0
        %853 = vmatprep.subr.mxu0 0.0
        %854 = vmatpush1.xpose.msra.mxu0 0.0
        %855 = vmatprep.subr.mxu0 0.0
        %856 = vmatpush1.xpose.msra.mxu0 0.0
        %857 = vmatprep.subr.mxu0 0.0
        %858 = vmatpush1.xpose.msra.mxu0 0.0
        %859 = vmatprep.subr.mxu0 0.0
        %860 = vmatpush1.xpose.msra.mxu0 0.0
        %861 = vmatprep.subr.mxu0 0.0
        %862 = vmatpush1.xpose.msra.mxu0 0.0
        %863 = vmatprep.subr.mxu0 0.0
        %864 = vmatpush1.xpose.msra.mxu0 0.0
        %865 = vmatprep.subr.mxu0 0.0
        %866 = vmatpush1.xpose.msra.mxu0 0.0
        %867 = vmatprep.subr.mxu0 0.0
        %868 = vmatpush1.xpose.msra.mxu0 0.0
        %869 = vmatprep.subr.mxu0 0.0
        %870 = vmatpush1.xpose.msra.mxu0 0.0
        %871 = vmatprep.subr.mxu0 0.0
        %872 = vmatpush1.xpose.msra.mxu0 0.0
        %873 = vmatprep.subr.mxu0 0.0
        %874 = vmatpush1.xpose.msra.mxu0 0.0
        %875 = vmatprep.subr.mxu0 0.0
        %876 = vmatpush1.xpose.msra.mxu0 0.0
        %877 = vmatprep.subr.mxu0 0.0
        %878 = vmatpush1.xpose.msra.mxu0 0.0
        %879 = vmatprep.mubr.f32.mxu0 0.0
        %880 = vmatmul.mubr.f32.gmra.mrb[0].mxu0 %v807
        %v881 = vpop.f32.mrb[0].mxu0
        %v882 = vadd.f32 0.0, %v881
        %v883 = vpop.f32.mrb[0].mxu0
        %884 = vmatprep.mubr.f32.mxu0 0.0
        %885 = vmatmul.mubr.f32.gmra.mrb[0].mxu0 %v809
        %v886 = vpop.f32.mrb[0].mxu0
        %v887 = vadd.f32 0.0, %v886
        %v888 = vpop.f32.mrb[0].mxu0
        %889 = vdwg.mxu0
        %890 = vrot.lane.b32.xlu0 %v399, 120
        %v891 = vpop.permute.xlu0 %890
        %892 = vrot.lane.b32.xlu0 %v405, 120
        %v893 = vpop.permute.xlu0 %892
        %894 = vrot.lane.b32.xlu0 %v399, 56
        %v895 = vpop.permute.xlu0 %894
        %896 = vrot.lane.b32.xlu0 %v405, 56
        %v897 = vpop.permute.xlu0 %896
        %v898 = vsel %vm415, %v891, 0
        %v900 = vsel %vm415, %v893, 0
        %v902 = vsel %vm415, %v895, 0
        %v904 = vsel %vm415, %v897, 0
        %906 = vmatprep.subr.mxu0 0.0
        %907 = vmatpush1.xpose.msra.mxu0 %v902
        %908 = vmatprep.subr.mxu0 0.0
        %909 = vmatpush1.xpose.msra.mxu0 %v904
        %910 = vmatprep.subr.mxu0 0.0
        %911 = vmatpush1.xpose.msra.mxu0 0.0
        %912 = vmatprep.subr.mxu0 0.0
        %913 = vmatpush1.xpose.msra.mxu0 0.0
        %914 = vmatprep.subr.mxu0 0.0
        %915 = vmatpush1.xpose.msra.mxu0 0.0
        %916 = vmatprep.subr.mxu0 0.0
        %917 = vmatpush1.xpose.msra.mxu0 0.0
        %918 = vmatprep.subr.mxu0 0.0
        %919 = vmatpush1.xpose.msra.mxu0 0.0
        %920 = vmatprep.subr.mxu0 0.0
        %921 = vmatpush1.xpose.msra.mxu0 0.0
        %922 = vmatprep.subr.mxu0 0.0
        %923 = vmatpush1.xpose.msra.mxu0 0.0
        %924 = vmatprep.subr.mxu0 0.0
        %925 = vmatpush1.xpose.msra.mxu0 0.0
        %926 = vmatprep.subr.mxu0 0.0
        %927 = vmatpush1.xpose.msra.mxu0 0.0
        %928 = vmatprep.subr.mxu0 0.0
        %929 = vmatpush1.xpose.msra.mxu0 0.0
        %930 = vmatprep.subr.mxu0 0.0
        %931 = vmatpush1.xpose.msra.mxu0 0.0
        %932 = vmatprep.subr.mxu0 0.0
        %933 = vmatpush1.xpose.msra.mxu0 0.0
        %934 = vmatprep.subr.mxu0 0.0
        %935 = vmatpush1.xpose.msra.mxu0 0.0
        %936 = vmatprep.subr.mxu0 0.0
        %937 = vmatpush1.xpose.msra.mxu0 0.0
        %938 = vmatprep.subr.mxu0 0.0
        %939 = vmatpush1.xpose.msra.mxu0 0.0
        %940 = vmatprep.subr.mxu0 0.0
        %941 = vmatpush1.xpose.msra.mxu0 0.0
        %942 = vmatprep.subr.mxu0 0.0
        %943 = vmatpush1.xpose.msra.mxu0 0.0
        %944 = vmatprep.subr.mxu0 0.0
        %945 = vmatpush1.xpose.msra.mxu0 0.0
        %946 = vmatprep.subr.mxu0 0.0
        %947 = vmatpush1.xpose.msra.mxu0 0.0
        %948 = vmatprep.subr.mxu0 0.0
        %949 = vmatpush1.xpose.msra.mxu0 0.0
        %950 = vmatprep.subr.mxu0 0.0
        %951 = vmatpush1.xpose.msra.mxu0 0.0
        %952 = vmatprep.subr.mxu0 0.0
        %953 = vmatpush1.xpose.msra.mxu0 0.0
        %954 = vmatprep.subr.mxu0 0.0
        %955 = vmatpush1.xpose.msra.mxu0 0.0
        %956 = vmatprep.subr.mxu0 0.0
        %957 = vmatpush1.xpose.msra.mxu0 0.0
        %958 = vmatprep.subr.mxu0 0.0
        %959 = vmatpush1.xpose.msra.mxu0 0.0
        %960 = vmatprep.subr.mxu0 0.0
        %961 = vmatpush1.xpose.msra.mxu0 0.0
        %962 = vmatprep.subr.mxu0 0.0
        %963 = vmatpush1.xpose.msra.mxu0 0.0
        %964 = vmatprep.subr.mxu0 0.0
        %965 = vmatpush1.xpose.msra.mxu0 0.0
        %966 = vmatprep.subr.mxu0 0.0
        %967 = vmatpush1.xpose.msra.mxu0 0.0
        %968 = vmatprep.subr.mxu0 0.0
        %969 = vmatpush1.xpose.msra.mxu0 0.0
        %970 = vmatprep.mubr.f32.mxu0 0.0
        %971 = vmatmul.mubr.f32.gmra.mrb[0].mxu0 %v898
        %v972 = vpop.f32.mrb[0].mxu0
        %v973 = vadd.f32 0.0, %v972
        %v974 = vpop.f32.mrb[0].mxu0
        %975 = vmatprep.mubr.f32.mxu0 0.0
        %976 = vmatmul.mubr.f32.gmra.mrb[0].mxu0 %v900
        %v977 = vpop.f32.mrb[0].mxu0
        %v978 = vadd.f32 0.0, %v977
        %v979 = vpop.f32.mrb[0].mxu0
        %980 = vdwg.mxu0
        %v981 = vmul.f32 %v882, 0.125
        %v982 = vmul.f32 %v887, 0.125
        %v983 = vmul.f32 %v973, 0.125
        %v984 = vmul.f32 %v978, 0.125
        %v985 = vsel %vm592, %v981, -inf
        %986 = vmax.xlane.f32.xlu0 %v985
        %v987 = vpop.xlane.xlu0 %986
        %v988 = vsel %vm592, %v982, -inf
        %989 = vmax.xlane.f32.xlu0 %v988
        %v990 = vpop.xlane.xlu0 %989
        %v991 = vsel %vm592, %v983, -inf
        %992 = vmax.xlane.f32.xlu0 %v991
        %v993 = vpop.xlane.xlu0 %992
        %v994 = vsel %vm592, %v984, -inf
        %995 = vmax.xlane.f32.xlu0 %v994
        %v996 = vpop.xlane.xlu0 %995
        %v997 = vsub.f32 %v981, %v987
        %v998 = vsub.f32 %v982, %v990
        %v999 = vsub.f32 %v983, %v993
        %v1000 = vsub.f32 %v984, %v996
        %v1001 = vmul.f32 %v997, 1.442695
        %v1002 = vpow.pop %v1001
        %v1003 = vmul.f32 %v998, 1.442695
        %v1004 = vpow.pop %v1003
        %v1005 = vmul.f32 %v999, 1.442695
        %v1006 = vpow.pop %v1005
        %v1007 = vmul.f32 %v1000, 1.442695
        %v1008 = vpow.pop %v1007
        %v1009 = vsel %vm592, %v1002, 0.0
        %1010 = vadd.xlane.f32.xlu0 %v1009
        %v1011 = vpop.xlane.xlu0 %1010
        %v1012 = vsel %vm592, %v1004, 0.0
        %1013 = vadd.xlane.f32.xlu0 %v1012
        %v1014 = vpop.xlane.xlu0 %1013
        %v1015 = vsel %vm592, %v1006, 0.0
        %1016 = vadd.xlane.f32.xlu0 %v1015
        %v1017 = vpop.xlane.xlu0 %1016
        %v1018 = vsel %vm592, %v1008, 0.0
        %1019 = vadd.xlane.f32.xlu0 %v1018
        %v1020 = vpop.xlane.xlu0 %1019
        %v1021 = vrcp.pop %v1011
        %v1022 = vmul.f32 %v1002, %v1021
        %v1023 = vrcp.pop %v1014
        %v1024 = vmul.f32 %v1004, %v1023
        %v1025 = vrcp.pop %v1017
        %v1026 = vmul.f32 %v1006, %v1025
        %v1027 = vrcp.pop %v1020
        %v1028 = vmul.f32 %v1008, %v1027
        %1031 = vrot.lane.b32.xlu0 %v389, 120
        %v1032 = vpop.permute.xlu0 %1031
        %1033 = vrot.lane.b32.xlu0 %v395, 120
        %v1034 = vpop.permute.xlu0 %1033
        %v1038 = vsel %vm592, %v1022, 0
        %v1041 = vsel %vm592, %v1024, 0
        %1043 = vmatprep.subr.mxu0 0.0
        %1044 = vmatpush1.msra.mxu0 %v1032
        %1045 = vmatprep.subr.mxu0 0.0
        %1046 = vmatpush1.msra.mxu0 %v1034
        %1047 = vmatprep.subr.mxu0 0.0
        %1048 = vmatpush1.msra.mxu0 0.0
        %1049 = vmatprep.subr.mxu0 0.0
        %1050 = vmatpush1.msra.mxu0 0.0
        %1051 = vmatprep.subr.mxu0 0.0
        %1052 = vmatpush1.msra.mxu0 0.0
        %1053 = vmatprep.subr.mxu0 0.0
        %1054 = vmatpush1.msra.mxu0 0.0
        %1055 = vmatprep.subr.mxu0 0.0
        %1056 = vmatpush1.msra.mxu0 0.0
        %1057 = vmatprep.subr.mxu0 0.0
        %1058 = vmatpush1.msra.mxu0 0.0
        %1059 = vmatprep.subr.mxu0 0.0
        %1060 = vmatpush1.msra.mxu0 0.0
        %1061 = vmatprep.subr.mxu0 0.0
        %1062 = vmatpush1.msra.mxu0 0.0
        %1063 = vmatprep.subr.mxu0 0.0
        %1064 = vmatpush1.msra.mxu0 0.0
        %1065 = vmatprep.subr.mxu0 0.0
        %1066 = vmatpush1.msra.mxu0 0.0
        %1067 = vmatprep.subr.mxu0 0.0
        %1068 = vmatpush1.msra.mxu0 0.0
        %1069 = vmatprep.subr.mxu0 0.0
        %1070 = vmatpush1.msra.mxu0 0.0
        %1071 = vmatprep.subr.mxu0 0.0
        %1072 = vmatpush1.msra.mxu0 0.0
        %1073 = vmatprep.subr.mxu0 0.0
        %1074 = vmatpush1.msra.mxu0 0.0
        %1075 = vmatprep.subr.mxu0 0.0
        %1076 = vmatpush1.msra.mxu0 0.0
        %1077 = vmatprep.subr.mxu0 0.0
        %1078 = vmatpush1.msra.mxu0 0.0
        %1079 = vmatprep.subr.mxu0 0.0
        %1080 = vmatpush1.msra.mxu0 0.0
        %1081 = vmatprep.subr.mxu0 0.0
        %1082 = vmatpush1.msra.mxu0 0.0
        %1083 = vmatprep.subr.mxu0 0.0
        %1084 = vmatpush1.msra.mxu0 0.0
        %1085 = vmatprep.subr.mxu0 0.0
        %1086 = vmatpush1.msra.mxu0 0.0
        %1087 = vmatprep.subr.mxu0 0.0
        %1088 = vmatpush1.msra.mxu0 0.0
        %1089 = vmatprep.subr.mxu0 0.0
        %1090 = vmatpush1.msra.mxu0 0.0
        %1091 = vmatprep.subr.mxu0 0.0
        %1092 = vmatpush1.msra.mxu0 0.0
        %1093 = vmatprep.subr.mxu0 0.0
        %1094 = vmatpush1.msra.mxu0 0.0
        %1095 = vmatprep.subr.mxu0 0.0
        %1096 = vmatpush1.msra.mxu0 0.0
        %1097 = vmatprep.subr.mxu0 0.0
        %1098 = vmatpush1.msra.mxu0 0.0
        %1099 = vmatprep.subr.mxu0 0.0
        %1100 = vmatpush1.msra.mxu0 0.0
        %1101 = vmatprep.subr.mxu0 0.0
        %1102 = vmatpush1.msra.mxu0 0.0
        %1103 = vmatprep.subr.mxu0 0.0
        %1104 = vmatpush1.msra.mxu0 0.0
        %1105 = vmatprep.subr.mxu0 0.0
        %1106 = vmatpush1.msra.mxu0 0.0
        %1107 = vmatprep.mubr.f32.mxu0 0.0
        %1108 = vmatmul.mubr.f32.gmra.mrb[0].mxu0 %v1038
        %v1109 = vpop.f32.mrb[0].mxu0
        %v1110 = vadd.f32 0.0, %v1109
        %v1111 = vpop.f32.mrb[0].mxu0
        %1112 = vmatprep.mubr.f32.mxu0 0.0
        %1113 = vmatmul.mubr.f32.gmra.mrb[0].mxu0 %v1041
        %v1114 = vpop.f32.mrb[0].mxu0
        %v1115 = vadd.f32 0.0, %v1114
        %v1116 = vpop.f32.mrb[0].mxu0
        %1117 = vdwg.mxu0
        %1120 = vrot.lane.b32.xlu0 %v401, 120
        %v1121 = vpop.permute.xlu0 %1120
        %1122 = vrot.lane.b32.xlu0 %v407, 120
        %v1123 = vpop.permute.xlu0 %1122
        %v1127 = vsel %vm592, %v1026, 0
        %v1130 = vsel %vm592, %v1028, 0
        %1132 = vmatprep.subr.mxu0 0.0
        %1133 = vmatpush1.msra.mxu0 %v1121
        %1134 = vmatprep.subr.mxu0 0.0
        %1135 = vmatpush1.msra.mxu0 %v1123
        %1136 = vmatprep.subr.mxu0 0.0
        %1137 = vmatpush1.msra.mxu0 0.0
        %1138 = vmatprep.subr.mxu0 0.0
        %1139 = vmatpush1.msra.mxu0 0.0
        %1140 = vmatprep.subr.mxu0 0.0
        %1141 = vmatpush1.msra.mxu0 0.0
        %1142 = vmatprep.subr.mxu0 0.0
        %1143 = vmatpush1.msra.mxu0 0.0
        %1144 = vmatprep.subr.mxu0 0.0
        %1145 = vmatpush1.msra.mxu0 0.0
        %1146 = vmatprep.subr.mxu0 0.0
        %1147 = vmatpush1.msra.mxu0 0.0
        %1148 = vmatprep.subr.mxu0 0.0
        %1149 = vmatpush1.msra.mxu0 0.0
        %1150 = vmatprep.subr.mxu0 0.0
        %1151 = vmatpush1.msra.mxu0 0.0
        %1152 = vmatprep.subr.mxu0 0.0
        %1153 = vmatpush1.msra.mxu0 0.0
        %1154 = vmatprep.subr.mxu0 0.0
        %1155 = vmatpush1.msra.mxu0 0.0
        %1156 = vmatprep.subr.mxu0 0.0
        %1157 = vmatpush1.msra.mxu0 0.0
        %1158 = vmatprep.subr.mxu0 0.0
        %1159 = vmatpush1.msra.mxu0 0.0
        %1160 = vmatprep.subr.mxu0 0.0
        %1161 = vmatpush1.msra.mxu0 0.0
        %1162 = vmatprep.subr.mxu0 0.0
        %1163 = vmatpush1.msra.mxu0 0.0
        %1164 = vmatprep.subr.mxu0 0.0
        %1165 = vmatpush1.msra.mxu0 0.0
        %1166 = vmatprep.subr.mxu0 0.0
        %1167 = vmatpush1.msra.mxu0 0.0
        %1168 = vmatprep.subr.mxu0 0.0
        %1169 = vmatpush1.msra.mxu0 0.0
        %1170 = vmatprep.subr.mxu0 0.0
        %1171 = vmatpush1.msra.mxu0 0.0
        %1172 = vmatprep.subr.mxu0 0.0
        %1173 = vmatpush1.msra.mxu0 0.0
        %1174 = vmatprep.subr.mxu0 0.0
        %1175 = vmatpush1.msra.mxu0 0.0
        %1176 = vmatprep.subr.mxu0 0.0
        %1177 = vmatpush1.msra.mxu0 0.0
        %1178 = vmatprep.subr.mxu0 0.0
        %1179 = vmatpush1.msra.mxu0 0.0
        %1180 = vmatprep.subr.mxu0 0.0
        %1181 = vmatpush1.msra.mxu0 0.0
        %1182 = vmatprep.subr.mxu0 0.0
        %1183 = vmatpush1.msra.mxu0 0.0
        %1184 = vmatprep.subr.mxu0 0.0
        %1185 = vmatpush1.msra.mxu0 0.0
        %1186 = vmatprep.subr.mxu0 0.0
        %1187 = vmatpush1.msra.mxu0 0.0
        %1188 = vmatprep.subr.mxu0 0.0
        %1189 = vmatpush1.msra.mxu0 0.0
        %1190 = vmatprep.subr.mxu0 0.0
        %1191 = vmatpush1.msra.mxu0 0.0
        %1192 = vmatprep.subr.mxu0 0.0
        %1193 = vmatpush1.msra.mxu0 0.0
        %1194 = vmatprep.subr.mxu0 0.0
        %1195 = vmatpush1.msra.mxu0 0.0
        %1196 = vmatprep.mubr.f32.mxu0 0.0
        %1197 = vmatmul.mubr.f32.gmra.mrb[0].mxu0 %v1127
        %v1198 = vpop.f32.mrb[0].mxu0
        %v1199 = vadd.f32 0.0, %v1198
        %v1200 = vpop.f32.mrb[0].mxu0
        %1201 = vmatprep.mubr.f32.mxu0 0.0
        %1202 = vmatmul.mubr.f32.gmra.mrb[0].mxu0 %v1130
        %v1203 = vpop.f32.mrb[0].mxu0
        %v1204 = vadd.f32 0.0, %v1203
        %v1205 = vpop.f32.mrb[0].mxu0
        %1206 = vdwg.mxu0
        %1207 = vrot.lane.b32.xlu0 %v387, 112
        %v1208 = vpop.permute.xlu0 %1207
        %1209 = vrot.lane.b32.xlu0 %v393, 112
        %v1210 = vpop.permute.xlu0 %1209
        %1211 = vrot.lane.b32.xlu0 %v387, 48
        %v1212 = vpop.permute.xlu0 %1211
        %1213 = vrot.lane.b32.xlu0 %v393, 48
        %v1214 = vpop.permute.xlu0 %1213
        %v1215 = vsel %vm415, %v1208, 0
        %v1217 = vsel %vm415, %v1210, 0
        %v1219 = vsel %vm415, %v1212, 0
        %v1221 = vsel %vm415, %v1214, 0
        %1223 = vmatprep.subr.mxu0 0.0
        %1224 = vmatpush1.xpose.msra.mxu0 %v1219
        %1225 = vmatprep.subr.mxu0 0.0
        %1226 = vmatpush1.xpose.msra.mxu0 %v1221
        %1227 = vmatprep.subr.mxu0 0.0
        %1228 = vmatpush1.xpose.msra.mxu0 0.0
        %1229 = vmatprep.subr.mxu0 0.0
        %1230 = vmatpush1.xpose.msra.mxu0 0.0
        %1231 = vmatprep.subr.mxu0 0.0
        %1232 = vmatpush1.xpose.msra.mxu0 0.0
        %1233 = vmatprep.subr.mxu0 0.0
        %1234 = vmatpush1.xpose.msra.mxu0 0.0
        %1235 = vmatprep.subr.mxu0 0.0
        %1236 = vmatpush1.xpose.msra.mxu0 0.0
        %1237 = vmatprep.subr.mxu0 0.0
        %1238 = vmatpush1.xpose.msra.mxu0 0.0
        %1239 = vmatprep.subr.mxu0 0.0
        %1240 = vmatpush1.xpose.msra.mxu0 0.0
        %1241 = vmatprep.subr.mxu0 0.0
        %1242 = vmatpush1.xpose.msra.mxu0 0.0
        %1243 = vmatprep.subr.mxu0 0.0
        %1244 = vmatpush1.xpose.msra.mxu0 0.0
        %1245 = vmatprep.subr.mxu0 0.0
        %1246 = vmatpush1.xpose.msra.mxu0 0.0
        %1247 = vmatprep.subr.mxu0 0.0
        %1248 = vmatpush1.xpose.msra.mxu0 0.0
        %1249 = vmatprep.subr.mxu0 0.0
        %1250 = vmatpush1.xpose.msra.mxu0 0.0
        %1251 = vmatprep.subr.mxu0 0.0
        %1252 = vmatpush1.xpose.msra.mxu0 0.0
        %1253 = vmatprep.subr.mxu0 0.0
        %1254 = vmatpush1.xpose.msra.mxu0 0.0
        %1255 = vmatprep.subr.mxu0 0.0
        %1256 = vmatpush1.xpose.msra.mxu0 0.0
        %1257 = vmatprep.subr.mxu0 0.0
        %1258 = vmatpush1.xpose.msra.mxu0 0.0
        %1259 = vmatprep.subr.mxu0 0.0
        %1260 = vmatpush1.xpose.msra.mxu0 0.0
        %1261 = vmatprep.subr.mxu0 0.0
        %1262 = vmatpush1.xpose.msra.mxu0 0.0
        %1263 = vmatprep.subr.mxu0 0.0
        %1264 = vmatpush1.xpose.msra.mxu0 0.0
        %1265 = vmatprep.subr.mxu0 0.0
        %1266 = vmatpush1.xpose.msra.mxu0 0.0
        %1267 = vmatprep.subr.mxu0 0.0
        %1268 = vmatpush1.xpose.msra.mxu0 0.0
        %1269 = vmatprep.subr.mxu0 0.0
        %1270 = vmatpush1.xpose.msra.mxu0 0.0
        %1271 = vmatprep.subr.mxu0 0.0
        %1272 = vmatpush1.xpose.msra.mxu0 0.0
        %1273 = vmatprep.subr.mxu0 0.0
        %1274 = vmatpush1.xpose.msra.mxu0 0.0
        %1275 = vmatprep.subr.mxu0 0.0
        %1276 = vmatpush1.xpose.msra.mxu0 0.0
        %1277 = vmatprep.subr.mxu0 0.0
        %1278 = vmatpush1.xpose.msra.mxu0 0.0
        %1279 = vmatprep.subr.mxu0 0.0
        %1280 = vmatpush1.xpose.msra.mxu0 0.0
        %1281 = vmatprep.subr.mxu0 0.0
        %1282 = vmatpush1.xpose.msra.mxu0 0.0
        %1283 = vmatprep.subr.mxu0 0.0
        %1284 = vmatpush1.xpose.msra.mxu0 0.0
        %1285 = vmatprep.subr.mxu0 0.0
        %1286 = vmatpush1.xpose.msra.mxu0 0.0
        %1287 = vmatprep.mubr.f32.mxu0 0.0
        %1288 = vmatmul.mubr.f32.gmra.mrb[0].mxu0 %v1215
        %v1289 = vpop.f32.mrb[0].mxu0
        %v1290 = vadd.f32 0.0, %v1289
        %v1291 = vpop.f32.mrb[0].mxu0
        %1292 = vmatprep.mubr.f32.mxu0 0.0
        %1293 = vmatmul.mubr.f32.gmra.mrb[0].mxu0 %v1217
        %v1294 = vpop.f32.mrb[0].mxu0
        %v1295 = vadd.f32 0.0, %v1294
        %v1296 = vpop.f32.mrb[0].mxu0
        %1297 = vdwg.mxu0
        %1298 = vrot.lane.b32.xlu0 %v399, 112
        %v1299 = vpop.permute.xlu0 %1298
        %1300 = vrot.lane.b32.xlu0 %v405, 112
        %v1301 = vpop.permute.xlu0 %1300
        %1302 = vrot.lane.b32.xlu0 %v399, 48
        %v1303 = vpop.permute.xlu0 %1302
        %1304 = vrot.lane.b32.xlu0 %v405, 48
        %v1305 = vpop.permute.xlu0 %1304
        %v1306 = vsel %vm415, %v1299, 0
        %v1308 = vsel %vm415, %v1301, 0
        %v1310 = vsel %vm415, %v1303, 0
        %v1312 = vsel %vm415, %v1305, 0
        %1314 = vmatprep.subr.mxu0 0.0
        %1315 = vmatpush1.xpose.msra.mxu0 %v1310
        %1316 = vmatprep.subr.mxu0 0.0
        %1317 = vmatpush1.xpose.msra.mxu0 %v1312
        %1318 = vmatprep.subr.mxu0 0.0
        %1319 = vmatpush1.xpose.msra.mxu0 0.0
        %1320 = vmatprep.subr.mxu0 0.0
        %1321 = vmatpush1.xpose.msra.mxu0 0.0
        %1322 = vmatprep.subr.mxu0 0.0
        %1323 = vmatpush1.xpose.msra.mxu0 0.0
        %1324 = vmatprep.subr.mxu0 0.0
        %1325 = vmatpush1.xpose.msra.mxu0 0.0
        %1326 = vmatprep.subr.mxu0 0.0
        %1327 = vmatpush1.xpose.msra.mxu0 0.0
        %1328 = vmatprep.subr.mxu0 0.0
        %1329 = vmatpush1.xpose.msra.mxu0 0.0
        %1330 = vmatprep.subr.mxu0 0.0
        %1331 = vmatpush1.xpose.msra.mxu0 0.0
        %1332 = vmatprep.subr.mxu0 0.0
        %1333 = vmatpush1.xpose.msra.mxu0 0.0
        %1334 = vmatprep.subr.mxu0 0.0
        %1335 = vmatpush1.xpose.msra.mxu0 0.0
        %1336 = vmatprep.subr.mxu0 0.0
        %1337 = vmatpush1.xpose.msra.mxu0 0.0
        %1338 = vmatprep.subr.mxu0 0.0
        %1339 = vmatpush1.xpose.msra.mxu0 0.0
        %1340 = vmatprep.subr.mxu0 0.0
        %1341 = vmatpush1.xpose.msra.mxu0 0.0
        %1342 = vmatprep.subr.mxu0 0.0
        %1343 = vmatpush1.xpose.msra.mxu0 0.0
        %1344 = vmatprep.subr.mxu0 0.0
        %1345 = vmatpush1.xpose.msra.mxu0 0.0
        %1346 = vmatprep.subr.mxu0 0.0
        %1347 = vmatpush1.xpose.msra.mxu0 0.0
        %1348 = vmatprep.subr.mxu0 0.0
        %1349 = vmatpush1.xpose.msra.mxu0 0.0
        %1350 = vmatprep.subr.mxu0 0.0
        %1351 = vmatpush1.xpose.msra.mxu0 0.0
        %1352 = vmatprep.subr.mxu0 0.0
        %1353 = vmatpush1.xpose.msra.mxu0 0.0
        %1354 = vmatprep.subr.mxu0 0.0
        %1355 = vmatpush1.xpose.msra.mxu0 0.0
        %1356 = vmatprep.subr.mxu0 0.0
        %1357 = vmatpush1.xpose.msra.mxu0 0.0
        %1358 = vmatprep.subr.mxu0 0.0
        %1359 = vmatpush1.xpose.msra.mxu0 0.0
        %1360 = vmatprep.subr.mxu0 0.0
        %1361 = vmatpush1.xpose.msra.mxu0 0.0
        %1362 = vmatprep.subr.mxu0 0.0
        %1363 = vmatpush1.xpose.msra.mxu0 0.0
        %1364 = vmatprep.subr.mxu0 0.0
        %1365 = vmatpush1.xpose.msra.mxu0 0.0
        %1366 = vmatprep.subr.mxu0 0.0
        %1367 = vmatpush1.xpose.msra.mxu0 0.0
        %1368 = vmatprep.subr.mxu0 0.0
        %1369 = vmatpush1.xpose.msra.mxu0 0.0
        %1370 = vmatprep.subr.mxu0 0.0
        %1371 = vmatpush1.xpose.msra.mxu0 0.0
        %1372 = vmatprep.subr.mxu0 0.0
        %1373 = vmatpush1.xpose.msra.mxu0 0.0
        %1374 = vmatprep.subr.mxu0 0.0
        %1375 = vmatpush1.xpose.msra.mxu0 0.0
        %1376 = vmatprep.subr.mxu0 0.0
        %1377 = vmatpush1.xpose.msra.mxu0 0.0
        %1378 = vmatprep.mubr.f32.mxu0 0.0
        %1379 = vmatmul.mubr.f32.gmra.mrb[0].mxu0 %v1306
        %v1380 = vpop.f32.mrb[0].mxu0
        %v1381 = vadd.f32 0.0, %v1380
        %v1382 = vpop.f32.mrb[0].mxu0
        %1383 = vmatprep.mubr.f32.mxu0 0.0
        %1384 = vmatmul.mubr.f32.gmra.mrb[0].mxu0 %v1308
        %v1385 = vpop.f32.mrb[0].mxu0
        %v1386 = vadd.f32 0.0, %v1385
        %v1387 = vpop.f32.mrb[0].mxu0
        %1388 = vdwg.mxu0
        %v1389 = vmul.f32 %v1290, 0.125
        %v1390 = vmul.f32 %v1295, 0.125
        %v1391 = vmul.f32 %v1381, 0.125
        %v1392 = vmul.f32 %v1386, 0.125
        %v1393 = vsel %vm592, %v1389, -inf
        %1394 = vmax.xlane.f32.xlu0 %v1393
        %v1395 = vpop.xlane.xlu0 %1394
        %v1396 = vsel %vm592, %v1390, -inf
        %1397 = vmax.xlane.f32.xlu0 %v1396
        %v1398 = vpop.xlane.xlu0 %1397
        %v1399 = vsel %vm592, %v1391, -inf
        %1400 = vmax.xlane.f32.xlu0 %v1399
        %v1401 = vpop.xlane.xlu0 %1400
        %v1402 = vsel %vm592, %v1392, -inf
        %1403 = vmax.xlane.f32.xlu0 %v1402
        %v1404 = vpop.xlane.xlu0 %1403
        %v1405 = vsub.f32 %v1389, %v1395
        %v1406 = vsub.f32 %v1390, %v1398
        %v1407 = vsub.f32 %v1391, %v1401
        %v1408 = vsub.f32 %v1392, %v1404
        %v1409 = vmul.f32 %v1405, 1.442695
        %v1410 = vpow.pop %v1409
        %v1411 = vmul.f32 %v1406, 1.442695
        %v1412 = vpow.pop %v1411
        %v1413 = vmul.f32 %v1407, 1.442695
        %v1414 = vpow.pop %v1413
        %v1415 = vmul.f32 %v1408, 1.442695
        %v1416 = vpow.pop %v1415
        %v1417 = vsel %vm592, %v1410, 0.0
        %1418 = vadd.xlane.f32.xlu0 %v1417
        %v1419 = vpop.xlane.xlu0 %1418
        %v1420 = vsel %vm592, %v1412, 0.0
        %1421 = vadd.xlane.f32.xlu0 %v1420
        %v1422 = vpop.xlane.xlu0 %1421
        %v1423 = vsel %vm592, %v1414, 0.0
        %1424 = vadd.xlane.f32.xlu0 %v1423
        %v1425 = vpop.xlane.xlu0 %1424
        %v1426 = vsel %vm592, %v1416, 0.0
        %1427 = vadd.xlane.f32.xlu0 %v1426
        %v1428 = vpop.xlane.xlu0 %1427
        %v1429 = vrcp.pop %v1419
        %v1430 = vmul.f32 %v1410, %v1429
        %v1431 = vrcp.pop %v1422
        %v1432 = vmul.f32 %v1412, %v1431
        %v1433 = vrcp.pop %v1425
        %v1434 = vmul.f32 %v1414, %v1433
        %v1435 = vrcp.pop %v1428
        %v1436 = vmul.f32 %v1416, %v1435
        %1437 = vrot.lane.b32.xlu0 %v389, 112
        %v1438 = vpop.permute.xlu0 %1437
        %1439 = vrot.lane.b32.xlu0 %v395, 112
        %v1440 = vpop.permute.xlu0 %1439
        %v1444 = vsel %vm592, %v1430, 0
        %v1447 = vsel %vm592, %v1432, 0
        %1449 = vmatprep.subr.mxu0 0.0
        %1450 = vmatpush1.msra.mxu0 %v1438
        %1451 = vmatprep.subr.mxu0 0.0
        %1452 = vmatpush1.msra.mxu0 %v1440
        %1453 = vmatprep.subr.mxu0 0.0
        %1454 = vmatpush1.msra.mxu0 0.0
        %1455 = vmatprep.subr.mxu0 0.0
        %1456 = vmatpush1.msra.mxu0 0.0
        %1457 = vmatprep.subr.mxu0 0.0
        %1458 = vmatpush1.msra.mxu0 0.0
        %1459 = vmatprep.subr.mxu0 0.0
        %1460 = vmatpush1.msra.mxu0 0.0
        %1461 = vmatprep.subr.mxu0 0.0
        %1462 = vmatpush1.msra.mxu0 0.0
        %1463 = vmatprep.subr.mxu0 0.0
        %1464 = vmatpush1.msra.mxu0 0.0
        %1465 = vmatprep.subr.mxu0 0.0
        %1466 = vmatpush1.msra.mxu0 0.0
        %1467 = vmatprep.subr.mxu0 0.0
        %1468 = vmatpush1.msra.mxu0 0.0
        %1469 = vmatprep.subr.mxu0 0.0
        %1470 = vmatpush1.msra.mxu0 0.0
        %1471 = vmatprep.subr.mxu0 0.0
        %1472 = vmatpush1.msra.mxu0 0.0
        %1473 = vmatprep.subr.mxu0 0.0
        %1474 = vmatpush1.msra.mxu0 0.0
        %1475 = vmatprep.subr.mxu0 0.0
        %1476 = vmatpush1.msra.mxu0 0.0
        %1477 = vmatprep.subr.mxu0 0.0
        %1478 = vmatpush1.msra.mxu0 0.0
        %1479 = vmatprep.subr.mxu0 0.0
        %1480 = vmatpush1.msra.mxu0 0.0
        %1481 = vmatprep.subr.mxu0 0.0
        %1482 = vmatpush1.msra.mxu0 0.0
        %1483 = vmatprep.subr.mxu0 0.0
        %1484 = vmatpush1.msra.mxu0 0.0
        %1485 = vmatprep.subr.mxu0 0.0
        %1486 = vmatpush1.msra.mxu0 0.0
        %1487 = vmatprep.subr.mxu0 0.0
        %1488 = vmatpush1.msra.mxu0 0.0
        %1489 = vmatprep.subr.mxu0 0.0
        %1490 = vmatpush1.msra.mxu0 0.0
        %1491 = vmatprep.subr.mxu0 0.0
        %1492 = vmatpush1.msra.mxu0 0.0
        %1493 = vmatprep.subr.mxu0 0.0
        %1494 = vmatpush1.msra.mxu0 0.0
        %1495 = vmatprep.subr.mxu0 0.0
        %1496 = vmatpush1.msra.mxu0 0.0
        %1497 = vmatprep.subr.mxu0 0.0
        %1498 = vmatpush1.msra.mxu0 0.0
        %1499 = vmatprep.subr.mxu0 0.0
        %1500 = vmatpush1.msra.mxu0 0.0
        %1501 = vmatprep.subr.mxu0 0.0
        %1502 = vmatpush1.msra.mxu0 0.0
        %1503 = vmatprep.subr.mxu0 0.0
        %1504 = vmatpush1.msra.mxu0 0.0
        %1505 = vmatprep.subr.mxu0 0.0
        %1506 = vmatpush1.msra.mxu0 0.0
        %1507 = vmatprep.subr.mxu0 0.0
        %1508 = vmatpush1.msra.mxu0 0.0
        %1509 = vmatprep.subr.mxu0 0.0
        %1510 = vmatpush1.msra.mxu0 0.0
        %1511 = vmatprep.subr.mxu0 0.0
        %1512 = vmatpush1.msra.mxu0 0.0
        %1513 = vmatprep.mubr.f32.mxu0 0.0
        %1514 = vmatmul.mubr.f32.gmra.mrb[0].mxu0 %v1444
        %v1515 = vpop.f32.mrb[0].mxu0
        %v1516 = vadd.f32 0.0, %v1515
        %v1517 = vpop.f32.mrb[0].mxu0
        %1518 = vmatprep.mubr.f32.mxu0 0.0
        %1519 = vmatmul.mubr.f32.gmra.mrb[0].mxu0 %v1447
        %v1520 = vpop.f32.mrb[0].mxu0
        %v1521 = vadd.f32 0.0, %v1520
        %v1522 = vpop.f32.mrb[0].mxu0
        %1523 = vdwg.mxu0
        %1524 = vrot.lane.b32.xlu0 %v401, 112
        %v1525 = vpop.permute.xlu0 %1524
        %1526 = vrot.lane.b32.xlu0 %v407, 112
        %v1527 = vpop.permute.xlu0 %1526
        %v1531 = vsel %vm592, %v1434, 0
        %v1534 = vsel %vm592, %v1436, 0
        %1536 = vmatprep.subr.mxu0 0.0
        %1537 = vmatpush1.msra.mxu0 %v1525
        %1538 = vmatprep.subr.mxu0 0.0
        %1539 = vmatpush1.msra.mxu0 %v1527
        %1540 = vmatprep.subr.mxu0 0.0
        %1541 = vmatpush1.msra.mxu0 0.0
        %1542 = vmatprep.subr.mxu0 0.0
        %1543 = vmatpush1.msra.mxu0 0.0
        %1544 = vmatprep.subr.mxu0 0.0
        %1545 = vmatpush1.msra.mxu0 0.0
        %1546 = vmatprep.subr.mxu0 0.0
        %1547 = vmatpush1.msra.mxu0 0.0
        %1548 = vmatprep.subr.mxu0 0.0
        %1549 = vmatpush1.msra.mxu0 0.0
        %1550 = vmatprep.subr.mxu0 0.0
        %1551 = vmatpush1.msra.mxu0 0.0
        %1552 = vmatprep.subr.mxu0 0.0
        %1553 = vmatpush1.msra.mxu0 0.0
        %1554 = vmatprep.subr.mxu0 0.0
        %1555 = vmatpush1.msra.mxu0 0.0
        %1556 = vmatprep.subr.mxu0 0.0
        %1557 = vmatpush1.msra.mxu0 0.0
        %1558 = vmatprep.subr.mxu0 0.0
        %1559 = vmatpush1.msra.mxu0 0.0
        %1560 = vmatprep.subr.mxu0 0.0
        %1561 = vmatpush1.msra.mxu0 0.0
        %1562 = vmatprep.subr.mxu0 0.0
        %1563 = vmatpush1.msra.mxu0 0.0
        %1564 = vmatprep.subr.mxu0 0.0
        %1565 = vmatpush1.msra.mxu0 0.0
        %1566 = vmatprep.subr.mxu0 0.0
        %1567 = vmatpush1.msra.mxu0 0.0
        %1568 = vmatprep.subr.mxu0 0.0
        %1569 = vmatpush1.msra.mxu0 0.0
        %1570 = vmatprep.subr.mxu0 0.0
        %1571 = vmatpush1.msra.mxu0 0.0
        %1572 = vmatprep.subr.mxu0 0.0
        %1573 = vmatpush1.msra.mxu0 0.0
        %1574 = vmatprep.subr.mxu0 0.0
        %1575 = vmatpush1.msra.mxu0 0.0
        %1576 = vmatprep.subr.mxu0 0.0
        %1577 = vmatpush1.msra.mxu0 0.0
        %1578 = vmatprep.subr.mxu0 0.0
        %1579 = vmatpush1.msra.mxu0 0.0
        %1580 = vmatprep.subr.mxu0 0.0
        %1581 = vmatpush1.msra.mxu0 0.0
        %1582 = vmatprep.subr.mxu0 0.0
        %1583 = vmatpush1.msra.mxu0 0.0
        %1584 = vmatprep.subr.mxu0 0.0
        %1585 = vmatpush1.msra.mxu0 0.0
        %1586 = vmatprep.subr.mxu0 0.0
        %1587 = vmatpush1.msra.mxu0 0.0
        %1588 = vmatprep.subr.mxu0 0.0
        %1589 = vmatpush1.msra.mxu0 0.0
        %1590 = vmatprep.subr.mxu0 0.0
        %1591 = vmatpush1.msra.mxu0 0.0
        %1592 = vmatprep.subr.mxu0 0.0
        %1593 = vmatpush1.msra.mxu0 0.0
        %1594 = vmatprep.subr.mxu0 0.0
        %1595 = vmatpush1.msra.mxu0 0.0
        %1596 = vmatprep.subr.mxu0 0.0
        %1597 = vmatpush1.msra.mxu0 0.0
        %1598 = vmatprep.subr.mxu0 0.0
        %1599 = vmatpush1.msra.mxu0 0.0
        %1600 = vmatprep.mubr.f32.mxu0 0.0
        %1601 = vmatmul.mubr.f32.gmra.mrb[0].mxu0 %v1531
        %v1602 = vpop.f32.mrb[0].mxu0
        %v1603 = vadd.f32 0.0, %v1602
        %v1604 = vpop.f32.mrb[0].mxu0
        %1605 = vmatprep.mubr.f32.mxu0 0.0
        %1606 = vmatmul.mubr.f32.gmra.mrb[0].mxu0 %v1534
        %v1607 = vpop.f32.mrb[0].mxu0
        %v1608 = vadd.f32 0.0, %v1607
        %v1609 = vpop.f32.mrb[0].mxu0
        %1610 = vdwg.mxu0
        %1611 = vrot.lane.b32.xlu0 %v387, 104
        %v1612 = vpop.permute.xlu0 %1611
        %1613 = vrot.lane.b32.xlu0 %v393, 104
        %v1614 = vpop.permute.xlu0 %1613
        %1615 = vrot.lane.b32.xlu0 %v387, 40
        %v1616 = vpop.permute.xlu0 %1615
        %1617 = vrot.lane.b32.xlu0 %v393, 40
        %v1618 = vpop.permute.xlu0 %1617
        %v1619 = vsel %vm415, %v1612, 0
        %v1621 = vsel %vm415, %v1614, 0
        %v1623 = vsel %vm415, %v1616, 0
        %v1625 = vsel %vm415, %v1618, 0
        %1627 = vmatprep.subr.mxu0 0.0
        %1628 = vmatpush1.xpose.msra.mxu0 %v1623
        %1629 = vmatprep.subr.mxu0 0.0
        %1630 = vmatpush1.xpose.msra.mxu0 %v1625
        %1631 = vmatprep.subr.mxu0 0.0
        %1632 = vmatpush1.xpose.msra.mxu0 0.0
        %1633 = vmatprep.subr.mxu0 0.0
        %1634 = vmatpush1.xpose.msra.mxu0 0.0
        %1635 = vmatprep.subr.mxu0 0.0
        %1636 = vmatpush1.xpose.msra.mxu0 0.0
        %1637 = vmatprep.subr.mxu0 0.0
        %1638 = vmatpush1.xpose.msra.mxu0 0.0
        %1639 = vmatprep.subr.mxu0 0.0
        %1640 = vmatpush1.xpose.msra.mxu0 0.0
        %1641 = vmatprep.subr.mxu0 0.0
        %1642 = vmatpush1.xpose.msra.mxu0 0.0
        %1643 = vmatprep.subr.mxu0 0.0
        %1644 = vmatpush1.xpose.msra.mxu0 0.0
        %1645 = vmatprep.subr.mxu0 0.0
        %1646 = vmatpush1.xpose.msra.mxu0 0.0
        %1647 = vmatprep.subr.mxu0 0.0
        %1648 = vmatpush1.xpose.msra.mxu0 0.0
        %1649 = vmatprep.subr.mxu0 0.0
        %1650 = vmatpush1.xpose.msra.mxu0 0.0
        %1651 = vmatprep.subr.mxu0 0.0
        %1652 = vmatpush1.xpose.msra.mxu0 0.0
        %1653 = vmatprep.subr.mxu0 0.0
        %1654 = vmatpush1.xpose.msra.mxu0 0.0
        %1655 = vmatprep.subr.mxu0 0.0
        %1656 = vmatpush1.xpose.msra.mxu0 0.0
        %1657 = vmatprep.subr.mxu0 0.0
        %1658 = vmatpush1.xpose.msra.mxu0 0.0
        %1659 = vmatprep.subr.mxu0 0.0
        %1660 = vmatpush1.xpose.msra.mxu0 0.0
        %1661 = vmatprep.subr.mxu0 0.0
        %1662 = vmatpush1.xpose.msra.mxu0 0.0
        %1663 = vmatprep.subr.mxu0 0.0
        %1664 = vmatpush1.xpose.msra.mxu0 0.0
        %1665 = vmatprep.subr.mxu0 0.0
        %1666 = vmatpush1.xpose.msra.mxu0 0.0
        %1667 = vmatprep.subr.mxu0 0.0
        %1668 = vmatpush1.xpose.msra.mxu0 0.0
        %1669 = vmatprep.subr.mxu0 0.0
        %1670 = vmatpush1.xpose.msra.mxu0 0.0
        %1671 = vmatprep.subr.mxu0 0.0
        %1672 = vmatpush1.xpose.msra.mxu0 0.0
        %1673 = vmatprep.subr.mxu0 0.0
        %1674 = vmatpush1.xpose.msra.mxu0 0.0
        %1675 = vmatprep.subr.mxu0 0.0
        %1676 = vmatpush1.xpose.msra.mxu0 0.0
        %1677 = vmatprep.subr.mxu0 0.0
        %1678 = vmatpush1.xpose.msra.mxu0 0.0
        %1679 = vmatprep.subr.mxu0 0.0
        %1680 = vmatpush1.xpose.msra.mxu0 0.0
        %1681 = vmatprep.subr.mxu0 0.0
        %1682 = vmatpush1.xpose.msra.mxu0 0.0
        %1683 = vmatprep.subr.mxu0 0.0
        %1684 = vmatpush1.xpose.msra.mxu0 0.0
        %1685 = vmatprep.subr.mxu0 0.0
        %1686 = vmatpush1.xpose.msra.mxu0 0.0
        %1687 = vmatprep.subr.mxu0 0.0
        %1688 = vmatpush1.xpose.msra.mxu0 0.0
        %1689 = vmatprep.subr.mxu0 0.0
        %1690 = vmatpush1.xpose.msra.mxu0 0.0
        %1691 = vmatprep.mubr.f32.mxu0 0.0
        %1692 = vmatmul.mubr.f32.gmra.mrb[0].mxu0 %v1619
        %v1693 = vpop.f32.mrb[0].mxu0
        %v1694 = vadd.f32 0.0, %v1693
        %v1695 = vpop.f32.mrb[0].mxu0
        %1696 = vmatprep.mubr.f32.mxu0 0.0
        %1697 = vmatmul.mubr.f32.gmra.mrb[0].mxu0 %v1621
        %v1698 = vpop.f32.mrb[0].mxu0
        %v1699 = vadd.f32 0.0, %v1698
        %v1700 = vpop.f32.mrb[0].mxu0
        %1701 = vdwg.mxu0
        %1702 = vrot.lane.b32.xlu0 %v399, 104
        %v1703 = vpop.permute.xlu0 %1702
        %1704 = vrot.lane.b32.xlu0 %v405, 104
        %v1705 = vpop.permute.xlu0 %1704
        %1706 = vrot.lane.b32.xlu0 %v399, 40
        %v1707 = vpop.permute.xlu0 %1706
        %1708 = vrot.lane.b32.xlu0 %v405, 40
        %v1709 = vpop.permute.xlu0 %1708
        %v1710 = vsel %vm415, %v1703, 0
        %v1712 = vsel %vm415, %v1705, 0
        %v1714 = vsel %vm415, %v1707, 0
        %v1716 = vsel %vm415, %v1709, 0
        %1718 = vmatprep.subr.mxu0 0.0
        %1719 = vmatpush1.xpose.msra.mxu0 %v1714
        %1720 = vmatprep.subr.mxu0 0.0
        %1721 = vmatpush1.xpose.msra.mxu0 %v1716
        %1722 = vmatprep.subr.mxu0 0.0
        %1723 = vmatpush1.xpose.msra.mxu0 0.0
        %1724 = vmatprep.subr.mxu0 0.0
        %1725 = vmatpush1.xpose.msra.mxu0 0.0
        %1726 = vmatprep.subr.mxu0 0.0
        %1727 = vmatpush1.xpose.msra.mxu0 0.0
        %1728 = vmatprep.subr.mxu0 0.0
        %1729 = vmatpush1.xpose.msra.mxu0 0.0
        %1730 = vmatprep.subr.mxu0 0.0
        %1731 = vmatpush1.xpose.msra.mxu0 0.0
        %1732 = vmatprep.subr.mxu0 0.0
        %1733 = vmatpush1.xpose.msra.mxu0 0.0
        %1734 = vmatprep.subr.mxu0 0.0
        %1735 = vmatpush1.xpose.msra.mxu0 0.0
        %1736 = vmatprep.subr.mxu0 0.0
        %1737 = vmatpush1.xpose.msra.mxu0 0.0
        %1738 = vmatprep.subr.mxu0 0.0
        %1739 = vmatpush1.xpose.msra.mxu0 0.0
        %1740 = vmatprep.subr.mxu0 0.0
        %1741 = vmatpush1.xpose.msra.mxu0 0.0
        %1742 = vmatprep.subr.mxu0 0.0
        %1743 = vmatpush1.xpose.msra.mxu0 0.0
        %1744 = vmatprep.subr.mxu0 0.0
        %1745 = vmatpush1.xpose.msra.mxu0 0.0
        %1746 = vmatprep.subr.mxu0 0.0
        %1747 = vmatpush1.xpose.msra.mxu0 0.0
        %1748 = vmatprep.subr.mxu0 0.0
        %1749 = vmatpush1.xpose.msra.mxu0 0.0
        %1750 = vmatprep.subr.mxu0 0.0
        %1751 = vmatpush1.xpose.msra.mxu0 0.0
        %1752 = vmatprep.subr.mxu0 0.0
        %1753 = vmatpush1.xpose.msra.mxu0 0.0
        %1754 = vmatprep.subr.mxu0 0.0
        %1755 = vmatpush1.xpose.msra.mxu0 0.0
        %1756 = vmatprep.subr.mxu0 0.0
        %1757 = vmatpush1.xpose.msra.mxu0 0.0
        %1758 = vmatprep.subr.mxu0 0.0
        %1759 = vmatpush1.xpose.msra.mxu0 0.0
        %1760 = vmatprep.subr.mxu0 0.0
        %1761 = vmatpush1.xpose.msra.mxu0 0.0
        %1762 = vmatprep.subr.mxu0 0.0
        %1763 = vmatpush1.xpose.msra.mxu0 0.0
        %1764 = vmatprep.subr.mxu0 0.0
        %1765 = vmatpush1.xpose.msra.mxu0 0.0
        %1766 = vmatprep.subr.mxu0 0.0
        %1767 = vmatpush1.xpose.msra.mxu0 0.0
        %1768 = vmatprep.subr.mxu0 0.0
        %1769 = vmatpush1.xpose.msra.mxu0 0.0
        %1770 = vmatprep.subr.mxu0 0.0
        %1771 = vmatpush1.xpose.msra.mxu0 0.0
        %1772 = vmatprep.subr.mxu0 0.0
        %1773 = vmatpush1.xpose.msra.mxu0 0.0
        %1774 = vmatprep.subr.mxu0 0.0
        %1775 = vmatpush1.xpose.msra.mxu0 0.0
        %1776 = vmatprep.subr.mxu0 0.0
        %1777 = vmatpush1.xpose.msra.mxu0 0.0
        %1778 = vmatprep.subr.mxu0 0.0
        %1779 = vmatpush1.xpose.msra.mxu0 0.0
        %1780 = vmatprep.subr.mxu0 0.0
        %1781 = vmatpush1.xpose.msra.mxu0 0.0
        %1782 = vmatprep.mubr.f32.mxu0 0.0
        %1783 = vmatmul.mubr.f32.gmra.mrb[0].mxu0 %v1710
        %v1784 = vpop.f32.mrb[0].mxu0
        %v1785 = vadd.f32 0.0, %v1784
        %v1786 = vpop.f32.mrb[0].mxu0
        %1787 = vmatprep.mubr.f32.mxu0 0.0
        %1788 = vmatmul.mubr.f32.gmra.mrb[0].mxu0 %v1712
        %v1789 = vpop.f32.mrb[0].mxu0
        %v1790 = vadd.f32 0.0, %v1789
        %v1791 = vpop.f32.mrb[0].mxu0
        %1792 = vdwg.mxu0
        %v1793 = vmul.f32 %v1694, 0.125
        %v1794 = vmul.f32 %v1699, 0.125
        %v1795 = vmul.f32 %v1785, 0.125
        %v1796 = vmul.f32 %v1790, 0.125
        %v1797 = vsel %vm592, %v1793, -inf
        %1798 = vmax.xlane.f32.xlu0 %v1797
        %v1799 = vpop.xlane.xlu0 %1798
        %v1800 = vsel %vm592, %v1794, -inf
        %1801 = vmax.xlane.f32.xlu0 %v1800
        %v1802 = vpop.xlane.xlu0 %1801
        %v1803 = vsel %vm592, %v1795, -inf
        %1804 = vmax.xlane.f32.xlu0 %v1803
        %v1805 = vpop.xlane.xlu0 %1804
        %v1806 = vsel %vm592, %v1796, -inf
        %1807 = vmax.xlane.f32.xlu0 %v1806
        %v1808 = vpop.xlane.xlu0 %1807
        %v1809 = vsub.f32 %v1793, %v1799
        %v1810 = vsub.f32 %v1794, %v1802
        %v1811 = vsub.f32 %v1795, %v1805
        %v1812 = vsub.f32 %v1796, %v1808
        %v1813 = vmul.f32 %v1809, 1.442695
        %v1814 = vpow.pop %v1813
        %v1815 = vmul.f32 %v1810, 1.442695
        %v1816 = vpow.pop %v1815
        %v1817 = vmul.f32 %v1811, 1.442695
        %v1818 = vpow.pop %v1817
        %v1819 = vmul.f32 %v1812, 1.442695
        %v1820 = vpow.pop %v1819
        %v1821 = vsel %vm592, %v1814, 0.0
        %1822 = vadd.xlane.f32.xlu0 %v1821
        %v1823 = vpop.xlane.xlu0 %1822
        %v1824 = vsel %vm592, %v1816, 0.0
        %1825 = vadd.xlane.f32.xlu0 %v1824
        %v1826 = vpop.xlane.xlu0 %1825
        %v1827 = vsel %vm592, %v1818, 0.0
        %1828 = vadd.xlane.f32.xlu0 %v1827
        %v1829 = vpop.xlane.xlu0 %1828
        %v1830 = vsel %vm592, %v1820, 0.0
        %1831 = vadd.xlane.f32.xlu0 %v1830
        %v1832 = vpop.xlane.xlu0 %1831
        %v1833 = vrcp.pop %v1823
        %v1834 = vmul.f32 %v1814, %v1833
        %v1835 = vrcp.pop %v1826
        %v1836 = vmul.f32 %v1816, %v1835
        %v1837 = vrcp.pop %v1829
        %v1838 = vmul.f32 %v1818, %v1837
        %v1839 = vrcp.pop %v1832
        %v1840 = vmul.f32 %v1820, %v1839
        %1841 = vrot.lane.b32.xlu0 %v389, 104
        %v1842 = vpop.permute.xlu0 %1841
        %1843 = vrot.lane.b32.xlu0 %v395, 104
        %v1844 = vpop.permute.xlu0 %1843
        %v1848 = vsel %vm592, %v1834, 0
        %v1851 = vsel %vm592, %v1836, 0
        %1853 = vmatprep.subr.mxu0 0.0
        %1854 = vmatpush1.msra.mxu0 %v1842
        %1855 = vmatprep.subr.mxu0 0.0
        %1856 = vmatpush1.msra.mxu0 %v1844
        %1857 = vmatprep.subr.mxu0 0.0
        %1858 = vmatpush1.msra.mxu0 0.0
        %1859 = vmatprep.subr.mxu0 0.0
        %1860 = vmatpush1.msra.mxu0 0.0
        %1861 = vmatprep.subr.mxu0 0.0
        %1862 = vmatpush1.msra.mxu0 0.0
        %1863 = vmatprep.subr.mxu0 0.0
        %1864 = vmatpush1.msra.mxu0 0.0
        %1865 = vmatprep.subr.mxu0 0.0
        %1866 = vmatpush1.msra.mxu0 0.0
        %1867 = vmatprep.subr.mxu0 0.0
        %1868 = vmatpush1.msra.mxu0 0.0
        %1869 = vmatprep.subr.mxu0 0.0
        %1870 = vmatpush1.msra.mxu0 0.0
        %1871 = vmatprep.subr.mxu0 0.0
        %1872 = vmatpush1.msra.mxu0 0.0
        %1873 = vmatprep.subr.mxu0 0.0
        %1874 = vmatpush1.msra.mxu0 0.0
        %1875 = vmatprep.subr.mxu0 0.0
        %1876 = vmatpush1.msra.mxu0 0.0
        %1877 = vmatprep.subr.mxu0 0.0
        %1878 = vmatpush1.msra.mxu0 0.0
        %1879 = vmatprep.subr.mxu0 0.0
        %1880 = vmatpush1.msra.mxu0 0.0
        %1881 = vmatprep.subr.mxu0 0.0
        %1882 = vmatpush1.msra.mxu0 0.0
        %1883 = vmatprep.subr.mxu0 0.0
        %1884 = vmatpush1.msra.mxu0 0.0
        %1885 = vmatprep.subr.mxu0 0.0
        %1886 = vmatpush1.msra.mxu0 0.0
        %1887 = vmatprep.subr.mxu0 0.0
        %1888 = vmatpush1.msra.mxu0 0.0
        %1889 = vmatprep.subr.mxu0 0.0
        %1890 = vmatpush1.msra.mxu0 0.0
        %1891 = vmatprep.subr.mxu0 0.0
        %1892 = vmatpush1.msra.mxu0 0.0
        %1893 = vmatprep.subr.mxu0 0.0
        %1894 = vmatpush1.msra.mxu0 0.0
        %1895 = vmatprep.subr.mxu0 0.0
        %1896 = vmatpush1.msra.mxu0 0.0
        %1897 = vmatprep.subr.mxu0 0.0
        %1898 = vmatpush1.msra.mxu0 0.0
        %1899 = vmatprep.subr.mxu0 0.0
        %1900 = vmatpush1.msra.mxu0 0.0
        %1901 = vmatprep.subr.mxu0 0.0
        %1902 = vmatpush1.msra.mxu0 0.0
        %1903 = vmatprep.subr.mxu0 0.0
        %1904 = vmatpush1.msra.mxu0 0.0
        %1905 = vmatprep.subr.mxu0 0.0
        %1906 = vmatpush1.msra.mxu0 0.0
        %1907 = vmatprep.subr.mxu0 0.0
        %1908 = vmatpush1.msra.mxu0 0.0
        %1909 = vmatprep.subr.mxu0 0.0
        %1910 = vmatpush1.msra.mxu0 0.0
        %1911 = vmatprep.subr.mxu0 0.0
        %1912 = vmatpush1.msra.mxu0 0.0
        %1913 = vmatprep.subr.mxu0 0.0
        %1914 = vmatpush1.msra.mxu0 0.0
        %1915 = vmatprep.subr.mxu0 0.0
        %1916 = vmatpush1.msra.mxu0 0.0
        %1917 = vmatprep.mubr.f32.mxu0 0.0
        %1918 = vmatmul.mubr.f32.gmra.mrb[0].mxu0 %v1848
        %v1919 = vpop.f32.mrb[0].mxu0
        %v1920 = vadd.f32 0.0, %v1919
        %v1921 = vpop.f32.mrb[0].mxu0
        %1922 = vmatprep.mubr.f32.mxu0 0.0
        %1923 = vmatmul.mubr.f32.gmra.mrb[0].mxu0 %v1851
        %v1924 = vpop.f32.mrb[0].mxu0
        %v1925 = vadd.f32 0.0, %v1924
        %v1926 = vpop.f32.mrb[0].mxu0
        %1927 = vdwg.mxu0
        %1928 = vrot.lane.b32.xlu0 %v401, 104
        %v1929 = vpop.permute.xlu0 %1928
        %1930 = vrot.lane.b32.xlu0 %v407, 104
        %v1931 = vpop.permute.xlu0 %1930
        %v1935 = vsel %vm592, %v1838, 0
        %v1938 = vsel %vm592, %v1840, 0
        %1940 = vmatprep.subr.mxu0 0.0
        %1941 = vmatpush1.msra.mxu0 %v1929
        %1942 = vmatprep.subr.mxu0 0.0
        %1943 = vmatpush1.msra.mxu0 %v1931
        %1944 = vmatprep.subr.mxu0 0.0
        %1945 = vmatpush1.msra.mxu0 0.0
        %1946 = vmatprep.subr.mxu0 0.0
        %1947 = vmatpush1.msra.mxu0 0.0
        %1948 = vmatprep.subr.mxu0 0.0
        %1949 = vmatpush1.msra.mxu0 0.0
        %1950 = vmatprep.subr.mxu0 0.0
        %1951 = vmatpush1.msra.mxu0 0.0
        %1952 = vmatprep.subr.mxu0 0.0
        %1953 = vmatpush1.msra.mxu0 0.0
        %1954 = vmatprep.subr.mxu0 0.0
        %1955 = vmatpush1.msra.mxu0 0.0
        %1956 = vmatprep.subr.mxu0 0.0
        %1957 = vmatpush1.msra.mxu0 0.0
        %1958 = vmatprep.subr.mxu0 0.0
        %1959 = vmatpush1.msra.mxu0 0.0
        %1960 = vmatprep.subr.mxu0 0.0
        %1961 = vmatpush1.msra.mxu0 0.0
        %1962 = vmatprep.subr.mxu0 0.0
        %1963 = vmatpush1.msra.mxu0 0.0
        %1964 = vmatprep.subr.mxu0 0.0
        %1965 = vmatpush1.msra.mxu0 0.0
        %1966 = vmatprep.subr.mxu0 0.0
        %1967 = vmatpush1.msra.mxu0 0.0
        %1968 = vmatprep.subr.mxu0 0.0
        %1969 = vmatpush1.msra.mxu0 0.0
        %1970 = vmatprep.subr.mxu0 0.0
        %1971 = vmatpush1.msra.mxu0 0.0
        %1972 = vmatprep.subr.mxu0 0.0
        %1973 = vmatpush1.msra.mxu0 0.0
        %1974 = vmatprep.subr.mxu0 0.0
        %1975 = vmatpush1.msra.mxu0 0.0
        %1976 = vmatprep.subr.mxu0 0.0
        %1977 = vmatpush1.msra.mxu0 0.0
        %1978 = vmatprep.subr.mxu0 0.0
        %1979 = vmatpush1.msra.mxu0 0.0
        %1980 = vmatprep.subr.mxu0 0.0
        %1981 = vmatpush1.msra.mxu0 0.0
        %1982 = vmatprep.subr.mxu0 0.0
        %1983 = vmatpush1.msra.mxu0 0.0
        %1984 = vmatprep.subr.mxu0 0.0
        %1985 = vmatpush1.msra.mxu0 0.0
        %1986 = vmatprep.subr.mxu0 0.0
        %1987 = vmatpush1.msra.mxu0 0.0
        %1988 = vmatprep.subr.mxu0 0.0
        %1989 = vmatpush1.msra.mxu0 0.0
        %1990 = vmatprep.subr.mxu0 0.0
        %1991 = vmatpush1.msra.mxu0 0.0
        %1992 = vmatprep.subr.mxu0 0.0
        %1993 = vmatpush1.msra.mxu0 0.0
        %1994 = vmatprep.subr.mxu0 0.0
        %1995 = vmatpush1.msra.mxu0 0.0
        %1996 = vmatprep.subr.mxu0 0.0
        %1997 = vmatpush1.msra.mxu0 0.0
        %1998 = vmatprep.subr.mxu0 0.0
        %1999 = vmatpush1.msra.mxu0 0.0
        %2000 = vmatprep.subr.mxu0 0.0
        %2001 = vmatpush1.msra.mxu0 0.0
        %2002 = vmatprep.subr.mxu0 0.0
        %2003 = vmatpush1.msra.mxu0 0.0
        %2004 = vmatprep.mubr.f32.mxu0 0.0
        %2005 = vmatmul.mubr.f32.gmra.mrb[0].mxu0 %v1935
        %v2006 = vpop.f32.mrb[0].mxu0
        %v2007 = vadd.f32 0.0, %v2006
        %v2008 = vpop.f32.mrb[0].mxu0
        %2009 = vmatprep.mubr.f32.mxu0 0.0
        %2010 = vmatmul.mubr.f32.gmra.mrb[0].mxu0 %v1938
        %v2011 = vpop.f32.mrb[0].mxu0
        %v2012 = vadd.f32 0.0, %v2011
        %v2013 = vpop.f32.mrb[0].mxu0
        %2014 = vdwg.mxu0
        %2015 = vrot.lane.b32.xlu0 %v387, 96
        %v2016 = vpop.permute.xlu0 %2015
        %2017 = vrot.lane.b32.xlu0 %v393, 96
        %v2018 = vpop.permute.xlu0 %2017
        %2019 = vrot.lane.b32.xlu0 %v387, 32
        %v2020 = vpop.permute.xlu0 %2019
        %2021 = vrot.lane.b32.xlu0 %v393, 32
        %v2022 = vpop.permute.xlu0 %2021
        %v2023 = vsel %vm415, %v2016, 0
        %v2025 = vsel %vm415, %v2018, 0
        %v2027 = vsel %vm415, %v2020, 0
        %v2029 = vsel %vm415, %v2022, 0
        %2031 = vmatprep.subr.mxu0 0.0
        %2032 = vmatpush1.xpose.msra.mxu0 %v2027
        %2033 = vmatprep.subr.mxu0 0.0
        %2034 = vmatpush1.xpose.msra.mxu0 %v2029
        %2035 = vmatprep.subr.mxu0 0.0
        %2036 = vmatpush1.xpose.msra.mxu0 0.0
        %2037 = vmatprep.subr.mxu0 0.0
        %2038 = vmatpush1.xpose.msra.mxu0 0.0
        %2039 = vmatprep.subr.mxu0 0.0
        %2040 = vmatpush1.xpose.msra.mxu0 0.0
        %2041 = vmatprep.subr.mxu0 0.0
        %2042 = vmatpush1.xpose.msra.mxu0 0.0
        %2043 = vmatprep.subr.mxu0 0.0
        %2044 = vmatpush1.xpose.msra.mxu0 0.0
        %2045 = vmatprep.subr.mxu0 0.0
        %2046 = vmatpush1.xpose.msra.mxu0 0.0
        %2047 = vmatprep.subr.mxu0 0.0
        %2048 = vmatpush1.xpose.msra.mxu0 0.0
        %2049 = vmatprep.subr.mxu0 0.0
        %2050 = vmatpush1.xpose.msra.mxu0 0.0
        %2051 = vmatprep.subr.mxu0 0.0
        %2052 = vmatpush1.xpose.msra.mxu0 0.0
        %2053 = vmatprep.subr.mxu0 0.0
        %2054 = vmatpush1.xpose.msra.mxu0 0.0
        %2055 = vmatprep.subr.mxu0 0.0
        %2056 = vmatpush1.xpose.msra.mxu0 0.0
        %2057 = vmatprep.subr.mxu0 0.0
        %2058 = vmatpush1.xpose.msra.mxu0 0.0
        %2059 = vmatprep.subr.mxu0 0.0
        %2060 = vmatpush1.xpose.msra.mxu0 0.0
        %2061 = vmatprep.subr.mxu0 0.0
        %2062 = vmatpush1.xpose.msra.mxu0 0.0
        %2063 = vmatprep.subr.mxu0 0.0
        %2064 = vmatpush1.xpose.msra.mxu0 0.0
        %2065 = vmatprep.subr.mxu0 0.0
        %2066 = vmatpush1.xpose.msra.mxu0 0.0
        %2067 = vmatprep.subr.mxu0 0.0
        %2068 = vmatpush1.xpose.msra.mxu0 0.0
        %2069 = vmatprep.subr.mxu0 0.0
        %2070 = vmatpush1.xpose.msra.mxu0 0.0
        %2071 = vmatprep.subr.mxu0 0.0
        %2072 = vmatpush1.xpose.msra.mxu0 0.0
        %2073 = vmatprep.subr.mxu0 0.0
        %2074 = vmatpush1.xpose.msra.mxu0 0.0
        %2075 = vmatprep.subr.mxu0 0.0
        %2076 = vmatpush1.xpose.msra.mxu0 0.0
        %2077 = vmatprep.subr.mxu0 0.0
        %2078 = vmatpush1.xpose.msra.mxu0 0.0
        %2079 = vmatprep.subr.mxu0 0.0
        %2080 = vmatpush1.xpose.msra.mxu0 0.0
        %2081 = vmatprep.subr.mxu0 0.0
        %2082 = vmatpush1.xpose.msra.mxu0 0.0
        %2083 = vmatprep.subr.mxu0 0.0
        %2084 = vmatpush1.xpose.msra.mxu0 0.0
        %2085 = vmatprep.subr.mxu0 0.0
        %2086 = vmatpush1.xpose.msra.mxu0 0.0
        %2087 = vmatprep.subr.mxu0 0.0
        %2088 = vmatpush1.xpose.msra.mxu0 0.0
        %2089 = vmatprep.subr.mxu0 0.0
        %2090 = vmatpush1.xpose.msra.mxu0 0.0
        %2091 = vmatprep.subr.mxu0 0.0
        %2092 = vmatpush1.xpose.msra.mxu0 0.0
        %2093 = vmatprep.subr.mxu0 0.0
        %2094 = vmatpush1.xpose.msra.mxu0 0.0
        %2095 = vmatprep.mubr.f32.mxu0 0.0
        %2096 = vmatmul.mubr.f32.gmra.mrb[0].mxu0 %v2023
        %v2097 = vpop.f32.mrb[0].mxu0
        %v2098 = vadd.f32 0.0, %v2097
        %v2099 = vpop.f32.mrb[0].mxu0
        %2100 = vmatprep.mubr.f32.mxu0 0.0
        %2101 = vmatmul.mubr.f32.gmra.mrb[0].mxu0 %v2025
        %v2102 = vpop.f32.mrb[0].mxu0
        %v2103 = vadd.f32 0.0, %v2102
        %v2104 = vpop.f32.mrb[0].mxu0
        %2105 = vdwg.mxu0
        %2106 = vrot.lane.b32.xlu0 %v399, 96
        %v2107 = vpop.permute.xlu0 %2106
        %2108 = vrot.lane.b32.xlu0 %v405, 96
        %v2109 = vpop.permute.xlu0 %2108
        %2110 = vrot.lane.b32.xlu0 %v399, 32
        %v2111 = vpop.permute.xlu0 %2110
        %2112 = vrot.lane.b32.xlu0 %v405, 32
        %v2113 = vpop.permute.xlu0 %2112
        %v2114 = vsel %vm415, %v2107, 0
        %v2116 = vsel %vm415, %v2109, 0
        %v2118 = vsel %vm415, %v2111, 0
        %v2120 = vsel %vm415, %v2113, 0
        %2122 = vmatprep.subr.mxu0 0.0
        %2123 = vmatpush1.xpose.msra.mxu0 %v2118
        %2124 = vmatprep.subr.mxu0 0.0
        %2125 = vmatpush1.xpose.msra.mxu0 %v2120
        %2126 = vmatprep.subr.mxu0 0.0
        %2127 = vmatpush1.xpose.msra.mxu0 0.0
        %2128 = vmatprep.subr.mxu0 0.0
        %2129 = vmatpush1.xpose.msra.mxu0 0.0
        %2130 = vmatprep.subr.mxu0 0.0
        %2131 = vmatpush1.xpose.msra.mxu0 0.0
        %2132 = vmatprep.subr.mxu0 0.0
        %2133 = vmatpush1.xpose.msra.mxu0 0.0
        %2134 = vmatprep.subr.mxu0 0.0
        %2135 = vmatpush1.xpose.msra.mxu0 0.0
        %2136 = vmatprep.subr.mxu0 0.0
        %2137 = vmatpush1.xpose.msra.mxu0 0.0
        %2138 = vmatprep.subr.mxu0 0.0
        %2139 = vmatpush1.xpose.msra.mxu0 0.0
        %2140 = vmatprep.subr.mxu0 0.0
        %2141 = vmatpush1.xpose.msra.mxu0 0.0
        %2142 = vmatprep.subr.mxu0 0.0
        %2143 = vmatpush1.xpose.msra.mxu0 0.0
        %2144 = vmatprep.subr.mxu0 0.0
        %2145 = vmatpush1.xpose.msra.mxu0 0.0
        %2146 = vmatprep.subr.mxu0 0.0
        %2147 = vmatpush1.xpose.msra.mxu0 0.0
        %2148 = vmatprep.subr.mxu0 0.0
        %2149 = vmatpush1.xpose.msra.mxu0 0.0
        %2150 = vmatprep.subr.mxu0 0.0
        %2151 = vmatpush1.xpose.msra.mxu0 0.0
        %2152 = vmatprep.subr.mxu0 0.0
        %2153 = vmatpush1.xpose.msra.mxu0 0.0
        %2154 = vmatprep.subr.mxu0 0.0
        %2155 = vmatpush1.xpose.msra.mxu0 0.0
        %2156 = vmatprep.subr.mxu0 0.0
        %2157 = vmatpush1.xpose.msra.mxu0 0.0
        %2158 = vmatprep.subr.mxu0 0.0
        %2159 = vmatpush1.xpose.msra.mxu0 0.0
        %2160 = vmatprep.subr.mxu0 0.0
        %2161 = vmatpush1.xpose.msra.mxu0 0.0
        %2162 = vmatprep.subr.mxu0 0.0
        %2163 = vmatpush1.xpose.msra.mxu0 0.0
        %2164 = vmatprep.subr.mxu0 0.0
        %2165 = vmatpush1.xpose.msra.mxu0 0.0
        %2166 = vmatprep.subr.mxu0 0.0
        %2167 = vmatpush1.xpose.msra.mxu0 0.0
        %2168 = vmatprep.subr.mxu0 0.0
        %2169 = vmatpush1.xpose.msra.mxu0 0.0
        %2170 = vmatprep.subr.mxu0 0.0
        %2171 = vmatpush1.xpose.msra.mxu0 0.0
        %2172 = vmatprep.subr.mxu0 0.0
        %2173 = vmatpush1.xpose.msra.mxu0 0.0
        %2174 = vmatprep.subr.mxu0 0.0
        %2175 = vmatpush1.xpose.msra.mxu0 0.0
        %2176 = vmatprep.subr.mxu0 0.0
        %2177 = vmatpush1.xpose.msra.mxu0 0.0
        %2178 = vmatprep.subr.mxu0 0.0
        %2179 = vmatpush1.xpose.msra.mxu0 0.0
        %2180 = vmatprep.subr.mxu0 0.0
        %2181 = vmatpush1.xpose.msra.mxu0 0.0
        %2182 = vmatprep.subr.mxu0 0.0
        %2183 = vmatpush1.xpose.msra.mxu0 0.0
        %2184 = vmatprep.subr.mxu0 0.0
        %2185 = vmatpush1.xpose.msra.mxu0 0.0
        %2186 = vmatprep.mubr.f32.mxu0 0.0
        %2187 = vmatmul.mubr.f32.gmra.mrb[0].mxu0 %v2114
        %v2188 = vpop.f32.mrb[0].mxu0
        %v2189 = vadd.f32 0.0, %v2188
        %v2190 = vpop.f32.mrb[0].mxu0
        %2191 = vmatprep.mubr.f32.mxu0 0.0
        %2192 = vmatmul.mubr.f32.gmra.mrb[0].mxu0 %v2116
        %v2193 = vpop.f32.mrb[0].mxu0
        %v2194 = vadd.f32 0.0, %v2193
        %v2195 = vpop.f32.mrb[0].mxu0
        %2196 = vdwg.mxu0
        %v2197 = vmul.f32 %v2098, 0.125
        %v2198 = vmul.f32 %v2103, 0.125
        %v2199 = vmul.f32 %v2189, 0.125
        %v2200 = vmul.f32 %v2194, 0.125
        %v2201 = vsel %vm592, %v2197, -inf
        %2202 = vmax.xlane.f32.xlu0 %v2201
        %v2203 = vpop.xlane.xlu0 %2202
        %v2204 = vsel %vm592, %v2198, -inf
        %2205 = vmax.xlane.f32.xlu0 %v2204
        %v2206 = vpop.xlane.xlu0 %2205
        %v2207 = vsel %vm592, %v2199, -inf
        %2208 = vmax.xlane.f32.xlu0 %v2207
        %v2209 = vpop.xlane.xlu0 %2208
        %v2210 = vsel %vm592, %v2200, -inf
        %2211 = vmax.xlane.f32.xlu0 %v2210
        %v2212 = vpop.xlane.xlu0 %2211
        %v2213 = vsub.f32 %v2197, %v2203
        %v2214 = vsub.f32 %v2198, %v2206
        %v2215 = vsub.f32 %v2199, %v2209
        %v2216 = vsub.f32 %v2200, %v2212
        %v2217 = vmul.f32 %v2213, 1.442695
        %v2218 = vpow.pop %v2217
        %v2219 = vmul.f32 %v2214, 1.442695
        %v2220 = vpow.pop %v2219
        %v2221 = vmul.f32 %v2215, 1.442695
        %v2222 = vpow.pop %v2221
        %v2223 = vmul.f32 %v2216, 1.442695
        %v2224 = vpow.pop %v2223
        %v2225 = vsel %vm592, %v2218, 0.0
        %2226 = vadd.xlane.f32.xlu0 %v2225
        %v2227 = vpop.xlane.xlu0 %2226
        %v2228 = vsel %vm592, %v2220, 0.0
        %2229 = vadd.xlane.f32.xlu0 %v2228
        %v2230 = vpop.xlane.xlu0 %2229
        %v2231 = vsel %vm592, %v2222, 0.0
        %2232 = vadd.xlane.f32.xlu0 %v2231
        %v2233 = vpop.xlane.xlu0 %2232
        %v2234 = vsel %vm592, %v2224, 0.0
        %2235 = vadd.xlane.f32.xlu0 %v2234
        %v2236 = vpop.xlane.xlu0 %2235
        %v2237 = vrcp.pop %v2227
        %v2238 = vmul.f32 %v2218, %v2237
        %v2239 = vrcp.pop %v2230
        %v2240 = vmul.f32 %v2220, %v2239
        %v2241 = vrcp.pop %v2233
        %v2242 = vmul.f32 %v2222, %v2241
        %v2243 = vrcp.pop %v2236
        %v2244 = vmul.f32 %v2224, %v2243
        %2245 = vrot.lane.b32.xlu0 %v389, 96
        %v2246 = vpop.permute.xlu0 %2245
        %2247 = vrot.lane.b32.xlu0 %v395, 96
        %v2248 = vpop.permute.xlu0 %2247
        %v2252 = vsel %vm592, %v2238, 0
        %v2255 = vsel %vm592, %v2240, 0
        %2257 = vmatprep.subr.mxu0 0.0
        %2258 = vmatpush1.msra.mxu0 %v2246
        %2259 = vmatprep.subr.mxu0 0.0
        %2260 = vmatpush1.msra.mxu0 %v2248
        %2261 = vmatprep.subr.mxu0 0.0
        %2262 = vmatpush1.msra.mxu0 0.0
        %2263 = vmatprep.subr.mxu0 0.0
        %2264 = vmatpush1.msra.mxu0 0.0
        %2265 = vmatprep.subr.mxu0 0.0
        %2266 = vmatpush1.msra.mxu0 0.0
        %2267 = vmatprep.subr.mxu0 0.0
        %2268 = vmatpush1.msra.mxu0 0.0
        %2269 = vmatprep.subr.mxu0 0.0
        %2270 = vmatpush1.msra.mxu0 0.0
        %2271 = vmatprep.subr.mxu0 0.0
        %2272 = vmatpush1.msra.mxu0 0.0
        %2273 = vmatprep.subr.mxu0 0.0
        %2274 = vmatpush1.msra.mxu0 0.0
        %2275 = vmatprep.subr.mxu0 0.0
        %2276 = vmatpush1.msra.mxu0 0.0
        %2277 = vmatprep.subr.mxu0 0.0
        %2278 = vmatpush1.msra.mxu0 0.0
        %2279 = vmatprep.subr.mxu0 0.0
        %2280 = vmatpush1.msra.mxu0 0.0
        %2281 = vmatprep.subr.mxu0 0.0
        %2282 = vmatpush1.msra.mxu0 0.0
        %2283 = vmatprep.subr.mxu0 0.0
        %2284 = vmatpush1.msra.mxu0 0.0
        %2285 = vmatprep.subr.mxu0 0.0
        %2286 = vmatpush1.msra.mxu0 0.0
        %2287 = vmatprep.subr.mxu0 0.0
        %2288 = vmatpush1.msra.mxu0 0.0
        %2289 = vmatprep.subr.mxu0 0.0
        %2290 = vmatpush1.msra.mxu0 0.0
        %2291 = vmatprep.subr.mxu0 0.0
        %2292 = vmatpush1.msra.mxu0 0.0
        %2293 = vmatprep.subr.mxu0 0.0
        %2294 = vmatpush1.msra.mxu0 0.0
        %2295 = vmatprep.subr.mxu0 0.0
        %2296 = vmatpush1.msra.mxu0 0.0
        %2297 = vmatprep.subr.mxu0 0.0
        %2298 = vmatpush1.msra.mxu0 0.0
        %2299 = vmatprep.subr.mxu0 0.0
        %2300 = vmatpush1.msra.mxu0 0.0
        %2301 = vmatprep.subr.mxu0 0.0
        %2302 = vmatpush1.msra.mxu0 0.0
        %2303 = vmatprep.subr.mxu0 0.0
        %2304 = vmatpush1.msra.mxu0 0.0
        %2305 = vmatprep.subr.mxu0 0.0
        %2306 = vmatpush1.msra.mxu0 0.0
        %2307 = vmatprep.subr.mxu0 0.0
        %2308 = vmatpush1.msra.mxu0 0.0
        %2309 = vmatprep.subr.mxu0 0.0
        %2310 = vmatpush1.msra.mxu0 0.0
        %2311 = vmatprep.subr.mxu0 0.0
        %2312 = vmatpush1.msra.mxu0 0.0
        %2313 = vmatprep.subr.mxu0 0.0
        %2314 = vmatpush1.msra.mxu0 0.0
        %2315 = vmatprep.subr.mxu0 0.0
        %2316 = vmatpush1.msra.mxu0 0.0
        %2317 = vmatprep.subr.mxu0 0.0
        %2318 = vmatpush1.msra.mxu0 0.0
        %2319 = vmatprep.subr.mxu0 0.0
        %2320 = vmatpush1.msra.mxu0 0.0
        %2321 = vmatprep.mubr.f32.mxu0 0.0
        %2322 = vmatmul.mubr.f32.gmra.mrb[0].mxu0 %v2252
        %v2323 = vpop.f32.mrb[0].mxu0
        %v2324 = vadd.f32 0.0, %v2323
        %v2325 = vpop.f32.mrb[0].mxu0
        %2326 = vmatprep.mubr.f32.mxu0 0.0
        %2327 = vmatmul.mubr.f32.gmra.mrb[0].mxu0 %v2255
        %v2328 = vpop.f32.mrb[0].mxu0
        %v2329 = vadd.f32 0.0, %v2328
        %v2330 = vpop.f32.mrb[0].mxu0
        %2331 = vdwg.mxu0
        %2332 = vrot.lane.b32.xlu0 %v401, 96
        %v2333 = vpop.permute.xlu0 %2332
        %2334 = vrot.lane.b32.xlu0 %v407, 96
        %v2335 = vpop.permute.xlu0 %2334
        %v2339 = vsel %vm592, %v2242, 0
        %v2342 = vsel %vm592, %v2244, 0
        %2344 = vmatprep.subr.mxu0 0.0
        %2345 = vmatpush1.msra.mxu0 %v2333
        %2346 = vmatprep.subr.mxu0 0.0
        %2347 = vmatpush1.msra.mxu0 %v2335
        %2348 = vmatprep.subr.mxu0 0.0
        %2349 = vmatpush1.msra.mxu0 0.0
        %2350 = vmatprep.subr.mxu0 0.0
        %2351 = vmatpush1.msra.mxu0 0.0
        %2352 = vmatprep.subr.mxu0 0.0
        %2353 = vmatpush1.msra.mxu0 0.0
        %2354 = vmatprep.subr.mxu0 0.0
        %2355 = vmatpush1.msra.mxu0 0.0
        %2356 = vmatprep.subr.mxu0 0.0
        %2357 = vmatpush1.msra.mxu0 0.0
        %2358 = vmatprep.subr.mxu0 0.0
        %2359 = vmatpush1.msra.mxu0 0.0
        %2360 = vmatprep.subr.mxu0 0.0
        %2361 = vmatpush1.msra.mxu0 0.0
        %2362 = vmatprep.subr.mxu0 0.0
        %2363 = vmatpush1.msra.mxu0 0.0
        %2364 = vmatprep.subr.mxu0 0.0
        %2365 = vmatpush1.msra.mxu0 0.0
        %2366 = vmatprep.subr.mxu0 0.0
        %2367 = vmatpush1.msra.mxu0 0.0
        %2368 = vmatprep.subr.mxu0 0.0
        %2369 = vmatpush1.msra.mxu0 0.0
        %2370 = vmatprep.subr.mxu0 0.0
        %2371 = vmatpush1.msra.mxu0 0.0
        %2372 = vmatprep.subr.mxu0 0.0
        %2373 = vmatpush1.msra.mxu0 0.0
        %2374 = vmatprep.subr.mxu0 0.0
        %2375 = vmatpush1.msra.mxu0 0.0
        %2376 = vmatprep.subr.mxu0 0.0
        %2377 = vmatpush1.msra.mxu0 0.0
        %2378 = vmatprep.subr.mxu0 0.0
        %2379 = vmatpush1.msra.mxu0 0.0
        %2380 = vmatprep.subr.mxu0 0.0
        %2381 = vmatpush1.msra.mxu0 0.0
        %2382 = vmatprep.subr.mxu0 0.0
        %2383 = vmatpush1.msra.mxu0 0.0
        %2384 = vmatprep.subr.mxu0 0.0
        %2385 = vmatpush1.msra.mxu0 0.0
        %2386 = vmatprep.subr.mxu0 0.0
        %2387 = vmatpush1.msra.mxu0 0.0
        %2388 = vmatprep.subr.mxu0 0.0
        %2389 = vmatpush1.msra.mxu0 0.0
        %2390 = vmatprep.subr.mxu0 0.0
        %2391 = vmatpush1.msra.mxu0 0.0
        %2392 = vmatprep.subr.mxu0 0.0
        %2393 = vmatpush1.msra.mxu0 0.0
        %2394 = vmatprep.subr.mxu0 0.0
        %2395 = vmatpush1.msra.mxu0 0.0
        %2396 = vmatprep.subr.mxu0 0.0
        %2397 = vmatpush1.msra.mxu0 0.0
        %2398 = vmatprep.subr.mxu0 0.0
        %2399 = vmatpush1.msra.mxu0 0.0
        %2400 = vmatprep.subr.mxu0 0.0
        %2401 = vmatpush1.msra.mxu0 0.0
        %2402 = vmatprep.subr.mxu0 0.0
        %2403 = vmatpush1.msra.mxu0 0.0
        %2404 = vmatprep.subr.mxu0 0.0
        %2405 = vmatpush1.msra.mxu0 0.0
        %2406 = vmatprep.subr.mxu0 0.0
        %2407 = vmatpush1.msra.mxu0 0.0
        %2408 = vmatprep.mubr.f32.mxu0 0.0
        %2409 = vmatmul.mubr.f32.gmra.mrb[0].mxu0 %v2339
        %v2410 = vpop.f32.mrb[0].mxu0
        %v2411 = vadd.f32 0.0, %v2410
        %v2412 = vpop.f32.mrb[0].mxu0
        %2413 = vmatprep.mubr.f32.mxu0 0.0
        %2414 = vmatmul.mubr.f32.gmra.mrb[0].mxu0 %v2342
        %v2415 = vpop.f32.mrb[0].mxu0
        %v2416 = vadd.f32 0.0, %v2415
        %v2417 = vpop.f32.mrb[0].mxu0
        %2418 = vdwg.mxu0
        %2419 = vrot.lane.b32.xlu0 %v387, 88
        %v2420 = vpop.permute.xlu0 %2419
        %2421 = vrot.lane.b32.xlu0 %v393, 88
        %v2422 = vpop.permute.xlu0 %2421
        %2423 = vrot.lane.b32.xlu0 %v387, 24
        %v2424 = vpop.permute.xlu0 %2423
        %2425 = vrot.lane.b32.xlu0 %v393, 24
        %v2426 = vpop.permute.xlu0 %2425
        %v2427 = vsel %vm415, %v2420, 0
        %v2429 = vsel %vm415, %v2422, 0
        %v2431 = vsel %vm415, %v2424, 0
        %v2433 = vsel %vm415, %v2426, 0
        %2435 = vmatprep.subr.mxu0 0.0
        %2436 = vmatpush1.xpose.msra.mxu0 %v2431
        %2437 = vmatprep.subr.mxu0 0.0
        %2438 = vmatpush1.xpose.msra.mxu0 %v2433
        %2439 = vmatprep.subr.mxu0 0.0
        %2440 = vmatpush1.xpose.msra.mxu0 0.0
        %2441 = vmatprep.subr.mxu0 0.0
        %2442 = vmatpush1.xpose.msra.mxu0 0.0
        %2443 = vmatprep.subr.mxu0 0.0
        %2444 = vmatpush1.xpose.msra.mxu0 0.0
        %2445 = vmatprep.subr.mxu0 0.0
        %2446 = vmatpush1.xpose.msra.mxu0 0.0
        %2447 = vmatprep.subr.mxu0 0.0
        %2448 = vmatpush1.xpose.msra.mxu0 0.0
        %2449 = vmatprep.subr.mxu0 0.0
        %2450 = vmatpush1.xpose.msra.mxu0 0.0
        %2451 = vmatprep.subr.mxu0 0.0
        %2452 = vmatpush1.xpose.msra.mxu0 0.0
        %2453 = vmatprep.subr.mxu0 0.0
        %2454 = vmatpush1.xpose.msra.mxu0 0.0
        %2455 = vmatprep.subr.mxu0 0.0
        %2456 = vmatpush1.xpose.msra.mxu0 0.0
        %2457 = vmatprep.subr.mxu0 0.0
        %2458 = vmatpush1.xpose.msra.mxu0 0.0
        %2459 = vmatprep.subr.mxu0 0.0
        %2460 = vmatpush1.xpose.msra.mxu0 0.0
        %2461 = vmatprep.subr.mxu0 0.0
        %2462 = vmatpush1.xpose.msra.mxu0 0.0
        %2463 = vmatprep.subr.mxu0 0.0
        %2464 = vmatpush1.xpose.msra.mxu0 0.0
        %2465 = vmatprep.subr.mxu0 0.0
        %2466 = vmatpush1.xpose.msra.mxu0 0.0
        %2467 = vmatprep.subr.mxu0 0.0
        %2468 = vmatpush1.xpose.msra.mxu0 0.0
        %2469 = vmatprep.subr.mxu0 0.0
        %2470 = vmatpush1.xpose.msra.mxu0 0.0
        %2471 = vmatprep.subr.mxu0 0.0
        %2472 = vmatpush1.xpose.msra.mxu0 0.0
        %2473 = vmatprep.subr.mxu0 0.0
        %2474 = vmatpush1.xpose.msra.mxu0 0.0
        %2475 = vmatprep.subr.mxu0 0.0
        %2476 = vmatpush1.xpose.msra.mxu0 0.0
        %2477 = vmatprep.subr.mxu0 0.0
        %2478 = vmatpush1.xpose.msra.mxu0 0.0
        %2479 = vmatprep.subr.mxu0 0.0
        %2480 = vmatpush1.xpose.msra.mxu0 0.0
        %2481 = vmatprep.subr.mxu0 0.0
        %2482 = vmatpush1.xpose.msra.mxu0 0.0
        %2483 = vmatprep.subr.mxu0 0.0
        %2484 = vmatpush1.xpose.msra.mxu0 0.0
        %2485 = vmatprep.subr.mxu0 0.0
        %2486 = vmatpush1.xpose.msra.mxu0 0.0
        %2487 = vmatprep.subr.mxu0 0.0
        %2488 = vmatpush1.xpose.msra.mxu0 0.0
        %2489 = vmatprep.subr.mxu0 0.0
        %2490 = vmatpush1.xpose.msra.mxu0 0.0
        %2491 = vmatprep.subr.mxu0 0.0
        %2492 = vmatpush1.xpose.msra.mxu0 0.0
        %2493 = vmatprep.subr.mxu0 0.0
        %2494 = vmatpush1.xpose.msra.mxu0 0.0
        %2495 = vmatprep.subr.mxu0 0.0
        %2496 = vmatpush1.xpose.msra.mxu0 0.0
        %2497 = vmatprep.subr.mxu0 0.0
        %2498 = vmatpush1.xpose.msra.mxu0 0.0
        %2499 = vmatprep.mubr.f32.mxu0 0.0
        %2500 = vmatmul.mubr.f32.gmra.mrb[0].mxu0 %v2427
        %v2501 = vpop.f32.mrb[0].mxu0
        %v2502 = vadd.f32 0.0, %v2501
        %v2503 = vpop.f32.mrb[0].mxu0
        %2504 = vmatprep.mubr.f32.mxu0 0.0
        %2505 = vmatmul.mubr.f32.gmra.mrb[0].mxu0 %v2429
        %v2506 = vpop.f32.mrb[0].mxu0
        %v2507 = vadd.f32 0.0, %v2506
        %v2508 = vpop.f32.mrb[0].mxu0
        %2509 = vdwg.mxu0
        %2510 = vrot.lane.b32.xlu0 %v399, 88
        %v2511 = vpop.permute.xlu0 %2510
        %2512 = vrot.lane.b32.xlu0 %v405, 88
        %v2513 = vpop.permute.xlu0 %2512
        %2514 = vrot.lane.b32.xlu0 %v399, 24
        %v2515 = vpop.permute.xlu0 %2514
        %2516 = vrot.lane.b32.xlu0 %v405, 24
        %v2517 = vpop.permute.xlu0 %2516
        %v2518 = vsel %vm415, %v2511, 0
        %v2520 = vsel %vm415, %v2513, 0
        %v2522 = vsel %vm415, %v2515, 0
        %v2524 = vsel %vm415, %v2517, 0
        %2526 = vmatprep.subr.mxu0 0.0
        %2527 = vmatpush1.xpose.msra.mxu0 %v2522
        %2528 = vmatprep.subr.mxu0 0.0
        %2529 = vmatpush1.xpose.msra.mxu0 %v2524
        %2530 = vmatprep.subr.mxu0 0.0
        %2531 = vmatpush1.xpose.msra.mxu0 0.0
        %2532 = vmatprep.subr.mxu0 0.0
        %2533 = vmatpush1.xpose.msra.mxu0 0.0
        %2534 = vmatprep.subr.mxu0 0.0
        %2535 = vmatpush1.xpose.msra.mxu0 0.0
        %2536 = vmatprep.subr.mxu0 0.0
        %2537 = vmatpush1.xpose.msra.mxu0 0.0
        %2538 = vmatprep.subr.mxu0 0.0
        %2539 = vmatpush1.xpose.msra.mxu0 0.0
        %2540 = vmatprep.subr.mxu0 0.0
        %2541 = vmatpush1.xpose.msra.mxu0 0.0
        %2542 = vmatprep.subr.mxu0 0.0
        %2543 = vmatpush1.xpose.msra.mxu0 0.0
        %2544 = vmatprep.subr.mxu0 0.0
        %2545 = vmatpush1.xpose.msra.mxu0 0.0
        %2546 = vmatprep.subr.mxu0 0.0
        %2547 = vmatpush1.xpose.msra.mxu0 0.0
        %2548 = vmatprep.subr.mxu0 0.0
        %2549 = vmatpush1.xpose.msra.mxu0 0.0
        %2550 = vmatprep.subr.mxu0 0.0
        %2551 = vmatpush1.xpose.msra.mxu0 0.0
        %2552 = vmatprep.subr.mxu0 0.0
        %2553 = vmatpush1.xpose.msra.mxu0 0.0
        %2554 = vmatprep.subr.mxu0 0.0
        %2555 = vmatpush1.xpose.msra.mxu0 0.0
        %2556 = vmatprep.subr.mxu0 0.0
        %2557 = vmatpush1.xpose.msra.mxu0 0.0
        %2558 = vmatprep.subr.mxu0 0.0
        %2559 = vmatpush1.xpose.msra.mxu0 0.0
        %2560 = vmatprep.subr.mxu0 0.0
        %2561 = vmatpush1.xpose.msra.mxu0 0.0
        %2562 = vmatprep.subr.mxu0 0.0
        %2563 = vmatpush1.xpose.msra.mxu0 0.0
        %2564 = vmatprep.subr.mxu0 0.0
        %2565 = vmatpush1.xpose.msra.mxu0 0.0
        %2566 = vmatprep.subr.mxu0 0.0
        %2567 = vmatpush1.xpose.msra.mxu0 0.0
        %2568 = vmatprep.subr.mxu0 0.0
        %2569 = vmatpush1.xpose.msra.mxu0 0.0
        %2570 = vmatprep.subr.mxu0 0.0
        %2571 = vmatpush1.xpose.msra.mxu0 0.0
        %2572 = vmatprep.subr.mxu0 0.0
        %2573 = vmatpush1.xpose.msra.mxu0 0.0
        %2574 = vmatprep.subr.mxu0 0.0
        %2575 = vmatpush1.xpose.msra.mxu0 0.0
        %2576 = vmatprep.subr.mxu0 0.0
        %2577 = vmatpush1.xpose.msra.mxu0 0.0
        %2578 = vmatprep.subr.mxu0 0.0
        %2579 = vmatpush1.xpose.msra.mxu0 0.0
        %2580 = vmatprep.subr.mxu0 0.0
        %2581 = vmatpush1.xpose.msra.mxu0 0.0
        %2582 = vmatprep.subr.mxu0 0.0
        %2583 = vmatpush1.xpose.msra.mxu0 0.0
        %2584 = vmatprep.subr.mxu0 0.0
        %2585 = vmatpush1.xpose.msra.mxu0 0.0
        %2586 = vmatprep.subr.mxu0 0.0
        %2587 = vmatpush1.xpose.msra.mxu0 0.0
        %2588 = vmatprep.subr.mxu0 0.0
        %2589 = vmatpush1.xpose.msra.mxu0 0.0
        %2590 = vmatprep.mubr.f32.mxu0 0.0
        %2591 = vmatmul.mubr.f32.gmra.mrb[0].mxu0 %v2518
        %v2592 = vpop.f32.mrb[0].mxu0
        %v2593 = vadd.f32 0.0, %v2592
        %v2594 = vpop.f32.mrb[0].mxu0
        %2595 = vmatprep.mubr.f32.mxu0 0.0
        %2596 = vmatmul.mubr.f32.gmra.mrb[0].mxu0 %v2520
        %v2597 = vpop.f32.mrb[0].mxu0
        %v2598 = vadd.f32 0.0, %v2597
        %v2599 = vpop.f32.mrb[0].mxu0
        %2600 = vdwg.mxu0
        %v2601 = vmul.f32 %v2502, 0.125
        %v2602 = vmul.f32 %v2507, 0.125
        %v2603 = vmul.f32 %v2593, 0.125
        %v2604 = vmul.f32 %v2598, 0.125
        %v2605 = vsel %vm592, %v2601, -inf
        %2606 = vmax.xlane.f32.xlu0 %v2605
        %v2607 = vpop.xlane.xlu0 %2606
        %v2608 = vsel %vm592, %v2602, -inf
        %2609 = vmax.xlane.f32.xlu0 %v2608
        %v2610 = vpop.xlane.xlu0 %2609
        %v2611 = vsel %vm592, %v2603, -inf
        %2612 = vmax.xlane.f32.xlu0 %v2611
        %v2613 = vpop.xlane.xlu0 %2612
        %v2614 = vsel %vm592, %v2604, -inf
        %2615 = vmax.xlane.f32.xlu0 %v2614
        %v2616 = vpop.xlane.xlu0 %2615
        %v2617 = vsub.f32 %v2601, %v2607
        %v2618 = vsub.f32 %v2602, %v2610
        %v2619 = vsub.f32 %v2603, %v2613
        %v2620 = vsub.f32 %v2604, %v2616
        %v2621 = vmul.f32 %v2617, 1.442695
        %v2622 = vpow.pop %v2621
        %v2623 = vmul.f32 %v2618, 1.442695
        %v2624 = vpow.pop %v2623
        %v2625 = vmul.f32 %v2619, 1.442695
        %v2626 = vpow.pop %v2625
        %v2627 = vmul.f32 %v2620, 1.442695
        %v2628 = vpow.pop %v2627
        %v2629 = vsel %vm592, %v2622, 0.0
        %2630 = vadd.xlane.f32.xlu0 %v2629
        %v2631 = vpop.xlane.xlu0 %2630
        %v2632 = vsel %vm592, %v2624, 0.0
        %2633 = vadd.xlane.f32.xlu0 %v2632
        %v2634 = vpop.xlane.xlu0 %2633
        %v2635 = vsel %vm592, %v2626, 0.0
        %2636 = vadd.xlane.f32.xlu0 %v2635
        %v2637 = vpop.xlane.xlu0 %2636
        %v2638 = vsel %vm592, %v2628, 0.0
        %2639 = vadd.xlane.f32.xlu0 %v2638
        %v2640 = vpop.xlane.xlu0 %2639
        %v2641 = vrcp.pop %v2631
        %v2642 = vmul.f32 %v2622, %v2641
        %v2643 = vrcp.pop %v2634
        %v2644 = vmul.f32 %v2624, %v2643
        %v2645 = vrcp.pop %v2637
        %v2646 = vmul.f32 %v2626, %v2645
        %v2647 = vrcp.pop %v2640
        %v2648 = vmul.f32 %v2628, %v2647
        %2649 = vrot.lane.b32.xlu0 %v389, 88
        %v2650 = vpop.permute.xlu0 %2649
        %2651 = vrot.lane.b32.xlu0 %v395, 88
        %v2652 = vpop.permute.xlu0 %2651
        %v2656 = vsel %vm592, %v2642, 0
        %v2659 = vsel %vm592, %v2644, 0
        %2661 = vmatprep.subr.mxu0 0.0
        %2662 = vmatpush1.msra.mxu0 %v2650
        %2663 = vmatprep.subr.mxu0 0.0
        %2664 = vmatpush1.msra.mxu0 %v2652
        %2665 = vmatprep.subr.mxu0 0.0
        %2666 = vmatpush1.msra.mxu0 0.0
        %2667 = vmatprep.subr.mxu0 0.0
        %2668 = vmatpush1.msra.mxu0 0.0
        %2669 = vmatprep.subr.mxu0 0.0
        %2670 = vmatpush1.msra.mxu0 0.0
        %2671 = vmatprep.subr.mxu0 0.0
        %2672 = vmatpush1.msra.mxu0 0.0
        %2673 = vmatprep.subr.mxu0 0.0
        %2674 = vmatpush1.msra.mxu0 0.0
        %2675 = vmatprep.subr.mxu0 0.0
        %2676 = vmatpush1.msra.mxu0 0.0
        %2677 = vmatprep.subr.mxu0 0.0
        %2678 = vmatpush1.msra.mxu0 0.0
        %2679 = vmatprep.subr.mxu0 0.0
        %2680 = vmatpush1.msra.mxu0 0.0
        %2681 = vmatprep.subr.mxu0 0.0
        %2682 = vmatpush1.msra.mxu0 0.0
        %2683 = vmatprep.subr.mxu0 0.0
        %2684 = vmatpush1.msra.mxu0 0.0
        %2685 = vmatprep.subr.mxu0 0.0
        %2686 = vmatpush1.msra.mxu0 0.0
        %2687 = vmatprep.subr.mxu0 0.0
        %2688 = vmatpush1.msra.mxu0 0.0
        %2689 = vmatprep.subr.mxu0 0.0
        %2690 = vmatpush1.msra.mxu0 0.0
        %2691 = vmatprep.subr.mxu0 0.0
        %2692 = vmatpush1.msra.mxu0 0.0
        %2693 = vmatprep.subr.mxu0 0.0
        %2694 = vmatpush1.msra.mxu0 0.0
        %2695 = vmatprep.subr.mxu0 0.0
        %2696 = vmatpush1.msra.mxu0 0.0
        %2697 = vmatprep.subr.mxu0 0.0
        %2698 = vmatpush1.msra.mxu0 0.0
        %2699 = vmatprep.subr.mxu0 0.0
        %2700 = vmatpush1.msra.mxu0 0.0
        %2701 = vmatprep.subr.mxu0 0.0
        %2702 = vmatpush1.msra.mxu0 0.0
        %2703 = vmatprep.subr.mxu0 0.0
        %2704 = vmatpush1.msra.mxu0 0.0
        %2705 = vmatprep.subr.mxu0 0.0
        %2706 = vmatpush1.msra.mxu0 0.0
        %2707 = vmatprep.subr.mxu0 0.0
        %2708 = vmatpush1.msra.mxu0 0.0
        %2709 = vmatprep.subr.mxu0 0.0
        %2710 = vmatpush1.msra.mxu0 0.0
        %2711 = vmatprep.subr.mxu0 0.0
        %2712 = vmatpush1.msra.mxu0 0.0
        %2713 = vmatprep.subr.mxu0 0.0
        %2714 = vmatpush1.msra.mxu0 0.0
        %2715 = vmatprep.subr.mxu0 0.0
        %2716 = vmatpush1.msra.mxu0 0.0
        %2717 = vmatprep.subr.mxu0 0.0
        %2718 = vmatpush1.msra.mxu0 0.0
        %2719 = vmatprep.subr.mxu0 0.0
        %2720 = vmatpush1.msra.mxu0 0.0
        %2721 = vmatprep.subr.mxu0 0.0
        %2722 = vmatpush1.msra.mxu0 0.0
        %2723 = vmatprep.subr.mxu0 0.0
        %2724 = vmatpush1.msra.mxu0 0.0
        %2725 = vmatprep.mubr.f32.mxu0 0.0
        %2726 = vmatmul.mubr.f32.gmra.mrb[0].mxu0 %v2656
        %v2727 = vpop.f32.mrb[0].mxu0
        %v2728 = vadd.f32 0.0, %v2727
        %v2729 = vpop.f32.mrb[0].mxu0
        %2730 = vmatprep.mubr.f32.mxu0 0.0
        %2731 = vmatmul.mubr.f32.gmra.mrb[0].mxu0 %v2659
        %v2732 = vpop.f32.mrb[0].mxu0
        %v2733 = vadd.f32 0.0, %v2732
        %v2734 = vpop.f32.mrb[0].mxu0
        %2735 = vdwg.mxu0
        %2736 = vrot.lane.b32.xlu0 %v401, 88
        %v2737 = vpop.permute.xlu0 %2736
        %2738 = vrot.lane.b32.xlu0 %v407, 88
        %v2739 = vpop.permute.xlu0 %2738
        %v2743 = vsel %vm592, %v2646, 0
        %v2746 = vsel %vm592, %v2648, 0
        %2748 = vmatprep.subr.mxu0 0.0
        %2749 = vmatpush1.msra.mxu0 %v2737
        %2750 = vmatprep.subr.mxu0 0.0
        %2751 = vmatpush1.msra.mxu0 %v2739
        %2752 = vmatprep.subr.mxu0 0.0
        %2753 = vmatpush1.msra.mxu0 0.0
        %2754 = vmatprep.subr.mxu0 0.0
        %2755 = vmatpush1.msra.mxu0 0.0
        %2756 = vmatprep.subr.mxu0 0.0
        %2757 = vmatpush1.msra.mxu0 0.0
        %2758 = vmatprep.subr.mxu0 0.0
        %2759 = vmatpush1.msra.mxu0 0.0
        %2760 = vmatprep.subr.mxu0 0.0
        %2761 = vmatpush1.msra.mxu0 0.0
        %2762 = vmatprep.subr.mxu0 0.0
        %2763 = vmatpush1.msra.mxu0 0.0
        %2764 = vmatprep.subr.mxu0 0.0
        %2765 = vmatpush1.msra.mxu0 0.0
        %2766 = vmatprep.subr.mxu0 0.0
        %2767 = vmatpush1.msra.mxu0 0.0
        %2768 = vmatprep.subr.mxu0 0.0
        %2769 = vmatpush1.msra.mxu0 0.0
        %2770 = vmatprep.subr.mxu0 0.0
        %2771 = vmatpush1.msra.mxu0 0.0
        %2772 = vmatprep.subr.mxu0 0.0
        %2773 = vmatpush1.msra.mxu0 0.0
        %2774 = vmatprep.subr.mxu0 0.0
        %2775 = vmatpush1.msra.mxu0 0.0
        %2776 = vmatprep.subr.mxu0 0.0
        %2777 = vmatpush1.msra.mxu0 0.0
        %2778 = vmatprep.subr.mxu0 0.0
        %2779 = vmatpush1.msra.mxu0 0.0
        %2780 = vmatprep.subr.mxu0 0.0
        %2781 = vmatpush1.msra.mxu0 0.0
        %2782 = vmatprep.subr.mxu0 0.0
        %2783 = vmatpush1.msra.mxu0 0.0
        %2784 = vmatprep.subr.mxu0 0.0
        %2785 = vmatpush1.msra.mxu0 0.0
        %2786 = vmatprep.subr.mxu0 0.0
        %2787 = vmatpush1.msra.mxu0 0.0
        %2788 = vmatprep.subr.mxu0 0.0
        %2789 = vmatpush1.msra.mxu0 0.0
        %2790 = vmatprep.subr.mxu0 0.0
        %2791 = vmatpush1.msra.mxu0 0.0
        %2792 = vmatprep.subr.mxu0 0.0
        %2793 = vmatpush1.msra.mxu0 0.0
        %2794 = vmatprep.subr.mxu0 0.0
        %2795 = vmatpush1.msra.mxu0 0.0
        %2796 = vmatprep.subr.mxu0 0.0
        %2797 = vmatpush1.msra.mxu0 0.0
        %2798 = vmatprep.subr.mxu0 0.0
        %2799 = vmatpush1.msra.mxu0 0.0
        %2800 = vmatprep.subr.mxu0 0.0
        %2801 = vmatpush1.msra.mxu0 0.0
        %2802 = vmatprep.subr.mxu0 0.0
        %2803 = vmatpush1.msra.mxu0 0.0
        %2804 = vmatprep.subr.mxu0 0.0
        %2805 = vmatpush1.msra.mxu0 0.0
        %2806 = vmatprep.subr.mxu0 0.0
        %2807 = vmatpush1.msra.mxu0 0.0
        %2808 = vmatprep.subr.mxu0 0.0
        %2809 = vmatpush1.msra.mxu0 0.0
        %2810 = vmatprep.subr.mxu0 0.0
        %2811 = vmatpush1.msra.mxu0 0.0
        %2812 = vmatprep.mubr.f32.mxu0 0.0
        %2813 = vmatmul.mubr.f32.gmra.mrb[0].mxu0 %v2743
        %v2814 = vpop.f32.mrb[0].mxu0
        %v2815 = vadd.f32 0.0, %v2814
        %v2816 = vpop.f32.mrb[0].mxu0
        %2817 = vmatprep.mubr.f32.mxu0 0.0
        %2818 = vmatmul.mubr.f32.gmra.mrb[0].mxu0 %v2746
        %v2819 = vpop.f32.mrb[0].mxu0
        %v2820 = vadd.f32 0.0, %v2819
        %v2821 = vpop.f32.mrb[0].mxu0
        %2822 = vdwg.mxu0
        %2823 = vrot.lane.b32.xlu0 %v387, 80
        %v2824 = vpop.permute.xlu0 %2823
        %2825 = vrot.lane.b32.xlu0 %v393, 80
        %v2826 = vpop.permute.xlu0 %2825
        %2827 = vrot.lane.b32.xlu0 %v387, 16
        %v2828 = vpop.permute.xlu0 %2827
        %2829 = vrot.lane.b32.xlu0 %v393, 16
        %v2830 = vpop.permute.xlu0 %2829
        %v2831 = vsel %vm415, %v2824, 0
        %v2833 = vsel %vm415, %v2826, 0
        %v2835 = vsel %vm415, %v2828, 0
        %v2837 = vsel %vm415, %v2830, 0
        %2839 = vmatprep.subr.mxu0 0.0
        %2840 = vmatpush1.xpose.msra.mxu0 %v2835
        %2841 = vmatprep.subr.mxu0 0.0
        %2842 = vmatpush1.xpose.msra.mxu0 %v2837
        %2843 = vmatprep.subr.mxu0 0.0
        %2844 = vmatpush1.xpose.msra.mxu0 0.0
        %2845 = vmatprep.subr.mxu0 0.0
        %2846 = vmatpush1.xpose.msra.mxu0 0.0
        %2847 = vmatprep.subr.mxu0 0.0
        %2848 = vmatpush1.xpose.msra.mxu0 0.0
        %2849 = vmatprep.subr.mxu0 0.0
        %2850 = vmatpush1.xpose.msra.mxu0 0.0
        %2851 = vmatprep.subr.mxu0 0.0
        %2852 = vmatpush1.xpose.msra.mxu0 0.0
        %2853 = vmatprep.subr.mxu0 0.0
        %2854 = vmatpush1.xpose.msra.mxu0 0.0
        %2855 = vmatprep.subr.mxu0 0.0
        %2856 = vmatpush1.xpose.msra.mxu0 0.0
        %2857 = vmatprep.subr.mxu0 0.0
        %2858 = vmatpush1.xpose.msra.mxu0 0.0
        %2859 = vmatprep.subr.mxu0 0.0
        %2860 = vmatpush1.xpose.msra.mxu0 0.0
        %2861 = vmatprep.subr.mxu0 0.0
        %2862 = vmatpush1.xpose.msra.mxu0 0.0
        %2863 = vmatprep.subr.mxu0 0.0
        %2864 = vmatpush1.xpose.msra.mxu0 0.0
        %2865 = vmatprep.subr.mxu0 0.0
        %2866 = vmatpush1.xpose.msra.mxu0 0.0
        %2867 = vmatprep.subr.mxu0 0.0
        %2868 = vmatpush1.xpose.msra.mxu0 0.0
        %2869 = vmatprep.subr.mxu0 0.0
        %2870 = vmatpush1.xpose.msra.mxu0 0.0
        %2871 = vmatprep.subr.mxu0 0.0
        %2872 = vmatpush1.xpose.msra.mxu0 0.0
        %2873 = vmatprep.subr.mxu0 0.0
        %2874 = vmatpush1.xpose.msra.mxu0 0.0
        %2875 = vmatprep.subr.mxu0 0.0
        %2876 = vmatpush1.xpose.msra.mxu0 0.0
        %2877 = vmatprep.subr.mxu0 0.0
        %2878 = vmatpush1.xpose.msra.mxu0 0.0
        %2879 = vmatprep.subr.mxu0 0.0
        %2880 = vmatpush1.xpose.msra.mxu0 0.0
        %2881 = vmatprep.subr.mxu0 0.0
        %2882 = vmatpush1.xpose.msra.mxu0 0.0
        %2883 = vmatprep.subr.mxu0 0.0
        %2884 = vmatpush1.xpose.msra.mxu0 0.0
        %2885 = vmatprep.subr.mxu0 0.0
        %2886 = vmatpush1.xpose.msra.mxu0 0.0
        %2887 = vmatprep.subr.mxu0 0.0
        %2888 = vmatpush1.xpose.msra.mxu0 0.0
        %2889 = vmatprep.subr.mxu0 0.0
        %2890 = vmatpush1.xpose.msra.mxu0 0.0
        %2891 = vmatprep.subr.mxu0 0.0
        %2892 = vmatpush1.xpose.msra.mxu0 0.0
        %2893 = vmatprep.subr.mxu0 0.0
        %2894 = vmatpush1.xpose.msra.mxu0 0.0
        %2895 = vmatprep.subr.mxu0 0.0
        %2896 = vmatpush1.xpose.msra.mxu0 0.0
        %2897 = vmatprep.subr.mxu0 0.0
        %2898 = vmatpush1.xpose.msra.mxu0 0.0
        %2899 = vmatprep.subr.mxu0 0.0
        %2900 = vmatpush1.xpose.msra.mxu0 0.0
        %2901 = vmatprep.subr.mxu0 0.0
        %2902 = vmatpush1.xpose.msra.mxu0 0.0
        %2903 = vmatprep.mubr.f32.mxu0 0.0
        %2904 = vmatmul.mubr.f32.gmra.mrb[0].mxu0 %v2831
        %v2905 = vpop.f32.mrb[0].mxu0
        %v2906 = vadd.f32 0.0, %v2905
        %v2907 = vpop.f32.mrb[0].mxu0
        %2908 = vmatprep.mubr.f32.mxu0 0.0
        %2909 = vmatmul.mubr.f32.gmra.mrb[0].mxu0 %v2833
        %v2910 = vpop.f32.mrb[0].mxu0
        %v2911 = vadd.f32 0.0, %v2910
        %v2912 = vpop.f32.mrb[0].mxu0
        %2913 = vdwg.mxu0
        %2914 = vrot.lane.b32.xlu0 %v399, 80
        %v2915 = vpop.permute.xlu0 %2914
        %2916 = vrot.lane.b32.xlu0 %v405, 80
        %v2917 = vpop.permute.xlu0 %2916
        %2918 = vrot.lane.b32.xlu0 %v399, 16
        %v2919 = vpop.permute.xlu0 %2918
        %2920 = vrot.lane.b32.xlu0 %v405, 16
        %v2921 = vpop.permute.xlu0 %2920
        %v2922 = vsel %vm415, %v2915, 0
        %v2924 = vsel %vm415, %v2917, 0
        %v2926 = vsel %vm415, %v2919, 0
        %v2928 = vsel %vm415, %v2921, 0
        %2930 = vmatprep.subr.mxu0 0.0
        %2931 = vmatpush1.xpose.msra.mxu0 %v2926
        %2932 = vmatprep.subr.mxu0 0.0
        %2933 = vmatpush1.xpose.msra.mxu0 %v2928
        %2934 = vmatprep.subr.mxu0 0.0
        %2935 = vmatpush1.xpose.msra.mxu0 0.0
        %2936 = vmatprep.subr.mxu0 0.0
        %2937 = vmatpush1.xpose.msra.mxu0 0.0
        %2938 = vmatprep.subr.mxu0 0.0
        %2939 = vmatpush1.xpose.msra.mxu0 0.0
        %2940 = vmatprep.subr.mxu0 0.0
        %2941 = vmatpush1.xpose.msra.mxu0 0.0
        %2942 = vmatprep.subr.mxu0 0.0
        %2943 = vmatpush1.xpose.msra.mxu0 0.0
        %2944 = vmatprep.subr.mxu0 0.0
        %2945 = vmatpush1.xpose.msra.mxu0 0.0
        %2946 = vmatprep.subr.mxu0 0.0
        %2947 = vmatpush1.xpose.msra.mxu0 0.0
        %2948 = vmatprep.subr.mxu0 0.0
        %2949 = vmatpush1.xpose.msra.mxu0 0.0
        %2950 = vmatprep.subr.mxu0 0.0
        %2951 = vmatpush1.xpose.msra.mxu0 0.0
        %2952 = vmatprep.subr.mxu0 0.0
        %2953 = vmatpush1.xpose.msra.mxu0 0.0
        %2954 = vmatprep.subr.mxu0 0.0
        %2955 = vmatpush1.xpose.msra.mxu0 0.0
        %2956 = vmatprep.subr.mxu0 0.0
        %2957 = vmatpush1.xpose.msra.mxu0 0.0
        %2958 = vmatprep.subr.mxu0 0.0
        %2959 = vmatpush1.xpose.msra.mxu0 0.0
        %2960 = vmatprep.subr.mxu0 0.0
        %2961 = vmatpush1.xpose.msra.mxu0 0.0
        %2962 = vmatprep.subr.mxu0 0.0
        %2963 = vmatpush1.xpose.msra.mxu0 0.0
        %2964 = vmatprep.subr.mxu0 0.0
        %2965 = vmatpush1.xpose.msra.mxu0 0.0
        %2966 = vmatprep.subr.mxu0 0.0
        %2967 = vmatpush1.xpose.msra.mxu0 0.0
        %2968 = vmatprep.subr.mxu0 0.0
        %2969 = vmatpush1.xpose.msra.mxu0 0.0
        %2970 = vmatprep.subr.mxu0 0.0
        %2971 = vmatpush1.xpose.msra.mxu0 0.0
        %2972 = vmatprep.subr.mxu0 0.0
        %2973 = vmatpush1.xpose.msra.mxu0 0.0
        %2974 = vmatprep.subr.mxu0 0.0
        %2975 = vmatpush1.xpose.msra.mxu0 0.0
        %2976 = vmatprep.subr.mxu0 0.0
        %2977 = vmatpush1.xpose.msra.mxu0 0.0
        %2978 = vmatprep.subr.mxu0 0.0
        %2979 = vmatpush1.xpose.msra.mxu0 0.0
        %2980 = vmatprep.subr.mxu0 0.0
        %2981 = vmatpush1.xpose.msra.mxu0 0.0
        %2982 = vmatprep.subr.mxu0 0.0
        %2983 = vmatpush1.xpose.msra.mxu0 0.0
        %2984 = vmatprep.subr.mxu0 0.0
        %2985 = vmatpush1.xpose.msra.mxu0 0.0
        %2986 = vmatprep.subr.mxu0 0.0
        %2987 = vmatpush1.xpose.msra.mxu0 0.0
        %2988 = vmatprep.subr.mxu0 0.0
        %2989 = vmatpush1.xpose.msra.mxu0 0.0
        %2990 = vmatprep.subr.mxu0 0.0
        %2991 = vmatpush1.xpose.msra.mxu0 0.0
        %2992 = vmatprep.subr.mxu0 0.0
        %2993 = vmatpush1.xpose.msra.mxu0 0.0
        %2994 = vmatprep.mubr.f32.mxu0 0.0
        %2995 = vmatmul.mubr.f32.gmra.mrb[0].mxu0 %v2922
        %v2996 = vpop.f32.mrb[0].mxu0
        %v2997 = vadd.f32 0.0, %v2996
        %v2998 = vpop.f32.mrb[0].mxu0
        %2999 = vmatprep.mubr.f32.mxu0 0.0
        %3000 = vmatmul.mubr.f32.gmra.mrb[0].mxu0 %v2924
        %v3001 = vpop.f32.mrb[0].mxu0
        %v3002 = vadd.f32 0.0, %v3001
        %v3003 = vpop.f32.mrb[0].mxu0
        %3004 = vdwg.mxu0
        %v3005 = vmul.f32 %v2906, 0.125
        %v3006 = vmul.f32 %v2911, 0.125
        %v3007 = vmul.f32 %v2997, 0.125
        %v3008 = vmul.f32 %v3002, 0.125
        %v3009 = vsel %vm592, %v3005, -inf
        %3010 = vmax.xlane.f32.xlu0 %v3009
        %v3011 = vpop.xlane.xlu0 %3010
        %v3012 = vsel %vm592, %v3006, -inf
        %3013 = vmax.xlane.f32.xlu0 %v3012
        %v3014 = vpop.xlane.xlu0 %3013
        %v3015 = vsel %vm592, %v3007, -inf
        %3016 = vmax.xlane.f32.xlu0 %v3015
        %v3017 = vpop.xlane.xlu0 %3016
        %v3018 = vsel %vm592, %v3008, -inf
        %3019 = vmax.xlane.f32.xlu0 %v3018
        %v3020 = vpop.xlane.xlu0 %3019
        %v3021 = vsub.f32 %v3005, %v3011
        %v3022 = vsub.f32 %v3006, %v3014
        %v3023 = vsub.f32 %v3007, %v3017
        %v3024 = vsub.f32 %v3008, %v3020
        %v3025 = vmul.f32 %v3021, 1.442695
        %v3026 = vpow.pop %v3025
        %v3027 = vmul.f32 %v3022, 1.442695
        %v3028 = vpow.pop %v3027
        %v3029 = vmul.f32 %v3023, 1.442695
        %v3030 = vpow.pop %v3029
        %v3031 = vmul.f32 %v3024, 1.442695
        %v3032 = vpow.pop %v3031
        %v3033 = vsel %vm592, %v3026, 0.0
        %3034 = vadd.xlane.f32.xlu0 %v3033
        %v3035 = vpop.xlane.xlu0 %3034
        %v3036 = vsel %vm592, %v3028, 0.0
        %3037 = vadd.xlane.f32.xlu0 %v3036
        %v3038 = vpop.xlane.xlu0 %3037
        %v3039 = vsel %vm592, %v3030, 0.0
        %3040 = vadd.xlane.f32.xlu0 %v3039
        %v3041 = vpop.xlane.xlu0 %3040
        %v3042 = vsel %vm592, %v3032, 0.0
        %3043 = vadd.xlane.f32.xlu0 %v3042
        %v3044 = vpop.xlane.xlu0 %3043
        %v3045 = vrcp.pop %v3035
        %v3046 = vmul.f32 %v3026, %v3045
        %v3047 = vrcp.pop %v3038
        %v3048 = vmul.f32 %v3028, %v3047
        %v3049 = vrcp.pop %v3041
        %v3050 = vmul.f32 %v3030, %v3049
        %v3051 = vrcp.pop %v3044
        %v3052 = vmul.f32 %v3032, %v3051
        %3053 = vrot.lane.b32.xlu0 %v389, 80
        %v3054 = vpop.permute.xlu0 %3053
        %3055 = vrot.lane.b32.xlu0 %v395, 80
        %v3056 = vpop.permute.xlu0 %3055
        %v3060 = vsel %vm592, %v3046, 0
        %v3063 = vsel %vm592, %v3048, 0
        %3065 = vmatprep.subr.mxu0 0.0
        %3066 = vmatpush1.msra.mxu0 %v3054
        %3067 = vmatprep.subr.mxu0 0.0
        %3068 = vmatpush1.msra.mxu0 %v3056
        %3069 = vmatprep.subr.mxu0 0.0
        %3070 = vmatpush1.msra.mxu0 0.0
        %3071 = vmatprep.subr.mxu0 0.0
        %3072 = vmatpush1.msra.mxu0 0.0
        %3073 = vmatprep.subr.mxu0 0.0
        %3074 = vmatpush1.msra.mxu0 0.0
        %3075 = vmatprep.subr.mxu0 0.0
        %3076 = vmatpush1.msra.mxu0 0.0
        %3077 = vmatprep.subr.mxu0 0.0
        %3078 = vmatpush1.msra.mxu0 0.0
        %3079 = vmatprep.subr.mxu0 0.0
        %3080 = vmatpush1.msra.mxu0 0.0
        %3081 = vmatprep.subr.mxu0 0.0
        %3082 = vmatpush1.msra.mxu0 0.0
        %3083 = vmatprep.subr.mxu0 0.0
        %3084 = vmatpush1.msra.mxu0 0.0
        %3085 = vmatprep.subr.mxu0 0.0
        %3086 = vmatpush1.msra.mxu0 0.0
        %3087 = vmatprep.subr.mxu0 0.0
        %3088 = vmatpush1.msra.mxu0 0.0
        %3089 = vmatprep.subr.mxu0 0.0
        %3090 = vmatpush1.msra.mxu0 0.0
        %3091 = vmatprep.subr.mxu0 0.0
        %3092 = vmatpush1.msra.mxu0 0.0
        %3093 = vmatprep.subr.mxu0 0.0
        %3094 = vmatpush1.msra.mxu0 0.0
        %3095 = vmatprep.subr.mxu0 0.0
        %3096 = vmatpush1.msra.mxu0 0.0
        %3097 = vmatprep.subr.mxu0 0.0
        %3098 = vmatpush1.msra.mxu0 0.0
        %3099 = vmatprep.subr.mxu0 0.0
        %3100 = vmatpush1.msra.mxu0 0.0
        %3101 = vmatprep.subr.mxu0 0.0
        %3102 = vmatpush1.msra.mxu0 0.0
        %3103 = vmatprep.subr.mxu0 0.0
        %3104 = vmatpush1.msra.mxu0 0.0
        %3105 = vmatprep.subr.mxu0 0.0
        %3106 = vmatpush1.msra.mxu0 0.0
        %3107 = vmatprep.subr.mxu0 0.0
        %3108 = vmatpush1.msra.mxu0 0.0
        %3109 = vmatprep.subr.mxu0 0.0
        %3110 = vmatpush1.msra.mxu0 0.0
        %3111 = vmatprep.subr.mxu0 0.0
        %3112 = vmatpush1.msra.mxu0 0.0
        %3113 = vmatprep.subr.mxu0 0.0
        %3114 = vmatpush1.msra.mxu0 0.0
        %3115 = vmatprep.subr.mxu0 0.0
        %3116 = vmatpush1.msra.mxu0 0.0
        %3117 = vmatprep.subr.mxu0 0.0
        %3118 = vmatpush1.msra.mxu0 0.0
        %3119 = vmatprep.subr.mxu0 0.0
        %3120 = vmatpush1.msra.mxu0 0.0
        %3121 = vmatprep.subr.mxu0 0.0
        %3122 = vmatpush1.msra.mxu0 0.0
        %3123 = vmatprep.subr.mxu0 0.0
        %3124 = vmatpush1.msra.mxu0 0.0
        %3125 = vmatprep.subr.mxu0 0.0
        %3126 = vmatpush1.msra.mxu0 0.0
        %3127 = vmatprep.subr.mxu0 0.0
        %3128 = vmatpush1.msra.mxu0 0.0
        %3129 = vmatprep.mubr.f32.mxu0 0.0
        %3130 = vmatmul.mubr.f32.gmra.mrb[0].mxu0 %v3060
        %v3131 = vpop.f32.mrb[0].mxu0
        %v3132 = vadd.f32 0.0, %v3131
        %v3133 = vpop.f32.mrb[0].mxu0
        %3134 = vmatprep.mubr.f32.mxu0 0.0
        %3135 = vmatmul.mubr.f32.gmra.mrb[0].mxu0 %v3063
        %v3136 = vpop.f32.mrb[0].mxu0
        %v3137 = vadd.f32 0.0, %v3136
        %v3138 = vpop.f32.mrb[0].mxu0
        %3139 = vdwg.mxu0
        %3140 = vrot.lane.b32.xlu0 %v401, 80
        %v3141 = vpop.permute.xlu0 %3140
        %3142 = vrot.lane.b32.xlu0 %v407, 80
        %v3143 = vpop.permute.xlu0 %3142
        %v3147 = vsel %vm592, %v3050, 0
        %v3150 = vsel %vm592, %v3052, 0
        %3152 = vmatprep.subr.mxu0 0.0
        %3153 = vmatpush1.msra.mxu0 %v3141
        %3154 = vmatprep.subr.mxu0 0.0
        %3155 = vmatpush1.msra.mxu0 %v3143
        %3156 = vmatprep.subr.mxu0 0.0
        %3157 = vmatpush1.msra.mxu0 0.0
        %3158 = vmatprep.subr.mxu0 0.0
        %3159 = vmatpush1.msra.mxu0 0.0
        %3160 = vmatprep.subr.mxu0 0.0
        %3161 = vmatpush1.msra.mxu0 0.0
        %3162 = vmatprep.subr.mxu0 0.0
        %3163 = vmatpush1.msra.mxu0 0.0
        %3164 = vmatprep.subr.mxu0 0.0
        %3165 = vmatpush1.msra.mxu0 0.0
        %3166 = vmatprep.subr.mxu0 0.0
        %3167 = vmatpush1.msra.mxu0 0.0
        %3168 = vmatprep.subr.mxu0 0.0
        %3169 = vmatpush1.msra.mxu0 0.0
        %3170 = vmatprep.subr.mxu0 0.0
        %3171 = vmatpush1.msra.mxu0 0.0
        %3172 = vmatprep.subr.mxu0 0.0
        %3173 = vmatpush1.msra.mxu0 0.0
        %3174 = vmatprep.subr.mxu0 0.0
        %3175 = vmatpush1.msra.mxu0 0.0
        %3176 = vmatprep.subr.mxu0 0.0
        %3177 = vmatpush1.msra.mxu0 0.0
        %3178 = vmatprep.subr.mxu0 0.0
        %3179 = vmatpush1.msra.mxu0 0.0
        %3180 = vmatprep.subr.mxu0 0.0
        %3181 = vmatpush1.msra.mxu0 0.0
        %3182 = vmatprep.subr.mxu0 0.0
        %3183 = vmatpush1.msra.mxu0 0.0
        %3184 = vmatprep.subr.mxu0 0.0
        %3185 = vmatpush1.msra.mxu0 0.0
        %3186 = vmatprep.subr.mxu0 0.0
        %3187 = vmatpush1.msra.mxu0 0.0
        %3188 = vmatprep.subr.mxu0 0.0
        %3189 = vmatpush1.msra.mxu0 0.0
        %3190 = vmatprep.subr.mxu0 0.0
        %3191 = vmatpush1.msra.mxu0 0.0
        %3192 = vmatprep.subr.mxu0 0.0
        %3193 = vmatpush1.msra.mxu0 0.0
        %3194 = vmatprep.subr.mxu0 0.0
        %3195 = vmatpush1.msra.mxu0 0.0
        %3196 = vmatprep.subr.mxu0 0.0
        %3197 = vmatpush1.msra.mxu0 0.0
        %3198 = vmatprep.subr.mxu0 0.0
        %3199 = vmatpush1.msra.mxu0 0.0
        %3200 = vmatprep.subr.mxu0 0.0
        %3201 = vmatpush1.msra.mxu0 0.0
        %3202 = vmatprep.subr.mxu0 0.0
        %3203 = vmatpush1.msra.mxu0 0.0
        %3204 = vmatprep.subr.mxu0 0.0
        %3205 = vmatpush1.msra.mxu0 0.0
        %3206 = vmatprep.subr.mxu0 0.0
        %3207 = vmatpush1.msra.mxu0 0.0
        %3208 = vmatprep.subr.mxu0 0.0
        %3209 = vmatpush1.msra.mxu0 0.0
        %3210 = vmatprep.subr.mxu0 0.0
        %3211 = vmatpush1.msra.mxu0 0.0
        %3212 = vmatprep.subr.mxu0 0.0
        %3213 = vmatpush1.msra.mxu0 0.0
        %3214 = vmatprep.subr.mxu0 0.0
        %3215 = vmatpush1.msra.mxu0 0.0
        %3216 = vmatprep.mubr.f32.mxu0 0.0
        %3217 = vmatmul.mubr.f32.gmra.mrb[0].mxu0 %v3147
        %v3218 = vpop.f32.mrb[0].mxu0
        %v3219 = vadd.f32 0.0, %v3218
        %v3220 = vpop.f32.mrb[0].mxu0
        %3221 = vmatprep.mubr.f32.mxu0 0.0
        %3222 = vmatmul.mubr.f32.gmra.mrb[0].mxu0 %v3150
        %v3223 = vpop.f32.mrb[0].mxu0
        %v3224 = vadd.f32 0.0, %v3223
        %v3225 = vpop.f32.mrb[0].mxu0
        %3226 = vdwg.mxu0
        %3227 = vrot.lane.b32.xlu0 %v387, 72
        %v3228 = vpop.permute.xlu0 %3227
        %3229 = vrot.lane.b32.xlu0 %v393, 72
        %v3230 = vpop.permute.xlu0 %3229
        %3231 = vrot.lane.b32.xlu0 %v387, 8
        %v3232 = vpop.permute.xlu0 %3231
        %3233 = vrot.lane.b32.xlu0 %v393, 8
        %v3234 = vpop.permute.xlu0 %3233
        %v3235 = vsel %vm415, %v3228, 0
        %v3237 = vsel %vm415, %v3230, 0
        %v3239 = vsel %vm415, %v3232, 0
        %v3241 = vsel %vm415, %v3234, 0
        %3243 = vmatprep.subr.mxu0 0.0
        %3244 = vmatpush1.xpose.msra.mxu0 %v3239
        %3245 = vmatprep.subr.mxu0 0.0
        %3246 = vmatpush1.xpose.msra.mxu0 %v3241
        %3247 = vmatprep.subr.mxu0 0.0
        %3248 = vmatpush1.xpose.msra.mxu0 0.0
        %3249 = vmatprep.subr.mxu0 0.0
        %3250 = vmatpush1.xpose.msra.mxu0 0.0
        %3251 = vmatprep.subr.mxu0 0.0
        %3252 = vmatpush1.xpose.msra.mxu0 0.0
        %3253 = vmatprep.subr.mxu0 0.0
        %3254 = vmatpush1.xpose.msra.mxu0 0.0
        %3255 = vmatprep.subr.mxu0 0.0
        %3256 = vmatpush1.xpose.msra.mxu0 0.0
        %3257 = vmatprep.subr.mxu0 0.0
        %3258 = vmatpush1.xpose.msra.mxu0 0.0
        %3259 = vmatprep.subr.mxu0 0.0
        %3260 = vmatpush1.xpose.msra.mxu0 0.0
        %3261 = vmatprep.subr.mxu0 0.0
        %3262 = vmatpush1.xpose.msra.mxu0 0.0
        %3263 = vmatprep.subr.mxu0 0.0
        %3264 = vmatpush1.xpose.msra.mxu0 0.0
        %3265 = vmatprep.subr.mxu0 0.0
        %3266 = vmatpush1.xpose.msra.mxu0 0.0
        %3267 = vmatprep.subr.mxu0 0.0
        %3268 = vmatpush1.xpose.msra.mxu0 0.0
        %3269 = vmatprep.subr.mxu0 0.0
        %3270 = vmatpush1.xpose.msra.mxu0 0.0
        %3271 = vmatprep.subr.mxu0 0.0
        %3272 = vmatpush1.xpose.msra.mxu0 0.0
        %3273 = vmatprep.subr.mxu0 0.0
        %3274 = vmatpush1.xpose.msra.mxu0 0.0
        %3275 = vmatprep.subr.mxu0 0.0
        %3276 = vmatpush1.xpose.msra.mxu0 0.0
        %3277 = vmatprep.subr.mxu0 0.0
        %3278 = vmatpush1.xpose.msra.mxu0 0.0
        %3279 = vmatprep.subr.mxu0 0.0
        %3280 = vmatpush1.xpose.msra.mxu0 0.0
        %3281 = vmatprep.subr.mxu0 0.0
        %3282 = vmatpush1.xpose.msra.mxu0 0.0
        %3283 = vmatprep.subr.mxu0 0.0
        %3284 = vmatpush1.xpose.msra.mxu0 0.0
        %3285 = vmatprep.subr.mxu0 0.0
        %3286 = vmatpush1.xpose.msra.mxu0 0.0
        %3287 = vmatprep.subr.mxu0 0.0
        %3288 = vmatpush1.xpose.msra.mxu0 0.0
        %3289 = vmatprep.subr.mxu0 0.0
        %3290 = vmatpush1.xpose.msra.mxu0 0.0
        %3291 = vmatprep.subr.mxu0 0.0
        %3292 = vmatpush1.xpose.msra.mxu0 0.0
        %3293 = vmatprep.subr.mxu0 0.0
        %3294 = vmatpush1.xpose.msra.mxu0 0.0
        %3295 = vmatprep.subr.mxu0 0.0
        %3296 = vmatpush1.xpose.msra.mxu0 0.0
        %3297 = vmatprep.subr.mxu0 0.0
        %3298 = vmatpush1.xpose.msra.mxu0 0.0
        %3299 = vmatprep.subr.mxu0 0.0
        %3300 = vmatpush1.xpose.msra.mxu0 0.0
        %3301 = vmatprep.subr.mxu0 0.0
        %3302 = vmatpush1.xpose.msra.mxu0 0.0
        %3303 = vmatprep.subr.mxu0 0.0
        %3304 = vmatpush1.xpose.msra.mxu0 0.0
        %3305 = vmatprep.subr.mxu0 0.0
        %3306 = vmatpush1.xpose.msra.mxu0 0.0
        %3307 = vmatprep.mubr.f32.mxu0 0.0
        %3308 = vmatmul.mubr.f32.gmra.mrb[0].mxu0 %v3235
        %v3309 = vpop.f32.mrb[0].mxu0
        %v3310 = vadd.f32 0.0, %v3309
        %v3311 = vpop.f32.mrb[0].mxu0
        %3312 = vmatprep.mubr.f32.mxu0 0.0
        %3313 = vmatmul.mubr.f32.gmra.mrb[0].mxu0 %v3237
        %v3314 = vpop.f32.mrb[0].mxu0
        %v3315 = vadd.f32 0.0, %v3314
        %v3316 = vpop.f32.mrb[0].mxu0
        %3317 = vdwg.mxu0
        %3318 = vrot.lane.b32.xlu0 %v399, 72
        %v3319 = vpop.permute.xlu0 %3318
        %3320 = vrot.lane.b32.xlu0 %v405, 72
        %v3321 = vpop.permute.xlu0 %3320
        %3322 = vrot.lane.b32.xlu0 %v399, 8
        %v3323 = vpop.permute.xlu0 %3322
        %3324 = vrot.lane.b32.xlu0 %v405, 8
        %v3325 = vpop.permute.xlu0 %3324
        %v3326 = vsel %vm415, %v3319, 0
        %v3328 = vsel %vm415, %v3321, 0
        %v3330 = vsel %vm415, %v3323, 0
        %v3332 = vsel %vm415, %v3325, 0
        %3334 = vmatprep.subr.mxu0 0.0
        %3335 = vmatpush1.xpose.msra.mxu0 %v3330
        %3336 = vmatprep.subr.mxu0 0.0
        %3337 = vmatpush1.xpose.msra.mxu0 %v3332
        %3338 = vmatprep.subr.mxu0 0.0
        %3339 = vmatpush1.xpose.msra.mxu0 0.0
        %3340 = vmatprep.subr.mxu0 0.0
        %3341 = vmatpush1.xpose.msra.mxu0 0.0
        %3342 = vmatprep.subr.mxu0 0.0
        %3343 = vmatpush1.xpose.msra.mxu0 0.0
        %3344 = vmatprep.subr.mxu0 0.0
        %3345 = vmatpush1.xpose.msra.mxu0 0.0
        %3346 = vmatprep.subr.mxu0 0.0
        %3347 = vmatpush1.xpose.msra.mxu0 0.0
        %3348 = vmatprep.subr.mxu0 0.0
        %3349 = vmatpush1.xpose.msra.mxu0 0.0
        %3350 = vmatprep.subr.mxu0 0.0
        %3351 = vmatpush1.xpose.msra.mxu0 0.0
        %3352 = vmatprep.subr.mxu0 0.0
        %3353 = vmatpush1.xpose.msra.mxu0 0.0
        %3354 = vmatprep.subr.mxu0 0.0
        %3355 = vmatpush1.xpose.msra.mxu0 0.0
        %3356 = vmatprep.subr.mxu0 0.0
        %3357 = vmatpush1.xpose.msra.mxu0 0.0
        %3358 = vmatprep.subr.mxu0 0.0
        %3359 = vmatpush1.xpose.msra.mxu0 0.0
        %3360 = vmatprep.subr.mxu0 0.0
        %3361 = vmatpush1.xpose.msra.mxu0 0.0
        %3362 = vmatprep.subr.mxu0 0.0
        %3363 = vmatpush1.xpose.msra.mxu0 0.0
        %3364 = vmatprep.subr.mxu0 0.0
        %3365 = vmatpush1.xpose.msra.mxu0 0.0
        %3366 = vmatprep.subr.mxu0 0.0
        %3367 = vmatpush1.xpose.msra.mxu0 0.0
        %3368 = vmatprep.subr.mxu0 0.0
        %3369 = vmatpush1.xpose.msra.mxu0 0.0
        %3370 = vmatprep.subr.mxu0 0.0
        %3371 = vmatpush1.xpose.msra.mxu0 0.0
        %3372 = vmatprep.subr.mxu0 0.0
        %3373 = vmatpush1.xpose.msra.mxu0 0.0
        %3374 = vmatprep.subr.mxu0 0.0
        %3375 = vmatpush1.xpose.msra.mxu0 0.0
        %3376 = vmatprep.subr.mxu0 0.0
        %3377 = vmatpush1.xpose.msra.mxu0 0.0
        %3378 = vmatprep.subr.mxu0 0.0
        %3379 = vmatpush1.xpose.msra.mxu0 0.0
        %3380 = vmatprep.subr.mxu0 0.0
        %3381 = vmatpush1.xpose.msra.mxu0 0.0
        %3382 = vmatprep.subr.mxu0 0.0
        %3383 = vmatpush1.xpose.msra.mxu0 0.0
        %3384 = vmatprep.subr.mxu0 0.0
        %3385 = vmatpush1.xpose.msra.mxu0 0.0
        %3386 = vmatprep.subr.mxu0 0.0
        %3387 = vmatpush1.xpose.msra.mxu0 0.0
        %3388 = vmatprep.subr.mxu0 0.0
        %3389 = vmatpush1.xpose.msra.mxu0 0.0
        %3390 = vmatprep.subr.mxu0 0.0
        %3391 = vmatpush1.xpose.msra.mxu0 0.0
        %3392 = vmatprep.subr.mxu0 0.0
        %3393 = vmatpush1.xpose.msra.mxu0 0.0
        %3394 = vmatprep.subr.mxu0 0.0
        %3395 = vmatpush1.xpose.msra.mxu0 0.0
        %3396 = vmatprep.subr.mxu0 0.0
        %3397 = vmatpush1.xpose.msra.mxu0 0.0
        %3398 = vmatprep.mubr.f32.mxu0 0.0
        %3399 = vmatmul.mubr.f32.gmra.mrb[0].mxu0 %v3326
        %v3400 = vpop.f32.mrb[0].mxu0
        %v3401 = vadd.f32 0.0, %v3400
        %v3402 = vpop.f32.mrb[0].mxu0
        %3403 = vmatprep.mubr.f32.mxu0 0.0
        %3404 = vmatmul.mubr.f32.gmra.mrb[0].mxu0 %v3328
        %v3405 = vpop.f32.mrb[0].mxu0
        %v3406 = vadd.f32 0.0, %v3405
        %v3407 = vpop.f32.mrb[0].mxu0
        %3408 = vdwg.mxu0
        %v3409 = vmul.f32 %v3310, 0.125
        %v3410 = vmul.f32 %v3315, 0.125
        %v3411 = vmul.f32 %v3401, 0.125
        %v3412 = vmul.f32 %v3406, 0.125
        %v3413 = vsel %vm592, %v3409, -inf
        %3414 = vmax.xlane.f32.xlu0 %v3413
        %v3415 = vpop.xlane.xlu0 %3414
        %v3416 = vsel %vm592, %v3410, -inf
        %3417 = vmax.xlane.f32.xlu0 %v3416
        %v3418 = vpop.xlane.xlu0 %3417
        %v3419 = vsel %vm592, %v3411, -inf
        %3420 = vmax.xlane.f32.xlu0 %v3419
        %v3421 = vpop.xlane.xlu0 %3420
        %v3422 = vsel %vm592, %v3412, -inf
        %3423 = vmax.xlane.f32.xlu0 %v3422
        %v3424 = vpop.xlane.xlu0 %3423
        %v3425 = vsub.f32 %v3409, %v3415
        %v3426 = vsub.f32 %v3410, %v3418
        %v3427 = vsub.f32 %v3411, %v3421
        %v3428 = vsub.f32 %v3412, %v3424
        %v3429 = vmul.f32 %v3425, 1.442695
        %v3430 = vpow.pop %v3429
        %v3431 = vmul.f32 %v3426, 1.442695
        %v3432 = vpow.pop %v3431
        %v3433 = vmul.f32 %v3427, 1.442695
        %v3434 = vpow.pop %v3433
        %v3435 = vmul.f32 %v3428, 1.442695
        %v3436 = vpow.pop %v3435
        %v3437 = vsel %vm592, %v3430, 0.0
        %3438 = vadd.xlane.f32.xlu0 %v3437
        %v3439 = vpop.xlane.xlu0 %3438
        %v3440 = vsel %vm592, %v3432, 0.0
        %3441 = vadd.xlane.f32.xlu0 %v3440
        %v3442 = vpop.xlane.xlu0 %3441
        %v3443 = vsel %vm592, %v3434, 0.0
        %3444 = vadd.xlane.f32.xlu0 %v3443
        %v3445 = vpop.xlane.xlu0 %3444
        %v3446 = vsel %vm592, %v3436, 0.0
        %3447 = vadd.xlane.f32.xlu0 %v3446
        %v3448 = vpop.xlane.xlu0 %3447
        %v3449 = vrcp.pop %v3439
        %v3450 = vmul.f32 %v3430, %v3449
        %v3451 = vrcp.pop %v3442
        %v3452 = vmul.f32 %v3432, %v3451
        %v3453 = vrcp.pop %v3445
        %v3454 = vmul.f32 %v3434, %v3453
        %v3455 = vrcp.pop %v3448
        %v3456 = vmul.f32 %v3436, %v3455
        %3457 = vrot.lane.b32.xlu0 %v389, 72
        %v3458 = vpop.permute.xlu0 %3457
        %3459 = vrot.lane.b32.xlu0 %v395, 72
        %v3460 = vpop.permute.xlu0 %3459
        %v3464 = vsel %vm592, %v3450, 0
        %v3467 = vsel %vm592, %v3452, 0
        %3469 = vmatprep.subr.mxu0 0.0
        %3470 = vmatpush1.msra.mxu0 %v3458
        %3471 = vmatprep.subr.mxu0 0.0
        %3472 = vmatpush1.msra.mxu0 %v3460
        %3473 = vmatprep.subr.mxu0 0.0
        %3474 = vmatpush1.msra.mxu0 0.0
        %3475 = vmatprep.subr.mxu0 0.0
        %3476 = vmatpush1.msra.mxu0 0.0
        %3477 = vmatprep.subr.mxu0 0.0
        %3478 = vmatpush1.msra.mxu0 0.0
        %3479 = vmatprep.subr.mxu0 0.0
        %3480 = vmatpush1.msra.mxu0 0.0
        %3481 = vmatprep.subr.mxu0 0.0
        %3482 = vmatpush1.msra.mxu0 0.0
        %3483 = vmatprep.subr.mxu0 0.0
        %3484 = vmatpush1.msra.mxu0 0.0
        %3485 = vmatprep.subr.mxu0 0.0
        %3486 = vmatpush1.msra.mxu0 0.0
        %3487 = vmatprep.subr.mxu0 0.0
        %3488 = vmatpush1.msra.mxu0 0.0
        %3489 = vmatprep.subr.mxu0 0.0
        %3490 = vmatpush1.msra.mxu0 0.0
        %3491 = vmatprep.subr.mxu0 0.0
        %3492 = vmatpush1.msra.mxu0 0.0
        %3493 = vmatprep.subr.mxu0 0.0
        %3494 = vmatpush1.msra.mxu0 0.0
        %3495 = vmatprep.subr.mxu0 0.0
        %3496 = vmatpush1.msra.mxu0 0.0
        %3497 = vmatprep.subr.mxu0 0.0
        %3498 = vmatpush1.msra.mxu0 0.0
        %3499 = vmatprep.subr.mxu0 0.0
        %3500 = vmatpush1.msra.mxu0 0.0
        %3501 = vmatprep.subr.mxu0 0.0
        %3502 = vmatpush1.msra.mxu0 0.0
        %3503 = vmatprep.subr.mxu0 0.0
        %3504 = vmatpush1.msra.mxu0 0.0
        %3505 = vmatprep.subr.mxu0 0.0
        %3506 = vmatpush1.msra.mxu0 0.0
        %3507 = vmatprep.subr.mxu0 0.0
        %3508 = vmatpush1.msra.mxu0 0.0
        %3509 = vmatprep.subr.mxu0 0.0
        %3510 = vmatpush1.msra.mxu0 0.0
        %3511 = vmatprep.subr.mxu0 0.0
        %3512 = vmatpush1.msra.mxu0 0.0
        %3513 = vmatprep.subr.mxu0 0.0
        %3514 = vmatpush1.msra.mxu0 0.0
        %3515 = vmatprep.subr.mxu0 0.0
        %3516 = vmatpush1.msra.mxu0 0.0
        %3517 = vmatprep.subr.mxu0 0.0
        %3518 = vmatpush1.msra.mxu0 0.0
        %3519 = vmatprep.subr.mxu0 0.0
        %3520 = vmatpush1.msra.mxu0 0.0
        %3521 = vmatprep.subr.mxu0 0.0
        %3522 = vmatpush1.msra.mxu0 0.0
        %3523 = vmatprep.subr.mxu0 0.0
        %3524 = vmatpush1.msra.mxu0 0.0
        %3525 = vmatprep.subr.mxu0 0.0
        %3526 = vmatpush1.msra.mxu0 0.0
        %3527 = vmatprep.subr.mxu0 0.0
        %3528 = vmatpush1.msra.mxu0 0.0
        %3529 = vmatprep.subr.mxu0 0.0
        %3530 = vmatpush1.msra.mxu0 0.0
        %3531 = vmatprep.subr.mxu0 0.0
        %3532 = vmatpush1.msra.mxu0 0.0
        %3533 = vmatprep.mubr.f32.mxu0 0.0
        %3534 = vmatmul.mubr.f32.gmra.mrb[0].mxu0 %v3464
        %v3535 = vpop.f32.mrb[0].mxu0
        %v3536 = vadd.f32 0.0, %v3535
        %v3537 = vpop.f32.mrb[0].mxu0
        %3538 = vmatprep.mubr.f32.mxu0 0.0
        %3539 = vmatmul.mubr.f32.gmra.mrb[0].mxu0 %v3467
        %v3540 = vpop.f32.mrb[0].mxu0
        %v3541 = vadd.f32 0.0, %v3540
        %v3542 = vpop.f32.mrb[0].mxu0
        %3543 = vdwg.mxu0
        %3544 = vrot.lane.b32.xlu0 %v401, 72
        %v3545 = vpop.permute.xlu0 %3544
        %3546 = vrot.lane.b32.xlu0 %v407, 72
        %v3547 = vpop.permute.xlu0 %3546
        %v3551 = vsel %vm592, %v3454, 0
        %v3554 = vsel %vm592, %v3456, 0
        %3556 = vmatprep.subr.mxu0 0.0
        %3557 = vmatpush1.msra.mxu0 %v3545
        %3558 = vmatprep.subr.mxu0 0.0
        %3559 = vmatpush1.msra.mxu0 %v3547
        %3560 = vmatprep.subr.mxu0 0.0
        %3561 = vmatpush1.msra.mxu0 0.0
        %3562 = vmatprep.subr.mxu0 0.0
        %3563 = vmatpush1.msra.mxu0 0.0
        %3564 = vmatprep.subr.mxu0 0.0
        %3565 = vmatpush1.msra.mxu0 0.0
        %3566 = vmatprep.subr.mxu0 0.0
        %3567 = vmatpush1.msra.mxu0 0.0
        %3568 = vmatprep.subr.mxu0 0.0
        %3569 = vmatpush1.msra.mxu0 0.0
        %3570 = vmatprep.subr.mxu0 0.0
        %3571 = vmatpush1.msra.mxu0 0.0
        %3572 = vmatprep.subr.mxu0 0.0
        %3573 = vmatpush1.msra.mxu0 0.0
        %3574 = vmatprep.subr.mxu0 0.0
        %3575 = vmatpush1.msra.mxu0 0.0
        %3576 = vmatprep.subr.mxu0 0.0
        %3577 = vmatpush1.msra.mxu0 0.0
        %3578 = vmatprep.subr.mxu0 0.0
        %3579 = vmatpush1.msra.mxu0 0.0
        %3580 = vmatprep.subr.mxu0 0.0
        %3581 = vmatpush1.msra.mxu0 0.0
        %3582 = vmatprep.subr.mxu0 0.0
        %3583 = vmatpush1.msra.mxu0 0.0
        %3584 = vmatprep.subr.mxu0 0.0
        %3585 = vmatpush1.msra.mxu0 0.0
        %3586 = vmatprep.subr.mxu0 0.0
        %3587 = vmatpush1.msra.mxu0 0.0
        %3588 = vmatprep.subr.mxu0 0.0
        %3589 = vmatpush1.msra.mxu0 0.0
        %3590 = vmatprep.subr.mxu0 0.0
        %3591 = vmatpush1.msra.mxu0 0.0
        %3592 = vmatprep.subr.mxu0 0.0
        %3593 = vmatpush1.msra.mxu0 0.0
        %3594 = vmatprep.subr.mxu0 0.0
        %3595 = vmatpush1.msra.mxu0 0.0
        %3596 = vmatprep.subr.mxu0 0.0
        %3597 = vmatpush1.msra.mxu0 0.0
        %3598 = vmatprep.subr.mxu0 0.0
        %3599 = vmatpush1.msra.mxu0 0.0
        %3600 = vmatprep.subr.mxu0 0.0
        %3601 = vmatpush1.msra.mxu0 0.0
        %3602 = vmatprep.subr.mxu0 0.0
        %3603 = vmatpush1.msra.mxu0 0.0
        %3604 = vmatprep.subr.mxu0 0.0
        %3605 = vmatpush1.msra.mxu0 0.0
        %3606 = vmatprep.subr.mxu0 0.0
        %3607 = vmatpush1.msra.mxu0 0.0
        %3608 = vmatprep.subr.mxu0 0.0
        %3609 = vmatpush1.msra.mxu0 0.0
        %3610 = vmatprep.subr.mxu0 0.0
        %3611 = vmatpush1.msra.mxu0 0.0
        %3612 = vmatprep.subr.mxu0 0.0
        %3613 = vmatpush1.msra.mxu0 0.0
        %3614 = vmatprep.subr.mxu0 0.0
        %3615 = vmatpush1.msra.mxu0 0.0
        %3616 = vmatprep.subr.mxu0 0.0
        %3617 = vmatpush1.msra.mxu0 0.0
        %3618 = vmatprep.subr.mxu0 0.0
        %3619 = vmatpush1.msra.mxu0 0.0
        %3620 = vmatprep.mubr.f32.mxu0 0.0
        %3621 = vmatmul.mubr.f32.gmra.mrb[0].mxu0 %v3551
        %v3622 = vpop.f32.mrb[0].mxu0
        %v3623 = vadd.f32 0.0, %v3622
        %v3624 = vpop.f32.mrb[0].mxu0
        %3625 = vmatprep.mubr.f32.mxu0 0.0
        %3626 = vmatmul.mubr.f32.gmra.mrb[0].mxu0 %v3554
        %v3627 = vpop.f32.mrb[0].mxu0
        %v3628 = vadd.f32 0.0, %v3627
        %v3629 = vpop.f32.mrb[0].mxu0
        %3630 = vdwg.mxu0
        %3635 = vrot.lane.b32.xlu0 %v1110, 8
        %v3636 = vpop.permute.xlu0 %3635
        %3637 = vrot.lane.b32.xlu0 %v1115, 8
        %v3638 = vpop.permute.xlu0 %3637
        %3639 = vrot.lane.b32.xlu0 %v1199, 8
        %v3640 = vpop.permute.xlu0 %3639
        %3641 = vrot.lane.b32.xlu0 %v1204, 8
        %v3642 = vpop.permute.xlu0 %3641
        %3651 = vrot.lane.b32.xlu0 %v1516, 16
        %v3652 = vpop.permute.xlu0 %3651
        %3653 = vrot.lane.b32.xlu0 %v1521, 16
        %v3654 = vpop.permute.xlu0 %3653
        %3655 = vrot.lane.b32.xlu0 %v1603, 16
        %v3656 = vpop.permute.xlu0 %3655
        %3657 = vrot.lane.b32.xlu0 %v1608, 16
        %v3658 = vpop.permute.xlu0 %3657
        %3667 = vrot.lane.b32.xlu0 %v1920, 24
        %v3668 = vpop.permute.xlu0 %3667
        %3669 = vrot.lane.b32.xlu0 %v1925, 24
        %v3670 = vpop.permute.xlu0 %3669
        %3671 = vrot.lane.b32.xlu0 %v2007, 24
        %v3672 = vpop.permute.xlu0 %3671
        %3673 = vrot.lane.b32.xlu0 %v2012, 24
        %v3674 = vpop.permute.xlu0 %3673
        %3683 = vrot.lane.b32.xlu0 %v2324, 32
        %v3684 = vpop.permute.xlu0 %3683
        %3685 = vrot.lane.b32.xlu0 %v2329, 32
        %v3686 = vpop.permute.xlu0 %3685
        %3687 = vrot.lane.b32.xlu0 %v2411, 32
        %v3688 = vpop.permute.xlu0 %3687
        %3689 = vrot.lane.b32.xlu0 %v2416, 32
        %v3690 = vpop.permute.xlu0 %3689
        %3699 = vrot.lane.b32.xlu0 %v2728, 40
        %v3700 = vpop.permute.xlu0 %3699
        %3701 = vrot.lane.b32.xlu0 %v2733, 40
        %v3702 = vpop.permute.xlu0 %3701
        %3703 = vrot.lane.b32.xlu0 %v2815, 40
        %v3704 = vpop.permute.xlu0 %3703
        %3705 = vrot.lane.b32.xlu0 %v2820, 40
        %v3706 = vpop.permute.xlu0 %3705
        %3715 = vrot.lane.b32.xlu0 %v3132, 48
        %v3716 = vpop.permute.xlu0 %3715
        %3717 = vrot.lane.b32.xlu0 %v3137, 48
        %v3718 = vpop.permute.xlu0 %3717
        %3719 = vrot.lane.b32.xlu0 %v3219, 48
        %v3720 = vpop.permute.xlu0 %3719
        %3721 = vrot.lane.b32.xlu0 %v3224, 48
        %v3722 = vpop.permute.xlu0 %3721
        %3731 = vrot.lane.b32.xlu0 %v3536, 56
        %v3732 = vpop.permute.xlu0 %3731
        %3733 = vrot.lane.b32.xlu0 %v3541, 56
        %v3734 = vpop.permute.xlu0 %3733
        %3735 = vrot.lane.b32.xlu0 %v3623, 56
        %v3736 = vpop.permute.xlu0 %3735
        %3737 = vrot.lane.b32.xlu0 %v3628, 56
        %v3738 = vpop.permute.xlu0 %3737
        %v3743 = vsel %vm415, %v710, %v3636
        %v3744 = vsel %vm415, %v715, %v3638
        %v3745 = vsel %vm415, %v791, %v3640
        %v3746 = vsel %vm415, %v796, %v3642
        %v3747 = vsel %vm592, %v3743, %v3652
        %v3748 = vsel %vm592, %v3744, %v3654
        %v3749 = vsel %vm592, %v3745, %v3656
        %v3750 = vsel %vm592, %v3746, %v3658
        %vm3751 = vcmask 195584
        %v3752 = vsel %vm3751, %v3747, %v3668
        %v3753 = vsel %vm3751, %v3748, %v3670
        %v3754 = vsel %vm3751, %v3749, %v3672
        %v3755 = vsel %vm3751, %v3750, %v3674
        %vm3756 = vcmask 261120
        %v3757 = vsel %vm3756, %v3752, %v3684
        %v3758 = vsel %vm3756, %v3753, %v3686
        %v3759 = vsel %vm3756, %v3754, %v3688
        %v3760 = vsel %vm3756, %v3755, %v3690
        %vm3761 = vcmask 326656
        %v3762 = vsel %vm3761, %v3757, %v3700
        %v3763 = vsel %vm3761, %v3758, %v3702
        %v3764 = vsel %vm3761, %v3759, %v3704
        %v3765 = vsel %vm3761, %v3760, %v3706
        %vm3766 = vcmask 392192
        %v3767 = vsel %vm3766, %v3762, %v3716
        %v3768 = vsel %vm3766, %v3763, %v3718
        %v3769 = vsel %vm3766, %v3764, %v3720
        %v3770 = vsel %vm3766, %v3765, %v3722
        %vm3771 = vcmask 457728
        %v3772 = vsel %vm3771, %v3767, %v3732
        %v3773 = vsel %vm3771, %v3768, %v3734
        %v3774 = vsel %vm3771, %v3769, %v3736
        %v3775 = vsel %vm3771, %v3770, %v3738
        %v3776 = vld [vmem:[#allocation7] sm:$0xff]
        %v3777 = vld [vmem:[#allocation7 + $0x8] sm:$0xff]
        %v3778 = vld [vmem:[#allocation7 + $0x10] sm:$0xff]
        %v3779 = vld [vmem:[#allocation7 + $0x18] sm:$0xff]
        %v3780 = vld [vmem:[#allocation7 + $0x20] sm:$0xff]
        %v3781 = vld [vmem:[#allocation7 + $0x28] sm:$0xff]
        %v3782 = vld [vmem:[#allocation7 + $0x30] sm:$0xff]
        %v3783 = vld [vmem:[#allocation7 + $0x38] sm:$0xff]
        %v3784 = vld [vmem:[%s4] sm:$0x1]
        %v3786 = vlaneseq
        %v3787 = vshrl.u32 %v3786, 7
        %v3788 = vsub.s32 0, %v3787
        %v3789 = vrot.slane %v3784, %v3788
        %v3792 = vsel %vm307, %v3772, 0
        %v3795 = vsel %vm307, %v3773, 0
        %v3798 = vsel %vm307, %v3774, 0
        %v3801 = vsel %vm307, %v3775, 0
        %3803 = vmatprep.subr.mxu0 0.0
        %3804 = vmatpush1.msra.mxu0 %v3776
        %3805 = vmatprep.subr.mxu0 0.0
        %3806 = vmatpush1.msra.mxu0 %v3777
        %3807 = vmatprep.subr.mxu0 0.0
        %3808 = vmatpush1.msra.mxu0 %v3778
        %3809 = vmatprep.subr.mxu0 0.0
        %3810 = vmatpush1.msra.mxu0 %v3779
        %3811 = vmatprep.subr.mxu0 0.0
        %3812 = vmatpush1.msra.mxu0 %v3780
        %3813 = vmatprep.subr.mxu0 0.0
        %3814 = vmatpush1.msra.mxu0 %v3781
        %3815 = vmatprep.subr.mxu0 0.0
        %3816 = vmatpush1.msra.mxu0 %v3782
        %3817 = vmatprep.subr.mxu0 0.0
        %3818 = vmatpush1.msra.mxu0 %v3783
        %3819 = vmatprep.subr.mxu0 0.0
        %3820 = vmatpush1.msra.mxu0 0.0
        %3821 = vmatprep.subr.mxu0 0.0
        %3822 = vmatpush1.msra.mxu0 0.0
        %3823 = vmatprep.subr.mxu0 0.0
        %3824 = vmatpush1.msra.mxu0 0.0
        %3825 = vmatprep.subr.mxu0 0.0
        %3826 = vmatpush1.msra.mxu0 0.0
        %3827 = vmatprep.subr.mxu0 0.0
        %3828 = vmatpush1.msra.mxu0 0.0
        %3829 = vmatprep.subr.mxu0 0.0
        %3830 = vmatpush1.msra.mxu0 0.0
        %3831 = vmatprep.subr.mxu0 0.0
        %3832 = vmatpush1.msra.mxu0 0.0
        %3833 = vmatprep.subr.mxu0 0.0
        %3834 = vmatpush1.msra.mxu0 0.0
        %3835 = vmatprep.subr.mxu0 0.0
        %3836 = vmatpush1.msra.mxu0 0.0
        %3837 = vmatprep.subr.mxu0 0.0
        %3838 = vmatpush1.msra.mxu0 0.0
        %3839 = vmatprep.subr.mxu0 0.0
        %3840 = vmatpush1.msra.mxu0 0.0
        %3841 = vmatprep.subr.mxu0 0.0
        %3842 = vmatpush1.msra.mxu0 0.0
        %3843 = vmatprep.subr.mxu0 0.0
        %3844 = vmatpush1.msra.mxu0 0.0
        %3845 = vmatprep.subr.mxu0 0.0
        %3846 = vmatpush1.msra.mxu0 0.0
        %3847 = vmatprep.subr.mxu0 0.0
        %3848 = vmatpush1.msra.mxu0 0.0
        %3849 = vmatprep.subr.mxu0 0.0
        %3850 = vmatpush1.msra.mxu0 0.0
        %3851 = vmatprep.subr.mxu0 0.0
        %3852 = vmatpush1.msra.mxu0 0.0
        %3853 = vmatprep.subr.mxu0 0.0
        %3854 = vmatpush1.msra.mxu0 0.0
        %3855 = vmatprep.subr.mxu0 0.0
        %3856 = vmatpush1.msra.mxu0 0.0
        %3857 = vmatprep.subr.mxu0 0.0
        %3858 = vmatpush1.msra.mxu0 0.0
        %3859 = vmatprep.subr.mxu0 0.0
        %3860 = vmatpush1.msra.mxu0 0.0
        %3861 = vmatprep.subr.mxu0 0.0
        %3862 = vmatpush1.msra.mxu0 0.0
        %3863 = vmatprep.subr.mxu0 0.0
        %3864 = vmatpush1.msra.mxu0 0.0
        %3865 = vmatprep.subr.mxu0 0.0
        %3866 = vmatpush1.msra.mxu0 0.0
        %3867 = vmatprep.mubr.f32.mxu0 0.0
        %3868 = vmatmul.mubr.f32.gmra.mrb[0].mxu0 %v3792
        %v3869 = vpop.f32.mrb[0].mxu0
        %v3870 = vadd.f32 %v3789, %v3869
        %v3871 = vpop.f32.mrb[0].mxu0
        %3872 = vmatprep.mubr.f32.mxu0 0.0
        %3873 = vmatmul.mubr.f32.gmra.mrb[0].mxu0 %v3795
        %v3874 = vpop.f32.mrb[0].mxu0
        %v3875 = vadd.f32 %v3789, %v3874
        %v3876 = vpop.f32.mrb[0].mxu0
        %3877 = vmatprep.mubr.f32.mxu0 0.0
        %3878 = vmatmul.mubr.f32.gmra.mrb[0].mxu0 %v3798
        %v3879 = vpop.f32.mrb[0].mxu0
        %v3880 = vadd.f32 %v3789, %v3879
        %v3881 = vpop.f32.mrb[0].mxu0
        %3882 = vmatprep.mubr.f32.mxu0 0.0
        %3883 = vmatmul.mubr.f32.gmra.mrb[0].mxu0 %v3801
        %v3884 = vpop.f32.mrb[0].mxu0
        %v3885 = vadd.f32 %v3789, %v3884
        %v3886 = vpop.f32.mrb[0].mxu0
        %3887 = vdwg.mxu0
        %3888 = vst.msk [vmem:[%s272] sm:$0xff] %vm307, %v3870
        %3889 = vst.msk [vmem:[%s272 + $0x8] sm:$0xff] %vm307, %v3875
        %3890 = vst.msk [vmem:[%s272 + $0x10] sm:$0xff] %vm307, %v3880
        %3891 = vst.msk [vmem:[%s272 + $0x18] sm:$0xff] %vm307, %v3885
        %s3892 = sand.u32 %s141, 1
        %s3893 = scalar_lea.sflag [#allocation4], %s3892
        %s3894 = sand.u32 %s141, 1
        %s3895 = smul.addr %s3894, 32
        %s3896 = scalar_lea.vmem [#allocation8], %s3895
        // Predicated region
        $region53: #{tpu_custom_call.1} parent=39 // pred_check
          %p3897 = pneg %p151
        $region54: #{tpu_custom_call.1} parent=39 // pred_check_branch
          %3899 = sbr.rel (%p3897) target = $region56
        $region55: #{tpu_custom_call.1} parent=39 // pred_region
          %s3900 = smul.u32 2, %s23
          %s3902 = ssub.s32 512, 512
          %3903 = vsyncadd %s3893, %s3902
          %s3904 = smul.addr %s3900, 2
          %s3905 = smul.addr %s3904, 128
          %s3906 = scalar_lea.hbm %s5, %s3905
          %s3907 = sshll.u32 %s3896, 4
          %s3908 = int_to_ptr.vmem [resolvable:$true] %s3907
          %3913 = dma.vmem_to_hbm [thread:$0]  %s3908, 512, %s3906, %s3893, 128, 128, 8
        $region56: #{tpu_custom_call.1} parent=39 // pred_fallthru
          _
      $region40: #{tpu_custom_call.1} parent=5 // pred_fallthru
        _
      %p3914 = scmp.le.s32.totalorder 2, %s18
      // Predicated region
      $region57: #{tpu_custom_call.1} parent=5 // pred_check
        %p3915 = pneg %p3914
      $region58: #{tpu_custom_call.1} parent=5 // pred_check_branch
        %3917 = sbr.rel (%p3915) target = $region60
      $region59: #{tpu_custom_call.1} parent=5 // pred_region
        %s3918 = ssub.s32 %s18, 2
        // Predicated region
        $region61: #{tpu_custom_call.1} parent=59 // pred_check
          %p3919 = pneg %p157
        $region62: #{tpu_custom_call.1} parent=59 // pred_check_branch
          %3921 = sbr.rel (%p3919) target = $region64
        $region63: #{tpu_custom_call.1} parent=59 // pred_region
          %s3922 = sand.u32 %s142, 1
          %s3923 = scalar_lea.sflag [#allocation4], %s3922
          %s3924 = sand.u32 %s142, 1
          %s3925 = smul.addr %s3924, 32
          %s3926 = scalar_lea.vmem [#allocation8], %s3925
          %3927 = dma.done %s3923, 512
        $region64: #{tpu_custom_call.1} parent=59 // pred_fallthru
          _
      $region60: #{tpu_custom_call.1} parent=5 // pred_fallthru
        _
    $region6: #{tpu_custom_call.1} parent=1 // loop_footer
      %s22 = sadd.s32 1, %s18
    $region7: #{tpu_custom_call.1} parent=1 // loop_footer_branch
      %17 = sbr.rel target = $region3
    $region8: #{tpu_custom_call.1} parent=1 // loop_exit
      _
    %3928 = vsyncpa [#allocation3], 1
    %s3929 = scalar_lea.sflag [#allocation3], 1
    %3930 = vsyncpa %s3929, 1
    %3931 = vsyncpa [#allocation6], 1
    %3932 = vsyncpa [#allocation4], 1
    %s3933 = scalar_lea.sflag [#allocation4], 1
    %3934 = vsyncpa %s3933, 1

</llo_original>
